<compile_context>
chip_gen: v6e
topology: v6e:2x2x1
jax: 0.10.0
libtpu: 0.0.40
codegen_flags: <defaults>
</compile_context>

<pallas_src>
import jax
import jax.numpy as jnp
from jax.experimental import pallas as pl
from jax.experimental.pallas import tpu as pltpu

# ---------------- configuration (small synthetic shapes) ----------------
B = 2              # batch
L = 8              # sequence length (shared by c / c2w / c2f, required by residual)
H = 32             # hidden_dim == in_dim == dim_caps
N = 4              # num_caps
NH = N * H         # 128: lane-packed capsule width (fills the 128-lane vreg)
BL = B * L         # batch folded into the sublane axis
NUM_ROUTING = 3
LN_EPS = 1e-5


# ---------------- math helpers (traced into the kernel body) ----------------
def _gelu(x):
    return 0.5 * x * (1.0 + jnp.tanh(0.7978845608028654 * (x + 0.044715 * x * x * x)))


def _softmax_last(x):
    m = jnp.max(x, axis=-1, keepdims=True)
    e = jnp.exp(x - m)
    return e / jnp.sum(e, axis=-1, keepdims=True)


def _layer_norm(x, gamma, beta):
    mu = jnp.mean(x, axis=-1, keepdims=True)
    var = jnp.mean((x - mu) * (x - mu), axis=-1, keepdims=True)
    return (x - mu) / jnp.sqrt(var + LN_EPS) * gamma + beta


def _dot(a, b):
    return jnp.dot(a, b, preferred_element_type=jnp.float32)


# ---------------- the Pallas kernel (single invocation, whole problem) -----
def transformer_block_kernel(
        # activations (B, L, H)
        c_ref, cw_ref, cf_ref,
        # constant 0/1 helper matrices for the packed capsule lane layout
        e_ref, et_ref, t_ref, tt_ref,
        # e2w capsule-attention params (split SFU weights + lane-packed caps weights)
        w_wr_c, w_wr_x, w_br, w_wg_c, w_wg_x, w_bg, w_capw, w_capsfuw,
        # e2f capsule-attention params
        f_wr_c, f_wr_x, f_br, f_wg_c, f_wg_x, f_bg, f_capw, f_capsfuw,
        # selfatt / ffn / per-stream attention / layernorm params (concat-free splits)
        sa_w1, sa_w2, sa_b, ffn_w1, ffn_w2, ffn_b,
        wa_w, wa_b, fa_w, fa_b, ln_g, ln_b,
        # single lane-dense output slab (BL, 128)
        out_ref):
    E = e_ref[...]        # (N, NH)   capsule-id -> lane-block expansion
    E_T = et_ref[...]     # (NH, N)   per-lane-block sum
    T = t_ref[...]        # (H, NH)   tile H across the N lane blocks
    T_T = tt_ref[...]     # (NH, H)   sum the N lane blocks back to H

    c = c_ref[...].reshape(BL, H)
    cw = cw_ref[...].reshape(BL, H)
    cf = cf_ref[...].reshape(BL, H)

    # ---- SFU (concat-free: split weights, two matmuls that accumulate) ----
    def sfu(x, wr_c, wr_x, br, wg_c, wg_x, bg):
        r = jnp.tanh(_dot(c, wr_c[...]) + _dot(x, wr_x[...]) + br[...])
        g = jax.nn.sigmoid(_dot(c, wg_c[...]) + _dot(x, wg_x[...]) + bg[...])
        return g * r + (1.0 - g) * c

    sfu_w = sfu(cw, w_wr_c, w_wr_x, w_br, w_wg_c, w_wg_x, w_bg)      # (BL, H)
    sfu_f = sfu(cf, f_wr_c, f_wr_x, f_br, f_wg_c, f_wg_x, f_bg)      # (BL, H)

    # ---- capsule projections: one lane-dense (H -> N*H = 128) matmul each ----
    u_sets = (_dot(c, w_capw[...]), _dot(c, f_capw[...]),
              _dot(sfu_w, w_capsfuw[...]), _dot(sfu_f, f_capsfuw[...]))
    S = 4 * B
    u_all = jnp.concatenate([u.reshape(B, L, NH) for u in u_sets], axis=0)   # (S, L, NH)

    # ---- dynamic routing, vectorized over (capsule-set x batch), packed lanes ----
    blog = jnp.zeros((S, L, N), jnp.float32)
    v_pack = jnp.zeros((S, NH), jnp.float32)
    for it in range(NUM_ROUTING):
        coup = _softmax_last(blog)                                           # (S, L, N)
        coup_exp = _dot(coup.reshape(S * L, N), E).reshape(S, L, NH)
        s_pack = jnp.sum(coup_exp * u_all, axis=1)                           # (S, NH)
        sq = _dot(_dot(s_pack * s_pack, E_T), E)                             # per-capsule |s|^2
        v_pack = s_pack * (sq / (1.0 + sq)) * jax.lax.rsqrt(sq + 1e-8)       # squash
        if it < NUM_ROUTING - 1:
            agree = _dot((u_all * v_pack[:, None, :]).reshape(S * L, NH), E_T)
            blog = blog + agree.reshape(S, L, N)

    c_cap_w, c_cap_f = v_pack[0:B], v_pack[B:2 * B]                          # (B, NH)
    sfu_cap_w, sfu_cap_f = v_pack[2 * B:3 * B], v_pack[3 * B:4 * B]          # (B, NH)

    # ---- capsule cross-attention + GELU (still in the packed lane layout) ----
    def caps_attn(x, c_cap, sfu_cap):
        x_rep = _dot(x, T)                                                   # (BL, NH)
        c_rows = jnp.broadcast_to(c_cap[:, None, :], (B, L, NH)).reshape(BL, NH)
        prob = _softmax_last(_dot(x_rep * c_rows, E_T))                      # (BL, N)
        s_rows = jnp.broadcast_to(sfu_cap[:, None, :], (B, L, NH)).reshape(BL, NH)
        return _gelu(_dot(_dot(prob, E) * s_rows, T_T))                      # (BL, H)

    caps_e2w = caps_attn(cw, c_cap_w, sfu_cap_w)
    caps_e2f = caps_attn(cf, c_cap_f, sfu_cap_f)

    # ---- SelfAttnMatch over the (virtual) concat + FFN (concat-free splits) ----
    proj = jax.nn.relu(_dot(caps_e2w, sa_w1[...]) + _dot(caps_e2f, sa_w2[...]) + sa_b[...])
    proj3 = proj.reshape(B, L, 2 * H)
    alpha = _softmax_last(jnp.einsum('bld,bmd->blm', proj3, proj3,
                                     preferred_element_type=jnp.float32))    # (B, L, L)
    m_w = jnp.einsum('blm,bmh->blh', alpha, caps_e2w.reshape(B, L, H),
                     preferred_element_type=jnp.float32)
    m_f = jnp.einsum('blm,bmh->blh', alpha, caps_e2f.reshape(B, L, H),
                     preferred_element_type=jnp.float32)
    t_ffn = _gelu(_dot(_gelu(m_w).reshape(BL, H), ffn_w1[...])
                  + _dot(_gelu(m_f).reshape(BL, H), ffn_w2[...]) + ffn_b[...])  # (BL, H)

    # ---- per-stream attention maps (module returns only alpha for these) ----
    def attn_map(x, w, bias):
        p = jax.nn.relu(_dot(x, w[...]) + bias[...]).reshape(B, L, H)
        sc = jnp.einsum('bld,bmd->blm', p, p, preferred_element_type=jnp.float32)
        return _softmax_last(sc)                                             # (B, L, L)

    w_att = attn_map(cw, wa_w, wa_b)
    f_att = attn_map(cf, fa_w, fa_b)

    # ---- residual + LayerNorm (ResConnectionLayer), lane-dense output slab ----
    out = c + _layer_norm(t_ffn, ln_g[...], ln_b[...])                       # (BL, H)
    pad = jnp.zeros((BL, NH - H - 2 * L), jnp.float32)
    out_ref[...] = jnp.concatenate(
        [out, w_att.reshape(BL, L), f_att.reshape(BL, L), pad], axis=-1)     # (BL, 128)


# ---------------- wrapper ----------------
def _pack_caps_weight(w):
    """(N, H, H) -> (H, N*H) so that u_hat_packed[:, n*H:(n+1)*H] == x @ w[n]."""
    return jnp.transpose(w, (1, 0, 2)).reshape(H, N * H)


def _prepare_params(params):
    flat = []
    for pref in ('e2w', 'e2f'):
        wr, wg = params[f'{pref}_wr'], params[f'{pref}_wg']
        flat += [wr[:H], wr[H:], params[f'{pref}_br'],
                 wg[:H], wg[H:], params[f'{pref}_bg'],
                 _pack_caps_weight(params[f'{pref}_capw']),
                 _pack_caps_weight(params[f'{pref}_capsfuw'])]
    sa_w, ffn_w = params['sa_w'], params['ffn_w']
    flat += [sa_w[:H], sa_w[H:], params['sa_b'],
             ffn_w[:H], ffn_w[H:], params['ffn_b'],
             params['wa_w'], params['wa_b'], params['fa_w'], params['fa_b'],
             params['ln_g'], params['ln_b']]
    return flat


def transformer_block(c_encode, c2w_encode, c2f_encode, params):
    flat = _prepare_params(params)
    # constant 0/1 helper matrices for the packed capsule lane layout
    e_mat = jnp.repeat(jnp.eye(N, dtype=jnp.float32), H, axis=1)     # (N, NH)
    t_mat = jnp.tile(jnp.eye(H, dtype=jnp.float32), (1, N))          # (H, NH)

    slab = pl.pallas_call(
        transformer_block_kernel,
        out_shape=jax.ShapeDtypeStruct((BL, NH), jnp.float32),
        compiler_params=pltpu.CompilerParams(vmem_limit_bytes=32 * 1024 * 1024),
    )(c_encode, c2w_encode, c2f_encode,
      e_mat, e_mat.T, t_mat, t_mat.T, *flat)

    out = slab[:, :H].reshape(B, L, H)
    w_att = slab[:, H:H + L].reshape(B, L, L)
    f_att = slab[:, H + L:H + 2 * L].reshape(B, L, L)
    return out, w_att, f_att


def make_params(key):
    ks = iter(jax.random.split(key, 16))

    def normal(shape, scale=0.05):
        return (scale * jax.random.normal(next(ks), shape)).astype(jnp.float32)

    p = {}
    for pref in ('e2w', 'e2f'):
        p[f'{pref}_wr'] = normal((2 * H, H))
        p[f'{pref}_br'] = jnp.zeros((1, H), jnp.float32)
        p[f'{pref}_wg'] = normal((2 * H, H))
        p[f'{pref}_bg'] = jnp.zeros((1, H), jnp.float32)
        p[f'{pref}_capw'] = normal((N, H, H))       # cap_layer weights
        p[f'{pref}_capsfuw'] = normal((N, H, H))    # cap_sfu_layer weights
    p['sa_w'] = normal((2 * H, 2 * H))
    p['sa_b'] = jnp.zeros((1, 2 * H), jnp.float32)
    p['ffn_w'] = normal((2 * H, H))
    p['ffn_b'] = jnp.zeros((1, H), jnp.float32)
    p['wa_w'] = normal((H, H))
    p['wa_b'] = jnp.zeros((1, H), jnp.float32)
    p['fa_w'] = normal((H, H))
    p['fa_b'] = jnp.zeros((1, H), jnp.float32)
    p['ln_g'] = jnp.ones((1, H), jnp.float32)
    p['ln_b'] = jnp.zeros((1, H), jnp.float32)
    return p


if __name__ == "__main__":
    key = jax.random.PRNGKey(0)
    k1, k2, k3, kp = jax.random.split(key, 4)
    c_encode = jax.random.normal(k1, (B, L, H), jnp.float32)
    c2w_encode = jax.random.normal(k2, (B, L, H), jnp.float32)
    c2f_encode = jax.random.normal(k3, (B, L, H), jnp.float32)
    params = make_params(kp)

    out, w_att, f_att = transformer_block(c_encode, c2w_encode, c2f_encode, params)
    jax.block_until_ready((out, w_att, f_att))

    assert out.shape == (B, L, H)
    assert w_att.shape == (B, L, L) and f_att.shape == (B, L, L)
    assert bool(jnp.isfinite(out).all())
    assert bool(jnp.isfinite(w_att).all()) and bool(jnp.isfinite(f_att).all())
    # attention rows must sum to 1 (softmax sanity check)
    assert bool(jnp.allclose(jnp.sum(w_att, axis=-1), 1.0, atol=1e-4))
    assert bool(jnp.allclose(jnp.sum(f_att, axis=-1), 1.0, atol=1e-4))
    print("KERNEL_OK")
</pallas_src>

<mosaic_0001>
module attributes {stable_mosaic.version = 11 : i64} {
  func.func @transformer_block_kernel(%arg0: memref<2x8x32xf32, #tpu.memory_space<vmem>>, %arg1: memref<2x8x32xf32, #tpu.memory_space<vmem>>, %arg2: memref<2x8x32xf32, #tpu.memory_space<vmem>>, %arg3: memref<4x128xf32, #tpu.memory_space<vmem>>, %arg4: memref<128x4xf32, #tpu.memory_space<vmem>>, %arg5: memref<32x128xf32, #tpu.memory_space<vmem>>, %arg6: memref<128x32xf32, #tpu.memory_space<vmem>>, %arg7: memref<32x32xf32, #tpu.memory_space<vmem>>, %arg8: memref<32x32xf32, #tpu.memory_space<vmem>>, %arg9: memref<1x32xf32, #tpu.memory_space<vmem>>, %arg10: memref<32x32xf32, #tpu.memory_space<vmem>>, %arg11: memref<32x32xf32, #tpu.memory_space<vmem>>, %arg12: memref<1x32xf32, #tpu.memory_space<vmem>>, %arg13: memref<32x128xf32, #tpu.memory_space<vmem>>, %arg14: memref<32x128xf32, #tpu.memory_space<vmem>>, %arg15: memref<32x32xf32, #tpu.memory_space<vmem>>, %arg16: memref<32x32xf32, #tpu.memory_space<vmem>>, %arg17: memref<1x32xf32, #tpu.memory_space<vmem>>, %arg18: memref<32x32xf32, #tpu.memory_space<vmem>>, %arg19: memref<32x32xf32, #tpu.memory_space<vmem>>, %arg20: memref<1x32xf32, #tpu.memory_space<vmem>>, %arg21: memref<32x128xf32, #tpu.memory_space<vmem>>, %arg22: memref<32x128xf32, #tpu.memory_space<vmem>>, %arg23: memref<32x64xf32, #tpu.memory_space<vmem>>, %arg24: memref<32x64xf32, #tpu.memory_space<vmem>>, %arg25: memref<1x64xf32, #tpu.memory_space<vmem>>, %arg26: memref<32x32xf32, #tpu.memory_space<vmem>>, %arg27: memref<32x32xf32, #tpu.memory_space<vmem>>, %arg28: memref<1x32xf32, #tpu.memory_space<vmem>>, %arg29: memref<32x32xf32, #tpu.memory_space<vmem>>, %arg30: memref<1x32xf32, #tpu.memory_space<vmem>>, %arg31: memref<32x32xf32, #tpu.memory_space<vmem>>, %arg32: memref<1x32xf32, #tpu.memory_space<vmem>>, %arg33: memref<1x32xf32, #tpu.memory_space<vmem>>, %arg34: memref<1x32xf32, #tpu.memory_space<vmem>>, %arg35: memref<16x128xf32, #tpu.memory_space<vmem>>) attributes {dimension_semantics = [], scalar_prefetch = 0 : i64, scratch_operands = 0 : i64, tpu.core_type = #tpu.core_type<tc>} {
    %c0 = arith.constant 0 : index
    %c0_0 = arith.constant 0 : index
    %0 = vector.load %arg3[%c0, %c0_0] : memref<4x128xf32, #tpu.memory_space<vmem>>, vector<4x128xf32>
    %c0_1 = arith.constant 0 : index
    %c0_2 = arith.constant 0 : index
    %1 = vector.load %arg4[%c0_1, %c0_2] : memref<128x4xf32, #tpu.memory_space<vmem>>, vector<128x4xf32>
    %c0_3 = arith.constant 0 : index
    %c0_4 = arith.constant 0 : index
    %2 = vector.load %arg5[%c0_3, %c0_4] : memref<32x128xf32, #tpu.memory_space<vmem>>, vector<32x128xf32>
    %c0_5 = arith.constant 0 : index
    %c0_6 = arith.constant 0 : index
    %3 = vector.load %arg6[%c0_5, %c0_6] : memref<128x32xf32, #tpu.memory_space<vmem>>, vector<128x32xf32>
    %c0_7 = arith.constant 0 : index
    %c0_8 = arith.constant 0 : index
    %c0_9 = arith.constant 0 : index
    %4 = vector.load %arg0[%c0_7, %c0_8, %c0_9] : memref<2x8x32xf32, #tpu.memory_space<vmem>>, vector<2x8x32xf32>
    %5 = vector.shape_cast %4 : vector<2x8x32xf32> to vector<16x32xf32>
    %c0_10 = arith.constant 0 : index
    %c0_11 = arith.constant 0 : index
    %c0_12 = arith.constant 0 : index
    %6 = vector.load %arg1[%c0_10, %c0_11, %c0_12] : memref<2x8x32xf32, #tpu.memory_space<vmem>>, vector<2x8x32xf32>
    %7 = vector.shape_cast %6 : vector<2x8x32xf32> to vector<16x32xf32>
    %c0_13 = arith.constant 0 : index
    %c0_14 = arith.constant 0 : index
    %c0_15 = arith.constant 0 : index
    %8 = vector.load %arg2[%c0_13, %c0_14, %c0_15] : memref<2x8x32xf32, #tpu.memory_space<vmem>>, vector<2x8x32xf32>
    %9 = vector.shape_cast %8 : vector<2x8x32xf32> to vector<16x32xf32>
    %c0_16 = arith.constant 0 : index
    %c0_17 = arith.constant 0 : index
    %10 = vector.load %arg7[%c0_16, %c0_17] : memref<32x32xf32, #tpu.memory_space<vmem>>, vector<32x32xf32>
    %cst = arith.constant dense<0.000000e+00> : vector<16x32xf32>
    %11 = tpu.matmul %5, %10, %cst {dimension_numbers = #tpu.dot_dimension_numbers<[1], [0], [0], [1], [0, 0, 1, 1], [], []>} : vector<16x32xf32>, vector<32x32xf32>, vector<16x32xf32> -> vector<16x32xf32>
    %c0_18 = arith.constant 0 : index
    %c0_19 = arith.constant 0 : index
    %12 = vector.load %arg8[%c0_18, %c0_19] : memref<32x32xf32, #tpu.memory_space<vmem>>, vector<32x32xf32>
    %cst_20 = arith.constant dense<0.000000e+00> : vector<16x32xf32>
    %13 = tpu.matmul %7, %12, %cst_20 {dimension_numbers = #tpu.dot_dimension_numbers<[1], [0], [0], [1], [0, 0, 1, 1], [], []>} : vector<16x32xf32>, vector<32x32xf32>, vector<16x32xf32> -> vector<16x32xf32>
    %14 = arith.addf %11, %13 : vector<16x32xf32>
    %c0_21 = arith.constant 0 : index
    %c0_22 = arith.constant 0 : index
    %15 = vector.load %arg9[%c0_21, %c0_22] : memref<1x32xf32, #tpu.memory_space<vmem>>, vector<1x32xf32>
    %16 = vector.broadcast %15 : vector<1x32xf32> to vector<16x32xf32>
    %17 = arith.addf %14, %16 : vector<16x32xf32>
    %18 = math.tanh %17 : vector<16x32xf32>
    %c0_23 = arith.constant 0 : index
    %c0_24 = arith.constant 0 : index
    %19 = vector.load %arg10[%c0_23, %c0_24] : memref<32x32xf32, #tpu.memory_space<vmem>>, vector<32x32xf32>
    %cst_25 = arith.constant dense<0.000000e+00> : vector<16x32xf32>
    %20 = tpu.matmul %5, %19, %cst_25 {dimension_numbers = #tpu.dot_dimension_numbers<[1], [0], [0], [1], [0, 0, 1, 1], [], []>} : vector<16x32xf32>, vector<32x32xf32>, vector<16x32xf32> -> vector<16x32xf32>
    %c0_26 = arith.constant 0 : index
    %c0_27 = arith.constant 0 : index
    %21 = vector.load %arg11[%c0_26, %c0_27] : memref<32x32xf32, #tpu.memory_space<vmem>>, vector<32x32xf32>
    %cst_28 = arith.constant dense<0.000000e+00> : vector<16x32xf32>
    %22 = tpu.matmul %7, %21, %cst_28 {dimension_numbers = #tpu.dot_dimension_numbers<[1], [0], [0], [1], [0, 0, 1, 1], [], []>} : vector<16x32xf32>, vector<32x32xf32>, vector<16x32xf32> -> vector<16x32xf32>
    %23 = arith.addf %20, %22 : vector<16x32xf32>
    %c0_29 = arith.constant 0 : index
    %c0_30 = arith.constant 0 : index
    %24 = vector.load %arg12[%c0_29, %c0_30] : memref<1x32xf32, #tpu.memory_space<vmem>>, vector<1x32xf32>
    %25 = vector.broadcast %24 : vector<1x32xf32> to vector<16x32xf32>
    %26 = arith.addf %23, %25 : vector<16x32xf32>
    %27 = arith.negf %26 : vector<16x32xf32>
    %28 = math.exp %27 : vector<16x32xf32>
    %cst_31 = arith.constant 1.000000e+00 : f32
    %29 = vector.broadcast %cst_31 : f32 to vector<16x32xf32>
    %30 = arith.addf %29, %28 : vector<16x32xf32>
    %31 = arith.divf %29, %30 : vector<16x32xf32>
    %32 = arith.mulf %31, %18 : vector<16x32xf32>
    %cst_32 = arith.constant 1.000000e+00 : f32
    %33 = vector.broadcast %cst_32 : f32 to vector<16x32xf32>
    %34 = arith.subf %33, %31 : vector<16x32xf32>
    %35 = arith.mulf %34, %5 : vector<16x32xf32>
    %36 = arith.addf %32, %35 : vector<16x32xf32>
    %c0_33 = arith.constant 0 : index
    %c0_34 = arith.constant 0 : index
    %37 = vector.load %arg15[%c0_33, %c0_34] : memref<32x32xf32, #tpu.memory_space<vmem>>, vector<32x32xf32>
    %cst_35 = arith.constant dense<0.000000e+00> : vector<16x32xf32>
    %38 = tpu.matmul %5, %37, %cst_35 {dimension_numbers = #tpu.dot_dimension_numbers<[1], [0], [0], [1], [0, 0, 1, 1], [], []>} : vector<16x32xf32>, vector<32x32xf32>, vector<16x32xf32> -> vector<16x32xf32>
    %c0_36 = arith.constant 0 : index
    %c0_37 = arith.constant 0 : index
    %39 = vector.load %arg16[%c0_36, %c0_37] : memref<32x32xf32, #tpu.memory_space<vmem>>, vector<32x32xf32>
    %cst_38 = arith.constant dense<0.000000e+00> : vector<16x32xf32>
    %40 = tpu.matmul %9, %39, %cst_38 {dimension_numbers = #tpu.dot_dimension_numbers<[1], [0], [0], [1], [0, 0, 1, 1], [], []>} : vector<16x32xf32>, vector<32x32xf32>, vector<16x32xf32> -> vector<16x32xf32>
    %41 = arith.addf %38, %40 : vector<16x32xf32>
    %c0_39 = arith.constant 0 : index
    %c0_40 = arith.constant 0 : index
    %42 = vector.load %arg17[%c0_39, %c0_40] : memref<1x32xf32, #tpu.memory_space<vmem>>, vector<1x32xf32>
    %43 = vector.broadcast %42 : vector<1x32xf32> to vector<16x32xf32>
    %44 = arith.addf %41, %43 : vector<16x32xf32>
    %45 = math.tanh %44 : vector<16x32xf32>
    %c0_41 = arith.constant 0 : index
    %c0_42 = arith.constant 0 : index
    %46 = vector.load %arg18[%c0_41, %c0_42] : memref<32x32xf32, #tpu.memory_space<vmem>>, vector<32x32xf32>
    %cst_43 = arith.constant dense<0.000000e+00> : vector<16x32xf32>
    %47 = tpu.matmul %5, %46, %cst_43 {dimension_numbers = #tpu.dot_dimension_numbers<[1], [0], [0], [1], [0, 0, 1, 1], [], []>} : vector<16x32xf32>, vector<32x32xf32>, vector<16x32xf32> -> vector<16x32xf32>
    %c0_44 = arith.constant 0 : index
    %c0_45 = arith.constant 0 : index
    %48 = vector.load %arg19[%c0_44, %c0_45] : memref<32x32xf32, #tpu.memory_space<vmem>>, vector<32x32xf32>
    %cst_46 = arith.constant dense<0.000000e+00> : vector<16x32xf32>
    %49 = tpu.matmul %9, %48, %cst_46 {dimension_numbers = #tpu.dot_dimension_numbers<[1], [0], [0], [1], [0, 0, 1, 1], [], []>} : vector<16x32xf32>, vector<32x32xf32>, vector<16x32xf32> -> vector<16x32xf32>
    %50 = arith.addf %47, %49 : vector<16x32xf32>
    %c0_47 = arith.constant 0 : index
    %c0_48 = arith.constant 0 : index
    %51 = vector.load %arg20[%c0_47, %c0_48] : memref<1x32xf32, #tpu.memory_space<vmem>>, vector<1x32xf32>
    %52 = vector.broadcast %51 : vector<1x32xf32> to vector<16x32xf32>
    %53 = arith.addf %50, %52 : vector<16x32xf32>
    %54 = arith.negf %53 : vector<16x32xf32>
    %55 = math.exp %54 : vector<16x32xf32>
    %cst_49 = arith.constant 1.000000e+00 : f32
    %56 = vector.broadcast %cst_49 : f32 to vector<16x32xf32>
    %57 = arith.addf %56, %55 : vector<16x32xf32>
    %58 = arith.divf %56, %57 : vector<16x32xf32>
    %59 = arith.mulf %58, %45 : vector<16x32xf32>
    %cst_50 = arith.constant 1.000000e+00 : f32
    %60 = vector.broadcast %cst_50 : f32 to vector<16x32xf32>
    %61 = arith.subf %60, %58 : vector<16x32xf32>
    %62 = arith.mulf %61, %5 : vector<16x32xf32>
    %63 = arith.addf %59, %62 : vector<16x32xf32>
    %c0_51 = arith.constant 0 : index
    %c0_52 = arith.constant 0 : index
    %64 = vector.load %arg13[%c0_51, %c0_52] : memref<32x128xf32, #tpu.memory_space<vmem>>, vector<32x128xf32>
    %cst_53 = arith.constant dense<0.000000e+00> : vector<16x128xf32>
    %65 = tpu.matmul %5, %64, %cst_53 {dimension_numbers = #tpu.dot_dimension_numbers<[1], [0], [0], [1], [0, 0, 1, 1], [], []>} : vector<16x32xf32>, vector<32x128xf32>, vector<16x128xf32> -> vector<16x128xf32>
    %c0_54 = arith.constant 0 : index
    %c0_55 = arith.constant 0 : index
    %66 = vector.load %arg21[%c0_54, %c0_55] : memref<32x128xf32, #tpu.memory_space<vmem>>, vector<32x128xf32>
    %cst_56 = arith.constant dense<0.000000e+00> : vector<16x128xf32>
    %67 = tpu.matmul %5, %66, %cst_56 {dimension_numbers = #tpu.dot_dimension_numbers<[1], [0], [0], [1], [0, 0, 1, 1], [], []>} : vector<16x32xf32>, vector<32x128xf32>, vector<16x128xf32> -> vector<16x128xf32>
    %c0_57 = arith.constant 0 : index
    %c0_58 = arith.constant 0 : index
    %68 = vector.load %arg14[%c0_57, %c0_58] : memref<32x128xf32, #tpu.memory_space<vmem>>, vector<32x128xf32>
    %cst_59 = arith.constant dense<0.000000e+00> : vector<16x128xf32>
    %69 = tpu.matmul %36, %68, %cst_59 {dimension_numbers = #tpu.dot_dimension_numbers<[1], [0], [0], [1], [0, 0, 1, 1], [], []>} : vector<16x32xf32>, vector<32x128xf32>, vector<16x128xf32> -> vector<16x128xf32>
    %c0_60 = arith.constant 0 : index
    %c0_61 = arith.constant 0 : index
    %70 = vector.load %arg22[%c0_60, %c0_61] : memref<32x128xf32, #tpu.memory_space<vmem>>, vector<32x128xf32>
    %cst_62 = arith.constant dense<0.000000e+00> : vector<16x128xf32>
    %71 = tpu.matmul %63, %70, %cst_62 {dimension_numbers = #tpu.dot_dimension_numbers<[1], [0], [0], [1], [0, 0, 1, 1], [], []>} : vector<16x32xf32>, vector<32x128xf32>, vector<16x128xf32> -> vector<16x128xf32>
    %72 = vector.shape_cast %65 : vector<16x128xf32> to vector<2x8x128xf32>
    %73 = vector.shape_cast %67 : vector<16x128xf32> to vector<2x8x128xf32>
    %74 = vector.shape_cast %69 : vector<16x128xf32> to vector<2x8x128xf32>
    %75 = vector.shape_cast %71 : vector<16x128xf32> to vector<2x8x128xf32>
    %76 = tpu.concatenate %72, %73, %74, %75 in 0 : vector<2x8x128xf32>, vector<2x8x128xf32>, vector<2x8x128xf32>, vector<2x8x128xf32> -> vector<8x8x128xf32>
    %cst_63 = arith.constant 0.000000e+00 : f32
    %77 = vector.broadcast %cst_63 : f32 to vector<8x8x4xf32>
    %cst_64 = arith.constant dense<0xFF800000> : vector<8x8xf32>
    %78 = vector.multi_reduction <maximumf>, %77, %cst_64 [2] : vector<8x8x4xf32> to vector<8x8xf32>
    %79 = vector.shape_cast %78 : vector<8x8xf32> to vector<8x8x1xf32>
    %80 = vector.broadcast %79 : vector<8x8x1xf32> to vector<8x8x4xf32>
    %81 = arith.subf %77, %80 : vector<8x8x4xf32>
    %82 = math.exp %81 : vector<8x8x4xf32>
    %cst_65 = arith.constant dense<0.000000e+00> : vector<8x8xf32>
    %83 = vector.multi_reduction <add>, %82, %cst_65 [2] : vector<8x8x4xf32> to vector<8x8xf32>
    %84 = vector.shape_cast %83 : vector<8x8xf32> to vector<8x8x1xf32>
    %85 = vector.broadcast %84 : vector<8x8x1xf32> to vector<8x8x4xf32>
    %86 = arith.divf %82, %85 : vector<8x8x4xf32>
    %87 = vector.shape_cast %86 : vector<8x8x4xf32> to vector<64x4xf32>
    %cst_66 = arith.constant dense<0.000000e+00> : vector<64x128xf32>
    %88 = tpu.matmul %87, %0, %cst_66 {dimension_numbers = #tpu.dot_dimension_numbers<[1], [0], [0], [1], [0, 0, 1, 1], [], []>} : vector<64x4xf32>, vector<4x128xf32>, vector<64x128xf32> -> vector<64x128xf32>
    %89 = vector.shape_cast %88 : vector<64x128xf32> to vector<8x8x128xf32>
    %90 = arith.mulf %89, %76 : vector<8x8x128xf32>
    %cst_67 = arith.constant dense<0.000000e+00> : vector<8x128xf32>
    %91 = vector.multi_reduction <add>, %90, %cst_67 [1] : vector<8x8x128xf32> to vector<8x128xf32>
    %92 = arith.mulf %91, %91 : vector<8x128xf32>
    %cst_68 = arith.constant dense<0.000000e+00> : vector<8x4xf32>
    %93 = tpu.matmul %92, %1, %cst_68 {dimension_numbers = #tpu.dot_dimension_numbers<[1], [0], [0], [1], [0, 0, 1, 1], [], []>} : vector<8x128xf32>, vector<128x4xf32>, vector<8x4xf32> -> vector<8x4xf32>
    %cst_69 = arith.constant dense<0.000000e+00> : vector<8x128xf32>
    %94 = tpu.matmul %93, %0, %cst_69 {dimension_numbers = #tpu.dot_dimension_numbers<[1], [0], [0], [1], [0, 0, 1, 1], [], []>} : vector<8x4xf32>, vector<4x128xf32>, vector<8x128xf32> -> vector<8x128xf32>
    %cst_70 = arith.constant 1.000000e+00 : f32
    %95 = vector.broadcast %cst_70 : f32 to vector<8x128xf32>
    %96 = arith.addf %95, %94 : vector<8x128xf32>
    %97 = arith.divf %94, %96 : vector<8x128xf32>
    %98 = arith.mulf %91, %97 : vector<8x128xf32>
    %cst_71 = arith.constant 9.99999993E-9 : f32
    %99 = vector.broadcast %cst_71 : f32 to vector<8x128xf32>
    %100 = arith.addf %94, %99 : vector<8x128xf32>
    %101 = math.rsqrt %100 : vector<8x128xf32>
    %102 = arith.mulf %98, %101 : vector<8x128xf32>
    %103 = vector.shape_cast %102 : vector<8x128xf32> to vector<8x1x128xf32>
    %104 = vector.broadcast %103 : vector<8x1x128xf32> to vector<8x8x128xf32>
    %105 = arith.mulf %76, %104 : vector<8x8x128xf32>
    %106 = vector.shape_cast %105 : vector<8x8x128xf32> to vector<64x128xf32>
    %cst_72 = arith.constant dense<0.000000e+00> : vector<64x4xf32>
    %107 = tpu.matmul %106, %1, %cst_72 {dimension_numbers = #tpu.dot_dimension_numbers<[1], [0], [0], [1], [0, 0, 1, 1], [], []>} : vector<64x128xf32>, vector<128x4xf32>, vector<64x4xf32> -> vector<64x4xf32>
    %108 = vector.shape_cast %107 : vector<64x4xf32> to vector<8x8x4xf32>
    %109 = arith.addf %77, %108 : vector<8x8x4xf32>
    %cst_73 = arith.constant dense<0xFF800000> : vector<8x8xf32>
    %110 = vector.multi_reduction <maximumf>, %109, %cst_73 [2] : vector<8x8x4xf32> to vector<8x8xf32>
    %111 = vector.shape_cast %110 : vector<8x8xf32> to vector<8x8x1xf32>
    %112 = vector.broadcast %111 : vector<8x8x1xf32> to vector<8x8x4xf32>
    %113 = arith.subf %109, %112 : vector<8x8x4xf32>
    %114 = math.exp %113 : vector<8x8x4xf32>
    %cst_74 = arith.constant dense<0.000000e+00> : vector<8x8xf32>
    %115 = vector.multi_reduction <add>, %114, %cst_74 [2] : vector<8x8x4xf32> to vector<8x8xf32>
    %116 = vector.shape_cast %115 : vector<8x8xf32> to vector<8x8x1xf32>
    %117 = vector.broadcast %116 : vector<8x8x1xf32> to vector<8x8x4xf32>
    %118 = arith.divf %114, %117 : vector<8x8x4xf32>
    %119 = vector.shape_cast %118 : vector<8x8x4xf32> to vector<64x4xf32>
    %cst_75 = arith.constant dense<0.000000e+00> : vector<64x128xf32>
    %120 = tpu.matmul %119, %0, %cst_75 {dimension_numbers = #tpu.dot_dimension_numbers<[1], [0], [0], [1], [0, 0, 1, 1], [], []>} : vector<64x4xf32>, vector<4x128xf32>, vector<64x128xf32> -> vector<64x128xf32>
    %121 = vector.shape_cast %120 : vector<64x128xf32> to vector<8x8x128xf32>
    %122 = arith.mulf %121, %76 : vector<8x8x128xf32>
    %cst_76 = arith.constant dense<0.000000e+00> : vector<8x128xf32>
    %123 = vector.multi_reduction <add>, %122, %cst_76 [1] : vector<8x8x128xf32> to vector<8x128xf32>
    %124 = arith.mulf %123, %123 : vector<8x128xf32>
    %cst_77 = arith.constant dense<0.000000e+00> : vector<8x4xf32>
    %125 = tpu.matmul %124, %1, %cst_77 {dimension_numbers = #tpu.dot_dimension_numbers<[1], [0], [0], [1], [0, 0, 1, 1], [], []>} : vector<8x128xf32>, vector<128x4xf32>, vector<8x4xf32> -> vector<8x4xf32>
    %cst_78 = arith.constant dense<0.000000e+00> : vector<8x128xf32>
    %126 = tpu.matmul %125, %0, %cst_78 {dimension_numbers = #tpu.dot_dimension_numbers<[1], [0], [0], [1], [0, 0, 1, 1], [], []>} : vector<8x4xf32>, vector<4x128xf32>, vector<8x128xf32> -> vector<8x128xf32>
    %cst_79 = arith.constant 1.000000e+00 : f32
    %127 = vector.broadcast %cst_79 : f32 to vector<8x128xf32>
    %128 = arith.addf %127, %126 : vector<8x128xf32>
    %129 = arith.divf %126, %128 : vector<8x128xf32>
    %130 = arith.mulf %123, %129 : vector<8x128xf32>
    %cst_80 = arith.constant 9.99999993E-9 : f32
    %131 = vector.broadcast %cst_80 : f32 to vector<8x128xf32>
    %132 = arith.addf %126, %131 : vector<8x128xf32>
    %133 = math.rsqrt %132 : vector<8x128xf32>
    %134 = arith.mulf %130, %133 : vector<8x128xf32>
    %135 = vector.shape_cast %134 : vector<8x128xf32> to vector<8x1x128xf32>
    %136 = vector.broadcast %135 : vector<8x1x128xf32> to vector<8x8x128xf32>
    %137 = arith.mulf %76, %136 : vector<8x8x128xf32>
    %138 = vector.shape_cast %137 : vector<8x8x128xf32> to vector<64x128xf32>
    %cst_81 = arith.constant dense<0.000000e+00> : vector<64x4xf32>
    %139 = tpu.matmul %138, %1, %cst_81 {dimension_numbers = #tpu.dot_dimension_numbers<[1], [0], [0], [1], [0, 0, 1, 1], [], []>} : vector<64x128xf32>, vector<128x4xf32>, vector<64x4xf32> -> vector<64x4xf32>
    %140 = vector.shape_cast %139 : vector<64x4xf32> to vector<8x8x4xf32>
    %141 = arith.addf %109, %140 : vector<8x8x4xf32>
    %cst_82 = arith.constant dense<0xFF800000> : vector<8x8xf32>
    %142 = vector.multi_reduction <maximumf>, %141, %cst_82 [2] : vector<8x8x4xf32> to vector<8x8xf32>
    %143 = vector.shape_cast %142 : vector<8x8xf32> to vector<8x8x1xf32>
    %144 = vector.broadcast %143 : vector<8x8x1xf32> to vector<8x8x4xf32>
    %145 = arith.subf %141, %144 : vector<8x8x4xf32>
    %146 = math.exp %145 : vector<8x8x4xf32>
    %cst_83 = arith.constant dense<0.000000e+00> : vector<8x8xf32>
    %147 = vector.multi_reduction <add>, %146, %cst_83 [2] : vector<8x8x4xf32> to vector<8x8xf32>
    %148 = vector.shape_cast %147 : vector<8x8xf32> to vector<8x8x1xf32>
    %149 = vector.broadcast %148 : vector<8x8x1xf32> to vector<8x8x4xf32>
    %150 = arith.divf %146, %149 : vector<8x8x4xf32>
    %151 = vector.shape_cast %150 : vector<8x8x4xf32> to vector<64x4xf32>
    %cst_84 = arith.constant dense<0.000000e+00> : vector<64x128xf32>
    %152 = tpu.matmul %151, %0, %cst_84 {dimension_numbers = #tpu.dot_dimension_numbers<[1], [0], [0], [1], [0, 0, 1, 1], [], []>} : vector<64x4xf32>, vector<4x128xf32>, vector<64x128xf32> -> vector<64x128xf32>
    %153 = vector.shape_cast %152 : vector<64x128xf32> to vector<8x8x128xf32>
    %154 = arith.mulf %153, %76 : vector<8x8x128xf32>
    %cst_85 = arith.constant dense<0.000000e+00> : vector<8x128xf32>
    %155 = vector.multi_reduction <add>, %154, %cst_85 [1] : vector<8x8x128xf32> to vector<8x128xf32>
    %156 = arith.mulf %155, %155 : vector<8x128xf32>
    %cst_86 = arith.constant dense<0.000000e+00> : vector<8x4xf32>
    %157 = tpu.matmul %156, %1, %cst_86 {dimension_numbers = #tpu.dot_dimension_numbers<[1], [0], [0], [1], [0, 0, 1, 1], [], []>} : vector<8x128xf32>, vector<128x4xf32>, vector<8x4xf32> -> vector<8x4xf32>
    %cst_87 = arith.constant dense<0.000000e+00> : vector<8x128xf32>
    %158 = tpu.matmul %157, %0, %cst_87 {dimension_numbers = #tpu.dot_dimension_numbers<[1], [0], [0], [1], [0, 0, 1, 1], [], []>} : vector<8x4xf32>, vector<4x128xf32>, vector<8x128xf32> -> vector<8x128xf32>
    %cst_88 = arith.constant 1.000000e+00 : f32
    %159 = vector.broadcast %cst_88 : f32 to vector<8x128xf32>
    %160 = arith.addf %159, %158 : vector<8x128xf32>
    %161 = arith.divf %158, %160 : vector<8x128xf32>
    %162 = arith.mulf %155, %161 : vector<8x128xf32>
    %cst_89 = arith.constant 9.99999993E-9 : f32
    %163 = vector.broadcast %cst_89 : f32 to vector<8x128xf32>
    %164 = arith.addf %158, %163 : vector<8x128xf32>
    %165 = math.rsqrt %164 : vector<8x128xf32>
    %166 = arith.mulf %162, %165 : vector<8x128xf32>
    %167 = vector.extract_strided_slice %166 {offsets = [0, 0], sizes = [2, 128], strides = [1, 1]} : vector<8x128xf32> to vector<2x128xf32>
    %168 = vector.extract_strided_slice %166 {offsets = [2, 0], sizes = [2, 128], strides = [1, 1]} : vector<8x128xf32> to vector<2x128xf32>
    %169 = vector.extract_strided_slice %166 {offsets = [4, 0], sizes = [2, 128], strides = [1, 1]} : vector<8x128xf32> to vector<2x128xf32>
    %170 = vector.extract_strided_slice %166 {offsets = [6, 0], sizes = [2, 128], strides = [1, 1]} : vector<8x128xf32> to vector<2x128xf32>
    %cst_90 = arith.constant dense<0.000000e+00> : vector<16x128xf32>
    %171 = tpu.matmul %7, %2, %cst_90 {dimension_numbers = #tpu.dot_dimension_numbers<[1], [0], [0], [1], [0, 0, 1, 1], [], []>} : vector<16x32xf32>, vector<32x128xf32>, vector<16x128xf32> -> vector<16x128xf32>
    %172 = vector.shape_cast %167 : vector<2x128xf32> to vector<2x1x128xf32>
    %173 = vector.shape_cast %172 : vector<2x1x128xf32> to vector<2x1x128xf32>
    %174 = vector.broadcast %173 : vector<2x1x128xf32> to vector<2x8x128xf32>
    %175 = vector.shape_cast %174 : vector<2x8x128xf32> to vector<16x128xf32>
    %176 = arith.mulf %171, %175 : vector<16x128xf32>
    %cst_91 = arith.constant dense<0.000000e+00> : vector<16x4xf32>
    %177 = tpu.matmul %176, %1, %cst_91 {dimension_numbers = #tpu.dot_dimension_numbers<[1], [0], [0], [1], [0, 0, 1, 1], [], []>} : vector<16x128xf32>, vector<128x4xf32>, vector<16x4xf32> -> vector<16x4xf32>
    %cst_92 = arith.constant dense<0xFF800000> : vector<16xf32>
    %178 = vector.multi_reduction <maximumf>, %177, %cst_92 [1] : vector<16x4xf32> to vector<16xf32>
    %179 = vector.shape_cast %178 : vector<16xf32> to vector<16x1xf32>
    %180 = vector.broadcast %179 : vector<16x1xf32> to vector<16x4xf32>
    %181 = arith.subf %177, %180 : vector<16x4xf32>
    %182 = math.exp %181 : vector<16x4xf32>
    %cst_93 = arith.constant dense<0.000000e+00> : vector<16xf32>
    %183 = vector.multi_reduction <add>, %182, %cst_93 [1] : vector<16x4xf32> to vector<16xf32>
    %184 = vector.shape_cast %183 : vector<16xf32> to vector<16x1xf32>
    %185 = vector.broadcast %184 : vector<16x1xf32> to vector<16x4xf32>
    %186 = arith.divf %182, %185 : vector<16x4xf32>
    %187 = vector.shape_cast %169 : vector<2x128xf32> to vector<2x1x128xf32>
    %188 = vector.shape_cast %187 : vector<2x1x128xf32> to vector<2x1x128xf32>
    %189 = vector.broadcast %188 : vector<2x1x128xf32> to vector<2x8x128xf32>
    %190 = vector.shape_cast %189 : vector<2x8x128xf32> to vector<16x128xf32>
    %cst_94 = arith.constant dense<0.000000e+00> : vector<16x128xf32>
    %191 = tpu.matmul %186, %0, %cst_94 {dimension_numbers = #tpu.dot_dimension_numbers<[1], [0], [0], [1], [0, 0, 1, 1], [], []>} : vector<16x4xf32>, vector<4x128xf32>, vector<16x128xf32> -> vector<16x128xf32>
    %192 = arith.mulf %191, %190 : vector<16x128xf32>
    %cst_95 = arith.constant dense<0.000000e+00> : vector<16x32xf32>
    %193 = tpu.matmul %192, %3, %cst_95 {dimension_numbers = #tpu.dot_dimension_numbers<[1], [0], [0], [1], [0, 0, 1, 1], [], []>} : vector<16x128xf32>, vector<128x32xf32>, vector<16x32xf32> -> vector<16x32xf32>
    %cst_96 = arith.constant 5.000000e-01 : f32
    %194 = vector.broadcast %cst_96 : f32 to vector<16x32xf32>
    %195 = arith.mulf %194, %193 : vector<16x32xf32>
    %cst_97 = arith.constant 4.471500e-02 : f32
    %196 = vector.broadcast %cst_97 : f32 to vector<16x32xf32>
    %197 = arith.mulf %196, %193 : vector<16x32xf32>
    %198 = arith.mulf %197, %193 : vector<16x32xf32>
    %199 = arith.mulf %198, %193 : vector<16x32xf32>
    %200 = arith.addf %193, %199 : vector<16x32xf32>
    %cst_98 = arith.constant 0.797884583 : f32
    %201 = vector.broadcast %cst_98 : f32 to vector<16x32xf32>
    %202 = arith.mulf %201, %200 : vector<16x32xf32>
    %203 = math.tanh %202 : vector<16x32xf32>
    %cst_99 = arith.constant 1.000000e+00 : f32
    %204 = vector.broadcast %cst_99 : f32 to vector<16x32xf32>
    %205 = arith.addf %204, %203 : vector<16x32xf32>
    %206 = arith.mulf %195, %205 : vector<16x32xf32>
    %cst_100 = arith.constant dense<0.000000e+00> : vector<16x128xf32>
    %207 = tpu.matmul %9, %2, %cst_100 {dimension_numbers = #tpu.dot_dimension_numbers<[1], [0], [0], [1], [0, 0, 1, 1], [], []>} : vector<16x32xf32>, vector<32x128xf32>, vector<16x128xf32> -> vector<16x128xf32>
    %208 = vector.shape_cast %168 : vector<2x128xf32> to vector<2x1x128xf32>
    %209 = vector.shape_cast %208 : vector<2x1x128xf32> to vector<2x1x128xf32>
    %210 = vector.broadcast %209 : vector<2x1x128xf32> to vector<2x8x128xf32>
    %211 = vector.shape_cast %210 : vector<2x8x128xf32> to vector<16x128xf32>
    %212 = arith.mulf %207, %211 : vector<16x128xf32>
    %cst_101 = arith.constant dense<0.000000e+00> : vector<16x4xf32>
    %213 = tpu.matmul %212, %1, %cst_101 {dimension_numbers = #tpu.dot_dimension_numbers<[1], [0], [0], [1], [0, 0, 1, 1], [], []>} : vector<16x128xf32>, vector<128x4xf32>, vector<16x4xf32> -> vector<16x4xf32>
    %cst_102 = arith.constant dense<0xFF800000> : vector<16xf32>
    %214 = vector.multi_reduction <maximumf>, %213, %cst_102 [1] : vector<16x4xf32> to vector<16xf32>
    %215 = vector.shape_cast %214 : vector<16xf32> to vector<16x1xf32>
    %216 = vector.broadcast %215 : vector<16x1xf32> to vector<16x4xf32>
    %217 = arith.subf %213, %216 : vector<16x4xf32>
    %218 = math.exp %217 : vector<16x4xf32>
    %cst_103 = arith.constant dense<0.000000e+00> : vector<16xf32>
    %219 = vector.multi_reduction <add>, %218, %cst_103 [1] : vector<16x4xf32> to vector<16xf32>
    %220 = vector.shape_cast %219 : vector<16xf32> to vector<16x1xf32>
    %221 = vector.broadcast %220 : vector<16x1xf32> to vector<16x4xf32>
    %222 = arith.divf %218, %221 : vector<16x4xf32>
    %223 = vector.shape_cast %170 : vector<2x128xf32> to vector<2x1x128xf32>
    %224 = vector.shape_cast %223 : vector<2x1x128xf32> to vector<2x1x128xf32>
    %225 = vector.broadcast %224 : vector<2x1x128xf32> to vector<2x8x128xf32>
    %226 = vector.shape_cast %225 : vector<2x8x128xf32> to vector<16x128xf32>
    %cst_104 = arith.constant dense<0.000000e+00> : vector<16x128xf32>
    %227 = tpu.matmul %222, %0, %cst_104 {dimension_numbers = #tpu.dot_dimension_numbers<[1], [0], [0], [1], [0, 0, 1, 1], [], []>} : vector<16x4xf32>, vector<4x128xf32>, vector<16x128xf32> -> vector<16x128xf32>
    %228 = arith.mulf %227, %226 : vector<16x128xf32>
    %cst_105 = arith.constant dense<0.000000e+00> : vector<16x32xf32>
    %229 = tpu.matmul %228, %3, %cst_105 {dimension_numbers = #tpu.dot_dimension_numbers<[1], [0], [0], [1], [0, 0, 1, 1], [], []>} : vector<16x128xf32>, vector<128x32xf32>, vector<16x32xf32> -> vector<16x32xf32>
    %cst_106 = arith.constant 5.000000e-01 : f32
    %230 = vector.broadcast %cst_106 : f32 to vector<16x32xf32>
    %231 = arith.mulf %230, %229 : vector<16x32xf32>
    %cst_107 = arith.constant 4.471500e-02 : f32
    %232 = vector.broadcast %cst_107 : f32 to vector<16x32xf32>
    %233 = arith.mulf %232, %229 : vector<16x32xf32>
    %234 = arith.mulf %233, %229 : vector<16x32xf32>
    %235 = arith.mulf %234, %229 : vector<16x32xf32>
    %236 = arith.addf %229, %235 : vector<16x32xf32>
    %cst_108 = arith.constant 0.797884583 : f32
    %237 = vector.broadcast %cst_108 : f32 to vector<16x32xf32>
    %238 = arith.mulf %237, %236 : vector<16x32xf32>
    %239 = math.tanh %238 : vector<16x32xf32>
    %cst_109 = arith.constant 1.000000e+00 : f32
    %240 = vector.broadcast %cst_109 : f32 to vector<16x32xf32>
    %241 = arith.addf %240, %239 : vector<16x32xf32>
    %242 = arith.mulf %231, %241 : vector<16x32xf32>
    %c0_110 = arith.constant 0 : index
    %c0_111 = arith.constant 0 : index
    %243 = vector.load %arg23[%c0_110, %c0_111] : memref<32x64xf32, #tpu.memory_space<vmem>>, vector<32x64xf32>
    %cst_112 = arith.constant dense<0.000000e+00> : vector<16x64xf32>
    %244 = tpu.matmul %206, %243, %cst_112 {dimension_numbers = #tpu.dot_dimension_numbers<[1], [0], [0], [1], [0, 0, 1, 1], [], []>} : vector<16x32xf32>, vector<32x64xf32>, vector<16x64xf32> -> vector<16x64xf32>
    %c0_113 = arith.constant 0 : index
    %c0_114 = arith.constant 0 : index
    %245 = vector.load %arg24[%c0_113, %c0_114] : memref<32x64xf32, #tpu.memory_space<vmem>>, vector<32x64xf32>
    %cst_115 = arith.constant dense<0.000000e+00> : vector<16x64xf32>
    %246 = tpu.matmul %242, %245, %cst_115 {dimension_numbers = #tpu.dot_dimension_numbers<[1], [0], [0], [1], [0, 0, 1, 1], [], []>} : vector<16x32xf32>, vector<32x64xf32>, vector<16x64xf32> -> vector<16x64xf32>
    %247 = arith.addf %244, %246 : vector<16x64xf32>
    %c0_116 = arith.constant 0 : index
    %c0_117 = arith.constant 0 : index
    %248 = vector.load %arg25[%c0_116, %c0_117] : memref<1x64xf32, #tpu.memory_space<vmem>>, vector<1x64xf32>
    %249 = vector.broadcast %248 : vector<1x64xf32> to vector<16x64xf32>
    %250 = arith.addf %247, %249 : vector<16x64xf32>
    %cst_118 = arith.constant 0.000000e+00 : f32
    %251 = vector.broadcast %cst_118 : f32 to vector<16x64xf32>
    %252 = arith.maximumf %250, %251 : vector<16x64xf32>
    %253 = vector.shape_cast %252 : vector<16x64xf32> to vector<2x8x64xf32>
    "tpu.trace_start"() <{level = 10 : i32, message = "bld,bmd->blm"}> : () -> ()
    %cst_119 = arith.constant dense<0.000000e+00> : vector<2x8x8xf32>
    %254 = tpu.matmul %253, %253, %cst_119 {dimension_numbers = #tpu.dot_dimension_numbers<[2], [2], [1], [1], [0, 0, 0, 1, 1, 1], [0], [0]>} : vector<2x8x64xf32>, vector<2x8x64xf32>, vector<2x8x8xf32> -> vector<2x8x8xf32>
    "tpu.trace_stop"() : () -> ()
    %cst_120 = arith.constant dense<0xFF800000> : vector<2x8xf32>
    %255 = vector.multi_reduction <maximumf>, %254, %cst_120 [2] : vector<2x8x8xf32> to vector<2x8xf32>
    %256 = vector.shape_cast %255 : vector<2x8xf32> to vector<2x8x1xf32>
    %257 = vector.broadcast %256 : vector<2x8x1xf32> to vector<2x8x8xf32>
    %258 = arith.subf %254, %257 : vector<2x8x8xf32>
    %259 = math.exp %258 : vector<2x8x8xf32>
    %cst_121 = arith.constant dense<0.000000e+00> : vector<2x8xf32>
    %260 = vector.multi_reduction <add>, %259, %cst_121 [2] : vector<2x8x8xf32> to vector<2x8xf32>
    %261 = vector.shape_cast %260 : vector<2x8xf32> to vector<2x8x1xf32>
    %262 = vector.broadcast %261 : vector<2x8x1xf32> to vector<2x8x8xf32>
    %263 = arith.divf %259, %262 : vector<2x8x8xf32>
    %264 = vector.shape_cast %206 : vector<16x32xf32> to vector<2x8x32xf32>
    "tpu.trace_start"() <{level = 10 : i32, message = "blm,bmh->blh"}> : () -> ()
    %cst_122 = arith.constant dense<0.000000e+00> : vector<2x8x32xf32>
    %265 = tpu.matmul %263, %264, %cst_122 {dimension_numbers = #tpu.dot_dimension_numbers<[2], [1], [1], [2], [0, 0, 0, 1, 1, 2], [0], [0]>} : vector<2x8x8xf32>, vector<2x8x32xf32>, vector<2x8x32xf32> -> vector<2x8x32xf32>
    "tpu.trace_stop"() : () -> ()
    %266 = vector.shape_cast %242 : vector<16x32xf32> to vector<2x8x32xf32>
    "tpu.trace_start"() <{level = 10 : i32, message = "blm,bmh->blh"}> : () -> ()
    %cst_123 = arith.constant dense<0.000000e+00> : vector<2x8x32xf32>
    %267 = tpu.matmul %263, %266, %cst_123 {dimension_numbers = #tpu.dot_dimension_numbers<[2], [1], [1], [2], [0, 0, 0, 1, 1, 2], [0], [0]>} : vector<2x8x8xf32>, vector<2x8x32xf32>, vector<2x8x32xf32> -> vector<2x8x32xf32>
    "tpu.trace_stop"() : () -> ()
    %cst_124 = arith.constant 5.000000e-01 : f32
    %268 = vector.broadcast %cst_124 : f32 to vector<2x8x32xf32>
    %269 = arith.mulf %268, %265 : vector<2x8x32xf32>
    %cst_125 = arith.constant 4.471500e-02 : f32
    %270 = vector.broadcast %cst_125 : f32 to vector<2x8x32xf32>
    %271 = arith.mulf %270, %265 : vector<2x8x32xf32>
    %272 = arith.mulf %271, %265 : vector<2x8x32xf32>
    %273 = arith.mulf %272, %265 : vector<2x8x32xf32>
    %274 = arith.addf %265, %273 : vector<2x8x32xf32>
    %cst_126 = arith.constant 0.797884583 : f32
    %275 = vector.broadcast %cst_126 : f32 to vector<2x8x32xf32>
    %276 = arith.mulf %275, %274 : vector<2x8x32xf32>
    %277 = math.tanh %276 : vector<2x8x32xf32>
    %cst_127 = arith.constant 1.000000e+00 : f32
    %278 = vector.broadcast %cst_127 : f32 to vector<2x8x32xf32>
    %279 = arith.addf %278, %277 : vector<2x8x32xf32>
    %280 = arith.mulf %269, %279 : vector<2x8x32xf32>
    %281 = vector.shape_cast %280 : vector<2x8x32xf32> to vector<16x32xf32>
    %c0_128 = arith.constant 0 : index
    %c0_129 = arith.constant 0 : index
    %282 = vector.load %arg26[%c0_128, %c0_129] : memref<32x32xf32, #tpu.memory_space<vmem>>, vector<32x32xf32>
    %cst_130 = arith.constant dense<0.000000e+00> : vector<16x32xf32>
    %283 = tpu.matmul %281, %282, %cst_130 {dimension_numbers = #tpu.dot_dimension_numbers<[1], [0], [0], [1], [0, 0, 1, 1], [], []>} : vector<16x32xf32>, vector<32x32xf32>, vector<16x32xf32> -> vector<16x32xf32>
    %cst_131 = arith.constant 5.000000e-01 : f32
    %284 = vector.broadcast %cst_131 : f32 to vector<2x8x32xf32>
    %285 = arith.mulf %284, %267 : vector<2x8x32xf32>
    %cst_132 = arith.constant 4.471500e-02 : f32
    %286 = vector.broadcast %cst_132 : f32 to vector<2x8x32xf32>
    %287 = arith.mulf %286, %267 : vector<2x8x32xf32>
    %288 = arith.mulf %287, %267 : vector<2x8x32xf32>
    %289 = arith.mulf %288, %267 : vector<2x8x32xf32>
    %290 = arith.addf %267, %289 : vector<2x8x32xf32>
    %cst_133 = arith.constant 0.797884583 : f32
    %291 = vector.broadcast %cst_133 : f32 to vector<2x8x32xf32>
    %292 = arith.mulf %291, %290 : vector<2x8x32xf32>
    %293 = math.tanh %292 : vector<2x8x32xf32>
    %cst_134 = arith.constant 1.000000e+00 : f32
    %294 = vector.broadcast %cst_134 : f32 to vector<2x8x32xf32>
    %295 = arith.addf %294, %293 : vector<2x8x32xf32>
    %296 = arith.mulf %285, %295 : vector<2x8x32xf32>
    %297 = vector.shape_cast %296 : vector<2x8x32xf32> to vector<16x32xf32>
    %c0_135 = arith.constant 0 : index
    %c0_136 = arith.constant 0 : index
    %298 = vector.load %arg27[%c0_135, %c0_136] : memref<32x32xf32, #tpu.memory_space<vmem>>, vector<32x32xf32>
    %cst_137 = arith.constant dense<0.000000e+00> : vector<16x32xf32>
    %299 = tpu.matmul %297, %298, %cst_137 {dimension_numbers = #tpu.dot_dimension_numbers<[1], [0], [0], [1], [0, 0, 1, 1], [], []>} : vector<16x32xf32>, vector<32x32xf32>, vector<16x32xf32> -> vector<16x32xf32>
    %300 = arith.addf %283, %299 : vector<16x32xf32>
    %c0_138 = arith.constant 0 : index
    %c0_139 = arith.constant 0 : index
    %301 = vector.load %arg28[%c0_138, %c0_139] : memref<1x32xf32, #tpu.memory_space<vmem>>, vector<1x32xf32>
    %302 = vector.broadcast %301 : vector<1x32xf32> to vector<16x32xf32>
    %303 = arith.addf %300, %302 : vector<16x32xf32>
    %cst_140 = arith.constant 5.000000e-01 : f32
    %304 = vector.broadcast %cst_140 : f32 to vector<16x32xf32>
    %305 = arith.mulf %304, %303 : vector<16x32xf32>
    %cst_141 = arith.constant 4.471500e-02 : f32
    %306 = vector.broadcast %cst_141 : f32 to vector<16x32xf32>
    %307 = arith.mulf %306, %303 : vector<16x32xf32>
    %308 = arith.mulf %307, %303 : vector<16x32xf32>
    %309 = arith.mulf %308, %303 : vector<16x32xf32>
    %310 = arith.addf %303, %309 : vector<16x32xf32>
    %cst_142 = arith.constant 0.797884583 : f32
    %311 = vector.broadcast %cst_142 : f32 to vector<16x32xf32>
    %312 = arith.mulf %311, %310 : vector<16x32xf32>
    %313 = math.tanh %312 : vector<16x32xf32>
    %cst_143 = arith.constant 1.000000e+00 : f32
    %314 = vector.broadcast %cst_143 : f32 to vector<16x32xf32>
    %315 = arith.addf %314, %313 : vector<16x32xf32>
    %316 = arith.mulf %305, %315 : vector<16x32xf32>
    %c0_144 = arith.constant 0 : index
    %c0_145 = arith.constant 0 : index
    %317 = vector.load %arg29[%c0_144, %c0_145] : memref<32x32xf32, #tpu.memory_space<vmem>>, vector<32x32xf32>
    %cst_146 = arith.constant dense<0.000000e+00> : vector<16x32xf32>
    %318 = tpu.matmul %7, %317, %cst_146 {dimension_numbers = #tpu.dot_dimension_numbers<[1], [0], [0], [1], [0, 0, 1, 1], [], []>} : vector<16x32xf32>, vector<32x32xf32>, vector<16x32xf32> -> vector<16x32xf32>
    %c0_147 = arith.constant 0 : index
    %c0_148 = arith.constant 0 : index
    %319 = vector.load %arg30[%c0_147, %c0_148] : memref<1x32xf32, #tpu.memory_space<vmem>>, vector<1x32xf32>
    %320 = vector.broadcast %319 : vector<1x32xf32> to vector<16x32xf32>
    %321 = arith.addf %318, %320 : vector<16x32xf32>
    %cst_149 = arith.constant 0.000000e+00 : f32
    %322 = vector.broadcast %cst_149 : f32 to vector<16x32xf32>
    %323 = arith.maximumf %321, %322 : vector<16x32xf32>
    %324 = vector.shape_cast %323 : vector<16x32xf32> to vector<2x8x32xf32>
    "tpu.trace_start"() <{level = 10 : i32, message = "bld,bmd->blm"}> : () -> ()
    %cst_150 = arith.constant dense<0.000000e+00> : vector<2x8x8xf32>
    %325 = tpu.matmul %324, %324, %cst_150 {dimension_numbers = #tpu.dot_dimension_numbers<[2], [2], [1], [1], [0, 0, 0, 1, 1, 1], [0], [0]>} : vector<2x8x32xf32>, vector<2x8x32xf32>, vector<2x8x8xf32> -> vector<2x8x8xf32>
    "tpu.trace_stop"() : () -> ()
    %cst_151 = arith.constant dense<0xFF800000> : vector<2x8xf32>
    %326 = vector.multi_reduction <maximumf>, %325, %cst_151 [2] : vector<2x8x8xf32> to vector<2x8xf32>
    %327 = vector.shape_cast %326 : vector<2x8xf32> to vector<2x8x1xf32>
    %328 = vector.broadcast %327 : vector<2x8x1xf32> to vector<2x8x8xf32>
    %329 = arith.subf %325, %328 : vector<2x8x8xf32>
    %330 = math.exp %329 : vector<2x8x8xf32>
    %cst_152 = arith.constant dense<0.000000e+00> : vector<2x8xf32>
    %331 = vector.multi_reduction <add>, %330, %cst_152 [2] : vector<2x8x8xf32> to vector<2x8xf32>
    %332 = vector.shape_cast %331 : vector<2x8xf32> to vector<2x8x1xf32>
    %333 = vector.broadcast %332 : vector<2x8x1xf32> to vector<2x8x8xf32>
    %334 = arith.divf %330, %333 : vector<2x8x8xf32>
    %c0_153 = arith.constant 0 : index
    %c0_154 = arith.constant 0 : index
    %335 = vector.load %arg31[%c0_153, %c0_154] : memref<32x32xf32, #tpu.memory_space<vmem>>, vector<32x32xf32>
    %cst_155 = arith.constant dense<0.000000e+00> : vector<16x32xf32>
    %336 = tpu.matmul %9, %335, %cst_155 {dimension_numbers = #tpu.dot_dimension_numbers<[1], [0], [0], [1], [0, 0, 1, 1], [], []>} : vector<16x32xf32>, vector<32x32xf32>, vector<16x32xf32> -> vector<16x32xf32>
    %c0_156 = arith.constant 0 : index
    %c0_157 = arith.constant 0 : index
    %337 = vector.load %arg32[%c0_156, %c0_157] : memref<1x32xf32, #tpu.memory_space<vmem>>, vector<1x32xf32>
    %338 = vector.broadcast %337 : vector<1x32xf32> to vector<16x32xf32>
    %339 = arith.addf %336, %338 : vector<16x32xf32>
    %cst_158 = arith.constant 0.000000e+00 : f32
    %340 = vector.broadcast %cst_158 : f32 to vector<16x32xf32>
    %341 = arith.maximumf %339, %340 : vector<16x32xf32>
    %342 = vector.shape_cast %341 : vector<16x32xf32> to vector<2x8x32xf32>
    "tpu.trace_start"() <{level = 10 : i32, message = "bld,bmd->blm"}> : () -> ()
    %cst_159 = arith.constant dense<0.000000e+00> : vector<2x8x8xf32>
    %343 = tpu.matmul %342, %342, %cst_159 {dimension_numbers = #tpu.dot_dimension_numbers<[2], [2], [1], [1], [0, 0, 0, 1, 1, 1], [0], [0]>} : vector<2x8x32xf32>, vector<2x8x32xf32>, vector<2x8x8xf32> -> vector<2x8x8xf32>
    "tpu.trace_stop"() : () -> ()
    %cst_160 = arith.constant dense<0xFF800000> : vector<2x8xf32>
    %344 = vector.multi_reduction <maximumf>, %343, %cst_160 [2] : vector<2x8x8xf32> to vector<2x8xf32>
    %345 = vector.shape_cast %344 : vector<2x8xf32> to vector<2x8x1xf32>
    %346 = vector.broadcast %345 : vector<2x8x1xf32> to vector<2x8x8xf32>
    %347 = arith.subf %343, %346 : vector<2x8x8xf32>
    %348 = math.exp %347 : vector<2x8x8xf32>
    %cst_161 = arith.constant dense<0.000000e+00> : vector<2x8xf32>
    %349 = vector.multi_reduction <add>, %348, %cst_161 [2] : vector<2x8x8xf32> to vector<2x8xf32>
    %350 = vector.shape_cast %349 : vector<2x8xf32> to vector<2x8x1xf32>
    %351 = vector.broadcast %350 : vector<2x8x1xf32> to vector<2x8x8xf32>
    %352 = arith.divf %348, %351 : vector<2x8x8xf32>
    %c0_162 = arith.constant 0 : index
    %c0_163 = arith.constant 0 : index
    %353 = vector.load %arg33[%c0_162, %c0_163] : memref<1x32xf32, #tpu.memory_space<vmem>>, vector<1x32xf32>
    %c0_164 = arith.constant 0 : index
    %c0_165 = arith.constant 0 : index
    %354 = vector.load %arg34[%c0_164, %c0_165] : memref<1x32xf32, #tpu.memory_space<vmem>>, vector<1x32xf32>
    %cst_166 = arith.constant dense<0.000000e+00> : vector<16xf32>
    %355 = vector.multi_reduction <add>, %316, %cst_166 [1] : vector<16x32xf32> to vector<16xf32>
    %356 = vector.shape_cast %355 : vector<16xf32> to vector<16x1xf32>
    %cst_167 = arith.constant 3.200000e+01 : f32
    %357 = vector.broadcast %cst_167 : f32 to vector<16x1xf32>
    %358 = arith.divf %356, %357 : vector<16x1xf32>
    %359 = vector.broadcast %358 : vector<16x1xf32> to vector<16x32xf32>
    %360 = arith.subf %316, %359 : vector<16x32xf32>
    %361 = vector.broadcast %358 : vector<16x1xf32> to vector<16x32xf32>
    %362 = arith.subf %316, %361 : vector<16x32xf32>
    %363 = arith.mulf %360, %362 : vector<16x32xf32>
    %cst_168 = arith.constant dense<0.000000e+00> : vector<16xf32>
    %364 = vector.multi_reduction <add>, %363, %cst_168 [1] : vector<16x32xf32> to vector<16xf32>
    %365 = vector.shape_cast %364 : vector<16xf32> to vector<16x1xf32>
    %cst_169 = arith.constant 3.200000e+01 : f32
    %366 = vector.broadcast %cst_169 : f32 to vector<16x1xf32>
    %367 = arith.divf %365, %366 : vector<16x1xf32>
    %368 = vector.broadcast %358 : vector<16x1xf32> to vector<16x32xf32>
    %369 = arith.subf %316, %368 : vector<16x32xf32>
    %cst_170 = arith.constant 9.99999974E-6 : f32
    %370 = vector.broadcast %cst_170 : f32 to vector<16x1xf32>
    %371 = arith.addf %367, %370 : vector<16x1xf32>
    %372 = math.sqrt %371 : vector<16x1xf32>
    %373 = vector.broadcast %372 : vector<16x1xf32> to vector<16x32xf32>
    %374 = arith.divf %369, %373 : vector<16x32xf32>
    %375 = vector.broadcast %353 : vector<1x32xf32> to vector<16x32xf32>
    %376 = arith.mulf %374, %375 : vector<16x32xf32>
    %377 = vector.broadcast %354 : vector<1x32xf32> to vector<16x32xf32>
    %378 = arith.addf %376, %377 : vector<16x32xf32>
    %379 = arith.addf %5, %378 : vector<16x32xf32>
    %cst_171 = arith.constant 0.000000e+00 : f32
    %380 = vector.broadcast %cst_171 : f32 to vector<16x80xf32>
    %381 = vector.shape_cast %334 : vector<2x8x8xf32> to vector<16x8xf32>
    %382 = vector.shape_cast %352 : vector<2x8x8xf32> to vector<16x8xf32>
    %383 = tpu.concatenate %379, %381, %382, %380 in 1 : vector<16x32xf32>, vector<16x8xf32>, vector<16x8xf32>, vector<16x80xf32> -> vector<16x128xf32>
    %c0_172 = arith.constant 0 : index
    %c0_173 = arith.constant 0 : index
    %384 = vector.load %arg35[%c0_172, %c0_173] : memref<16x128xf32, #tpu.memory_space<vmem>>, vector<16x128xf32>
    tpu.vector_store %arg35[%c0_172, %c0_173], %383 {strides = array<i32>} : memref<16x128xf32, #tpu.memory_space<vmem>>, vector<16x128xf32>,
    return
  }
}

</mosaic_0001>

<llo_original>
// kernel: tpu_custom_call.1
$region0: #{tpu_custom_call.1}
  #allocation0 [shape = 'u32[]', space=smem, size = 0x4, offset = 0x4, fixed_abs, tag = 'smem constant byte address 0x4 - core index']
  #allocation1 [shape = 'u32[144,128]{1,0:T(1,128)}', space=vmem, size = 0x12000, scoped, tag = 'internal scratch']
  %s0 = inlined_call_operand.smem [shape: u32[36], index: -1, kind: input, shape index: {}]
  %s1 = sld [smem:[%s0]]
  %s2 = scalar_lea.smem %s0, 1
  %s3 = sld [smem:[%s2]]
  %s4 = scalar_lea.smem %s0, 2
  %s5 = sld [smem:[%s4]]
  %s6 = scalar_lea.smem %s0, 3
  %s7 = sld [smem:[%s6]]
  %s8 = scalar_lea.smem %s0, 4
  %s9 = sld [smem:[%s8]]
  %s10 = scalar_lea.smem %s0, 5
  %s11 = sld [smem:[%s10]]
  %s12 = scalar_lea.smem %s0, 6
  %s13 = sld [smem:[%s12]]
  %s14 = scalar_lea.smem %s0, 7
  %s15 = sld [smem:[%s14]]
  %s16 = scalar_lea.smem %s0, 8
  %s17 = sld [smem:[%s16]]
  %s18 = scalar_lea.smem %s0, 9
  %s19 = sld [smem:[%s18]]
  %s20 = scalar_lea.smem %s0, 10
  %s21 = sld [smem:[%s20]]
  %s22 = scalar_lea.smem %s0, 11
  %s23 = sld [smem:[%s22]]
  %s24 = scalar_lea.smem %s0, 12
  %s25 = sld [smem:[%s24]]
  %s26 = scalar_lea.smem %s0, 13
  %s27 = sld [smem:[%s26]]
  %s28 = scalar_lea.smem %s0, 14
  %s29 = sld [smem:[%s28]]
  %s30 = scalar_lea.smem %s0, 15
  %s31 = sld [smem:[%s30]]
  %s32 = scalar_lea.smem %s0, 16
  %s33 = sld [smem:[%s32]]
  %s34 = scalar_lea.smem %s0, 17
  %s35 = sld [smem:[%s34]]
  %s36 = scalar_lea.smem %s0, 18
  %s37 = sld [smem:[%s36]]
  %s38 = scalar_lea.smem %s0, 19
  %s39 = sld [smem:[%s38]]
  %s40 = scalar_lea.smem %s0, 20
  %s41 = sld [smem:[%s40]]
  %s42 = scalar_lea.smem %s0, 21
  %s43 = sld [smem:[%s42]]
  %s44 = scalar_lea.smem %s0, 22
  %s45 = sld [smem:[%s44]]
  %s46 = scalar_lea.smem %s0, 23
  %s47 = sld [smem:[%s46]]
  %s48 = scalar_lea.smem %s0, 24
  %s49 = sld [smem:[%s48]]
  %s50 = scalar_lea.smem %s0, 25
  %s51 = sld [smem:[%s50]]
  %s52 = scalar_lea.smem %s0, 26
  %s53 = sld [smem:[%s52]]
  %s54 = scalar_lea.smem %s0, 27
  %s55 = sld [smem:[%s54]]
  %s56 = scalar_lea.smem %s0, 28
  %s57 = sld [smem:[%s56]]
  %s58 = scalar_lea.smem %s0, 29
  %s59 = sld [smem:[%s58]]
  %s60 = scalar_lea.smem %s0, 30
  %s61 = sld [smem:[%s60]]
  %s62 = scalar_lea.smem %s0, 31
  %s63 = sld [smem:[%s62]]
  %s64 = scalar_lea.smem %s0, 32
  %s65 = sld [smem:[%s64]]
  %s66 = scalar_lea.smem %s0, 33
  %s67 = sld [smem:[%s66]]
  %s68 = scalar_lea.smem %s0, 34
  %s69 = sld [smem:[%s68]]
  %s70 = scalar_lea.smem %s0, 35
  %s71 = sld [smem:[%s70]]
  %s72 = sld [smem:[#allocation0]]
  $region214: #{tpu_custom_call.1} parent=0
    _
  %s74 = ssub.s32 1, %s72
  %s75 = scalar_select 0, %s74, %s72
  $region1: #{tpu_custom_call.1} parent=0
    #allocation2 [shape = 'u8[8192]{0}', space=vmem, size = 0x2000, scoped, tag = 'input window, operand 0, single buffered']
    #allocation3 [shape = 's32[1]{0}', space=sflag, size = 0x4, scoped, tag = 'scoped memory for tpu_custom_call.1']
    #allocation4 [shape = 's32[1]{0}', space=sflag, size = 0x4, scoped, tag = 'scoped memory for tpu_custom_call.1']
    #allocation5 [shape = 'u8[8192]{0}', space=vmem, size = 0x2000, scoped, tag = 'input window, operand 1, single buffered']
    #allocation6 [shape = 's32[1]{0}', space=sflag, size = 0x4, scoped, tag = 'scoped memory for tpu_custom_call.1']
    #allocation7 [shape = 'u8[8192]{0}', space=vmem, size = 0x2000, scoped, tag = 'input window, operand 2, single buffered']
    #allocation8 [shape = 'u8[2048]{0}', space=vmem, size = 0x800, scoped, tag = 'input window, operand 3, single buffered']
    #allocation9 [shape = 's32[1]{0}', space=sflag, size = 0x4, scoped, tag = 'scoped memory for tpu_custom_call.1']
    #allocation10 [shape = 'u8[512]{0}', space=vmem, size = 0x400, scoped, tag = 'input window, operand 12, single buffered']
    #allocation11 [shape = 'u8[512]{0}', space=vmem, size = 0x400, scoped, tag = 'input window, operand 17, single buffered']
    #allocation12 [shape = 's32[1]{0}', space=sflag, size = 0x4, scoped, tag = 'scoped memory for tpu_custom_call.1']
    #allocation13 [shape = 'u8[16384]{0}', space=vmem, size = 0x4000, scoped, tag = 'input window, operand 18, single buffered']
    #allocation14 [shape = 'u8[16384]{0}', space=vmem, size = 0x4000, scoped, tag = 'input window, operand 19, single buffered']
    #allocation15 [shape = 's32[1]{0}', space=sflag, size = 0x4, scoped, tag = 'scoped memory for tpu_custom_call.1']
    #allocation16 [shape = 'u8[16384]{0}', space=vmem, size = 0x4000, scoped, tag = 'input window, operand 21, single buffered']
    #allocation17 [shape = 'u8[16384]{0}', space=vmem, size = 0x4000, scoped, tag = 'input window, operand 22, single buffered']
    #allocation18 [shape = 's32[1]{0}', space=sflag, size = 0x4, scoped, tag = 'scoped memory for tpu_custom_call.1']
    #allocation19 [shape = 'u8[16384]{0}', space=vmem, size = 0x4000, scoped, tag = 'input window, operand 23, single buffered']
    #allocation20 [shape = 'u8[16384]{0}', space=vmem, size = 0x4000, scoped, tag = 'input window, operand 24, single buffered']
    #allocation21 [shape = 's32[1]{0}', space=sflag, size = 0x4, scoped, tag = 'scoped memory for tpu_custom_call.1']
    #allocation22 [shape = 'u8[16384]{0}', space=vmem, size = 0x4000, scoped, tag = 'input window, operand 26, single buffered']
    #allocation23 [shape = 'u8[16384]{0}', space=vmem, size = 0x4000, scoped, tag = 'input window, operand 27, single buffered']
    #allocation24 [shape = 's32[1]{0}', space=sflag, size = 0x4, scoped, tag = 'scoped memory for tpu_custom_call.1']
    #allocation25 [shape = 'u8[16384]{0}', space=vmem, size = 0x4000, scoped, tag = 'input window, operand 29, single buffered']
    #allocation26 [shape = 'u8[16384]{0}', space=vmem, size = 0x4000, scoped, tag = 'input window, operand 31, single buffered']
    #allocation27 [shape = 's32[1]{0}', space=sflag, size = 0x4, scoped, tag = 'scoped memory for tpu_custom_call.1']
    #allocation28 [shape = 'u8[8192]{0}', space=vmem, size = 0x2000, scoped, tag = 'output window, operand 0, single buffered']
    %76 = vsyncpa [#allocation3], 0
    %77 = vsyncpa [#allocation6], 0
    %78 = vsyncpa [#allocation9], 0
    %79 = vsyncpa [#allocation12], 0
    %80 = vsyncpa [#allocation15], 0
    %81 = vsyncpa [#allocation18], 0
    %82 = vsyncpa [#allocation21], 0
    %83 = vsyncpa [#allocation24], 0
    %84 = vsyncpa [#allocation27], 0
    %85 = vsyncpa [#allocation4], 0
    // Predicated region
    $region2: #{tpu_custom_call.1} parent=1 // pred_check
      _
    $region3: #{tpu_custom_call.1} parent=1 // pred_check_branch
      %87 = sbr.rel (0) target = $region5
    $region4: #{tpu_custom_call.1} parent=1 // pred_region
      %s89 = ssub.s32 256, 256
      %90 = vsyncadd [#allocation3], %s89
      %s91 = sshll.u32 [#allocation2], 4
      %s92 = int_to_ptr.vmem [resolvable:$true] %s91
      %97 = dma.hbm_to_vmem [thread:$0]  %s1, 256, %s92, [#allocation3], 128, 128, 8
    $region5: #{tpu_custom_call.1} parent=1 // pred_fallthru
      _
    // Predicated region
    $region6: #{tpu_custom_call.1} parent=1 // pred_check
      _
    $region7: #{tpu_custom_call.1} parent=1 // pred_check_branch
      %99 = sbr.rel (0) target = $region9
    $region8: #{tpu_custom_call.1} parent=1 // pred_region
      %s101 = ssub.s32 256, 256
      %102 = vsyncadd [#allocation6], %s101
      %s103 = sshll.u32 [#allocation5], 4
      %s104 = int_to_ptr.vmem [resolvable:$true] %s103
      %109 = dma.hbm_to_vmem [thread:$0]  %s3, 256, %s104, [#allocation6], 128, 128, 8
    $region9: #{tpu_custom_call.1} parent=1 // pred_fallthru
      _
    // Predicated region
    $region10: #{tpu_custom_call.1} parent=1 // pred_check
      _
    $region11: #{tpu_custom_call.1} parent=1 // pred_check_branch
      %111 = sbr.rel (0) target = $region13
    $region12: #{tpu_custom_call.1} parent=1 // pred_region
      %s113 = ssub.s32 256, 256
      %114 = vsyncadd [#allocation6], %s113
      %s115 = sshll.u32 [#allocation7], 4
      %s116 = int_to_ptr.vmem [resolvable:$true] %s115
      %121 = dma.hbm_to_vmem [thread:$0]  %s5, 256, %s116, [#allocation6], 128, 128, 8
    $region13: #{tpu_custom_call.1} parent=1 // pred_fallthru
      _
    // Predicated region
    $region14: #{tpu_custom_call.1} parent=1 // pred_check
      _
    $region15: #{tpu_custom_call.1} parent=1 // pred_check_branch
      %123 = sbr.rel (0) target = $region17
    $region16: #{tpu_custom_call.1} parent=1 // pred_region
      %s125 = ssub.s32 64, 64
      %126 = vsyncadd [#allocation9], %s125
      %s128 = sshll.u32 [#allocation8], 4
      %s129 = int_to_ptr.vmem [resolvable:$true] %s128
      %131 = dma.hbm_to_vmem [thread:$0]  %s7, 64, %s129, [#allocation9]
    $region17: #{tpu_custom_call.1} parent=1 // pred_fallthru
      _
    // Predicated region
    $region18: #{tpu_custom_call.1} parent=1 // pred_check
      _
    $region19: #{tpu_custom_call.1} parent=1 // pred_check_branch
      %133 = sbr.rel (0) target = $region21
    $region20: #{tpu_custom_call.1} parent=1 // pred_region
      _
    $region21: #{tpu_custom_call.1} parent=1 // pred_fallthru
      _
    // Predicated region
    $region22: #{tpu_custom_call.1} parent=1 // pred_check
      _
    $region23: #{tpu_custom_call.1} parent=1 // pred_check_branch
      %135 = sbr.rel (0) target = $region25
    $region24: #{tpu_custom_call.1} parent=1 // pred_region
      _
    $region25: #{tpu_custom_call.1} parent=1 // pred_fallthru
      _
    // Predicated region
    $region26: #{tpu_custom_call.1} parent=1 // pred_check
      _
    $region27: #{tpu_custom_call.1} parent=1 // pred_check_branch
      %137 = sbr.rel (0) target = $region29
    $region28: #{tpu_custom_call.1} parent=1 // pred_region
      _
    $region29: #{tpu_custom_call.1} parent=1 // pred_fallthru
      _
    // Predicated region
    $region30: #{tpu_custom_call.1} parent=1 // pred_check
      _
    $region31: #{tpu_custom_call.1} parent=1 // pred_check_branch
      %139 = sbr.rel (0) target = $region33
    $region32: #{tpu_custom_call.1} parent=1 // pred_region
      _
    $region33: #{tpu_custom_call.1} parent=1 // pred_fallthru
      _
    // Predicated region
    $region34: #{tpu_custom_call.1} parent=1 // pred_check
      _
    $region35: #{tpu_custom_call.1} parent=1 // pred_check_branch
      %141 = sbr.rel (0) target = $region37
    $region36: #{tpu_custom_call.1} parent=1 // pred_region
      _
    $region37: #{tpu_custom_call.1} parent=1 // pred_fallthru
      _
    // Predicated region
    $region38: #{tpu_custom_call.1} parent=1 // pred_check
      _
    $region39: #{tpu_custom_call.1} parent=1 // pred_check_branch
      %143 = sbr.rel (0) target = $region41
    $region40: #{tpu_custom_call.1} parent=1 // pred_region
      _
    $region41: #{tpu_custom_call.1} parent=1 // pred_fallthru
      _
    // Predicated region
    $region42: #{tpu_custom_call.1} parent=1 // pred_check
      _
    $region43: #{tpu_custom_call.1} parent=1 // pred_check_branch
      %145 = sbr.rel (0) target = $region45
    $region44: #{tpu_custom_call.1} parent=1 // pred_region
      _
    $region45: #{tpu_custom_call.1} parent=1 // pred_fallthru
      _
    // Predicated region
    $region46: #{tpu_custom_call.1} parent=1 // pred_check
      _
    $region47: #{tpu_custom_call.1} parent=1 // pred_check_branch
      %147 = sbr.rel (0) target = $region49
    $region48: #{tpu_custom_call.1} parent=1 // pred_region
      _
    $region49: #{tpu_custom_call.1} parent=1 // pred_fallthru
      _
    // Predicated region
    $region50: #{tpu_custom_call.1} parent=1 // pred_check
      _
    $region51: #{tpu_custom_call.1} parent=1 // pred_check_branch
      %149 = sbr.rel (0) target = $region53
    $region52: #{tpu_custom_call.1} parent=1 // pred_region
      %s151 = ssub.s32 16, 16
      %152 = vsyncadd [#allocation9], %s151
      %s154 = sshll.u32 [#allocation10], 4
      %s155 = int_to_ptr.vmem [resolvable:$true] %s154
      %157 = dma.hbm_to_vmem [thread:$0]  %s25, 16, %s155, [#allocation9]
    $region53: #{tpu_custom_call.1} parent=1 // pred_fallthru
      _
    // Predicated region
    $region54: #{tpu_custom_call.1} parent=1 // pred_check
      _
    $region55: #{tpu_custom_call.1} parent=1 // pred_check_branch
      %159 = sbr.rel (0) target = $region57
    $region56: #{tpu_custom_call.1} parent=1 // pred_region
      _
    $region57: #{tpu_custom_call.1} parent=1 // pred_fallthru
      _
    // Predicated region
    $region58: #{tpu_custom_call.1} parent=1 // pred_check
      _
    $region59: #{tpu_custom_call.1} parent=1 // pred_check_branch
      %161 = sbr.rel (0) target = $region61
    $region60: #{tpu_custom_call.1} parent=1 // pred_region
      _
    $region61: #{tpu_custom_call.1} parent=1 // pred_fallthru
      _
    // Predicated region
    $region62: #{tpu_custom_call.1} parent=1 // pred_check
      _
    $region63: #{tpu_custom_call.1} parent=1 // pred_check_branch
      %163 = sbr.rel (0) target = $region65
    $region64: #{tpu_custom_call.1} parent=1 // pred_region
      _
    $region65: #{tpu_custom_call.1} parent=1 // pred_fallthru
      _
    // Predicated region
    $region66: #{tpu_custom_call.1} parent=1 // pred_check
      _
    $region67: #{tpu_custom_call.1} parent=1 // pred_check_branch
      %165 = sbr.rel (0) target = $region69
    $region68: #{tpu_custom_call.1} parent=1 // pred_region
      _
    $region69: #{tpu_custom_call.1} parent=1 // pred_fallthru
      _
    // Predicated region
    $region70: #{tpu_custom_call.1} parent=1 // pred_check
      _
    $region71: #{tpu_custom_call.1} parent=1 // pred_check_branch
      %167 = sbr.rel (0) target = $region73
    $region72: #{tpu_custom_call.1} parent=1 // pred_region
      %s169 = ssub.s32 16, 16
      %170 = vsyncadd [#allocation12], %s169
      %s172 = sshll.u32 [#allocation11], 4
      %s173 = int_to_ptr.vmem [resolvable:$true] %s172
      %175 = dma.hbm_to_vmem [thread:$0]  %s35, 16, %s173, [#allocation12]
    $region73: #{tpu_custom_call.1} parent=1 // pred_fallthru
      _
    // Predicated region
    $region74: #{tpu_custom_call.1} parent=1 // pred_check
      _
    $region75: #{tpu_custom_call.1} parent=1 // pred_check_branch
      %177 = sbr.rel (0) target = $region77
    $region76: #{tpu_custom_call.1} parent=1 // pred_region
      %s179 = ssub.s32 512, 512
      %180 = vsyncadd [#allocation12], %s179
      %s181 = sshll.u32 [#allocation13], 4
      %s182 = int_to_ptr.vmem [resolvable:$true] %s181
      %187 = dma.hbm_to_vmem [thread:$0]  %s37, 512, %s182, [#allocation12], 128, 128, 8
    $region77: #{tpu_custom_call.1} parent=1 // pred_fallthru
      _
    // Predicated region
    $region78: #{tpu_custom_call.1} parent=1 // pred_check
      _
    $region79: #{tpu_custom_call.1} parent=1 // pred_check_branch
      %189 = sbr.rel (0) target = $region81
    $region80: #{tpu_custom_call.1} parent=1 // pred_region
      %s191 = ssub.s32 512, 512
      %192 = vsyncadd [#allocation15], %s191
      %s193 = sshll.u32 [#allocation14], 4
      %s194 = int_to_ptr.vmem [resolvable:$true] %s193
      %199 = dma.hbm_to_vmem [thread:$0]  %s39, 512, %s194, [#allocation15], 128, 128, 8
    $region81: #{tpu_custom_call.1} parent=1 // pred_fallthru
      _
    // Predicated region
    $region82: #{tpu_custom_call.1} parent=1 // pred_check
      _
    $region83: #{tpu_custom_call.1} parent=1 // pred_check_branch
      %201 = sbr.rel (0) target = $region85
    $region84: #{tpu_custom_call.1} parent=1 // pred_region
      _
    $region85: #{tpu_custom_call.1} parent=1 // pred_fallthru
      _
    // Predicated region
    $region86: #{tpu_custom_call.1} parent=1 // pred_check
      _
    $region87: #{tpu_custom_call.1} parent=1 // pred_check_branch
      %203 = sbr.rel (0) target = $region89
    $region88: #{tpu_custom_call.1} parent=1 // pred_region
      %s205 = ssub.s32 512, 512
      %206 = vsyncadd [#allocation15], %s205
      %s207 = sshll.u32 [#allocation16], 4
      %s208 = int_to_ptr.vmem [resolvable:$true] %s207
      %213 = dma.hbm_to_vmem [thread:$0]  %s43, 512, %s208, [#allocation15], 128, 128, 8
    $region89: #{tpu_custom_call.1} parent=1 // pred_fallthru
      _
    // Predicated region
    $region90: #{tpu_custom_call.1} parent=1 // pred_check
      _
    $region91: #{tpu_custom_call.1} parent=1 // pred_check_branch
      %215 = sbr.rel (0) target = $region93
    $region92: #{tpu_custom_call.1} parent=1 // pred_region
      %s217 = ssub.s32 512, 512
      %218 = vsyncadd [#allocation18], %s217
      %s219 = sshll.u32 [#allocation17], 4
      %s220 = int_to_ptr.vmem [resolvable:$true] %s219
      %225 = dma.hbm_to_vmem [thread:$0]  %s45, 512, %s220, [#allocation18], 128, 128, 8
    $region93: #{tpu_custom_call.1} parent=1 // pred_fallthru
      _
    // Predicated region
    $region94: #{tpu_custom_call.1} parent=1 // pred_check
      _
    $region95: #{tpu_custom_call.1} parent=1 // pred_check_branch
      %227 = sbr.rel (0) target = $region97
    $region96: #{tpu_custom_call.1} parent=1 // pred_region
      %s229 = ssub.s32 512, 512
      %230 = vsyncadd [#allocation18], %s229
      %s231 = sshll.u32 [#allocation19], 4
      %s232 = int_to_ptr.vmem [resolvable:$true] %s231
      %237 = dma.hbm_to_vmem [thread:$0]  %s47, 512, %s232, [#allocation18], 128, 128, 8
    $region97: #{tpu_custom_call.1} parent=1 // pred_fallthru
      _
    // Predicated region
    $region98: #{tpu_custom_call.1} parent=1 // pred_check
      _
    $region99: #{tpu_custom_call.1} parent=1 // pred_check_branch
      %239 = sbr.rel (0) target = $region101
    $region100: #{tpu_custom_call.1} parent=1 // pred_region
      %s241 = ssub.s32 512, 512
      %242 = vsyncadd [#allocation21], %s241
      %s243 = sshll.u32 [#allocation20], 4
      %s244 = int_to_ptr.vmem [resolvable:$true] %s243
      %249 = dma.hbm_to_vmem [thread:$0]  %s49, 512, %s244, [#allocation21], 128, 128, 8
    $region101: #{tpu_custom_call.1} parent=1 // pred_fallthru
      _
    // Predicated region
    $region102: #{tpu_custom_call.1} parent=1 // pred_check
      _
    $region103: #{tpu_custom_call.1} parent=1 // pred_check_branch
      %251 = sbr.rel (0) target = $region105
    $region104: #{tpu_custom_call.1} parent=1 // pred_region
      _
    $region105: #{tpu_custom_call.1} parent=1 // pred_fallthru
      _
    // Predicated region
    $region106: #{tpu_custom_call.1} parent=1 // pred_check
      _
    $region107: #{tpu_custom_call.1} parent=1 // pred_check_branch
      %253 = sbr.rel (0) target = $region109
    $region108: #{tpu_custom_call.1} parent=1 // pred_region
      %s255 = ssub.s32 512, 512
      %256 = vsyncadd [#allocation21], %s255
      %s257 = sshll.u32 [#allocation22], 4
      %s258 = int_to_ptr.vmem [resolvable:$true] %s257
      %263 = dma.hbm_to_vmem [thread:$0]  %s53, 512, %s258, [#allocation21], 128, 128, 8
    $region109: #{tpu_custom_call.1} parent=1 // pred_fallthru
      _
    // Predicated region
    $region110: #{tpu_custom_call.1} parent=1 // pred_check
      _
    $region111: #{tpu_custom_call.1} parent=1 // pred_check_branch
      %265 = sbr.rel (0) target = $region113
    $region112: #{tpu_custom_call.1} parent=1 // pred_region
      %s267 = ssub.s32 512, 512
      %268 = vsyncadd [#allocation24], %s267
      %s269 = sshll.u32 [#allocation23], 4
      %s270 = int_to_ptr.vmem [resolvable:$true] %s269
      %275 = dma.hbm_to_vmem [thread:$0]  %s55, 512, %s270, [#allocation24], 128, 128, 8
    $region113: #{tpu_custom_call.1} parent=1 // pred_fallthru
      _
    // Predicated region
    $region114: #{tpu_custom_call.1} parent=1 // pred_check
      _
    $region115: #{tpu_custom_call.1} parent=1 // pred_check_branch
      %277 = sbr.rel (0) target = $region117
    $region116: #{tpu_custom_call.1} parent=1 // pred_region
      _
    $region117: #{tpu_custom_call.1} parent=1 // pred_fallthru
      _
    // Predicated region
    $region118: #{tpu_custom_call.1} parent=1 // pred_check
      _
    $region119: #{tpu_custom_call.1} parent=1 // pred_check_branch
      %279 = sbr.rel (0) target = $region121
    $region120: #{tpu_custom_call.1} parent=1 // pred_region
      %s281 = ssub.s32 512, 512
      %282 = vsyncadd [#allocation24], %s281
      %s283 = sshll.u32 [#allocation25], 4
      %s284 = int_to_ptr.vmem [resolvable:$true] %s283
      %289 = dma.hbm_to_vmem [thread:$0]  %s59, 512, %s284, [#allocation24], 128, 128, 8
    $region121: #{tpu_custom_call.1} parent=1 // pred_fallthru
      _
    // Predicated region
    $region122: #{tpu_custom_call.1} parent=1 // pred_check
      _
    $region123: #{tpu_custom_call.1} parent=1 // pred_check_branch
      %291 = sbr.rel (0) target = $region125
    $region124: #{tpu_custom_call.1} parent=1 // pred_region
      _
    $region125: #{tpu_custom_call.1} parent=1 // pred_fallthru
      _
    // Predicated region
    $region126: #{tpu_custom_call.1} parent=1 // pred_check
      _
    $region127: #{tpu_custom_call.1} parent=1 // pred_check_branch
      %293 = sbr.rel (0) target = $region129
    $region128: #{tpu_custom_call.1} parent=1 // pred_region
      %s295 = ssub.s32 512, 512
      %296 = vsyncadd [#allocation27], %s295
      %s297 = sshll.u32 [#allocation26], 4
      %s298 = int_to_ptr.vmem [resolvable:$true] %s297
      %303 = dma.hbm_to_vmem [thread:$0]  %s63, 512, %s298, [#allocation27], 128, 128, 8
    $region129: #{tpu_custom_call.1} parent=1 // pred_fallthru
      _
    // Predicated region
    $region130: #{tpu_custom_call.1} parent=1 // pred_check
      _
    $region131: #{tpu_custom_call.1} parent=1 // pred_check_branch
      %305 = sbr.rel (0) target = $region133
    $region132: #{tpu_custom_call.1} parent=1 // pred_region
      _
    $region133: #{tpu_custom_call.1} parent=1 // pred_fallthru
      _
    // Predicated region
    $region134: #{tpu_custom_call.1} parent=1 // pred_check
      _
    $region135: #{tpu_custom_call.1} parent=1 // pred_check_branch
      %307 = sbr.rel (0) target = $region137
    $region136: #{tpu_custom_call.1} parent=1 // pred_region
      _
    $region137: #{tpu_custom_call.1} parent=1 // pred_fallthru
      _
    // Predicated region
    $region138: #{tpu_custom_call.1} parent=1 // pred_check
      _
    $region139: #{tpu_custom_call.1} parent=1 // pred_check_branch
      %309 = sbr.rel (0) target = $region141
    $region140: #{tpu_custom_call.1} parent=1 // pred_region
      _
    $region141: #{tpu_custom_call.1} parent=1 // pred_fallthru
      _
    // Predicated region
    $region142: #{tpu_custom_call.1} parent=1 // pred_check
      _
    $region143: #{tpu_custom_call.1} parent=1 // pred_check_branch
      %311 = sbr.rel (0) target = $region145
    $region144: #{tpu_custom_call.1} parent=1 // pred_region
      %312 = dma.done [#allocation3], 256
    $region145: #{tpu_custom_call.1} parent=1 // pred_fallthru
      _
    // Predicated region
    $region146: #{tpu_custom_call.1} parent=1 // pred_check
      _
    $region147: #{tpu_custom_call.1} parent=1 // pred_check_branch
      %314 = sbr.rel (0) target = $region149
    $region148: #{tpu_custom_call.1} parent=1 // pred_region
      %315 = dma.done [#allocation6], 256
    $region149: #{tpu_custom_call.1} parent=1 // pred_fallthru
      _
    // Predicated region
    $region150: #{tpu_custom_call.1} parent=1 // pred_check
      _
    $region151: #{tpu_custom_call.1} parent=1 // pred_check_branch
      %317 = sbr.rel (0) target = $region153
    $region152: #{tpu_custom_call.1} parent=1 // pred_region
      %318 = dma.done [#allocation6], 256
    $region153: #{tpu_custom_call.1} parent=1 // pred_fallthru
      _
    // Predicated region
    $region154: #{tpu_custom_call.1} parent=1 // pred_check
      _
    $region155: #{tpu_custom_call.1} parent=1 // pred_check_branch
      %320 = sbr.rel (0) target = $region157
    $region156: #{tpu_custom_call.1} parent=1 // pred_region
      %321 = dma.done [#allocation9], 64
    $region157: #{tpu_custom_call.1} parent=1 // pred_fallthru
      _
    // Predicated region
    $region158: #{tpu_custom_call.1} parent=1 // pred_check
      _
    $region159: #{tpu_custom_call.1} parent=1 // pred_check_branch
      %323 = sbr.rel (0) target = $region161
    $region160: #{tpu_custom_call.1} parent=1 // pred_region
      %324 = dma.done [#allocation9], 16
    $region161: #{tpu_custom_call.1} parent=1 // pred_fallthru
      _
    // Predicated region
    $region162: #{tpu_custom_call.1} parent=1 // pred_check
      _
    $region163: #{tpu_custom_call.1} parent=1 // pred_check_branch
      %326 = sbr.rel (0) target = $region165
    $region164: #{tpu_custom_call.1} parent=1 // pred_region
      %327 = dma.done [#allocation12], 16
    $region165: #{tpu_custom_call.1} parent=1 // pred_fallthru
      _
    // Predicated region
    $region166: #{tpu_custom_call.1} parent=1 // pred_check
      _
    $region167: #{tpu_custom_call.1} parent=1 // pred_check_branch
      %329 = sbr.rel (0) target = $region169
    $region168: #{tpu_custom_call.1} parent=1 // pred_region
      %330 = dma.done [#allocation12], 512
    $region169: #{tpu_custom_call.1} parent=1 // pred_fallthru
      _
    // Predicated region
    $region170: #{tpu_custom_call.1} parent=1 // pred_check
      _
    $region171: #{tpu_custom_call.1} parent=1 // pred_check_branch
      %332 = sbr.rel (0) target = $region173
    $region172: #{tpu_custom_call.1} parent=1 // pred_region
      %333 = dma.done [#allocation15], 512
    $region173: #{tpu_custom_call.1} parent=1 // pred_fallthru
      _
    // Predicated region
    $region174: #{tpu_custom_call.1} parent=1 // pred_check
      _
    $region175: #{tpu_custom_call.1} parent=1 // pred_check_branch
      %335 = sbr.rel (0) target = $region177
    $region176: #{tpu_custom_call.1} parent=1 // pred_region
      %336 = dma.done [#allocation15], 512
    $region177: #{tpu_custom_call.1} parent=1 // pred_fallthru
      _
    // Predicated region
    $region178: #{tpu_custom_call.1} parent=1 // pred_check
      _
    $region179: #{tpu_custom_call.1} parent=1 // pred_check_branch
      %338 = sbr.rel (0) target = $region181
    $region180: #{tpu_custom_call.1} parent=1 // pred_region
      %339 = dma.done [#allocation18], 512
    $region181: #{tpu_custom_call.1} parent=1 // pred_fallthru
      _
    // Predicated region
    $region182: #{tpu_custom_call.1} parent=1 // pred_check
      _
    $region183: #{tpu_custom_call.1} parent=1 // pred_check_branch
      %341 = sbr.rel (0) target = $region185
    $region184: #{tpu_custom_call.1} parent=1 // pred_region
      %342 = dma.done [#allocation18], 512
    $region185: #{tpu_custom_call.1} parent=1 // pred_fallthru
      _
    // Predicated region
    $region186: #{tpu_custom_call.1} parent=1 // pred_check
      _
    $region187: #{tpu_custom_call.1} parent=1 // pred_check_branch
      %344 = sbr.rel (0) target = $region189
    $region188: #{tpu_custom_call.1} parent=1 // pred_region
      %345 = dma.done [#allocation21], 512
    $region189: #{tpu_custom_call.1} parent=1 // pred_fallthru
      _
    // Predicated region
    $region190: #{tpu_custom_call.1} parent=1 // pred_check
      _
    $region191: #{tpu_custom_call.1} parent=1 // pred_check_branch
      %347 = sbr.rel (0) target = $region193
    $region192: #{tpu_custom_call.1} parent=1 // pred_region
      %348 = dma.done [#allocation21], 512
    $region193: #{tpu_custom_call.1} parent=1 // pred_fallthru
      _
    // Predicated region
    $region194: #{tpu_custom_call.1} parent=1 // pred_check
      _
    $region195: #{tpu_custom_call.1} parent=1 // pred_check_branch
      %350 = sbr.rel (0) target = $region197
    $region196: #{tpu_custom_call.1} parent=1 // pred_region
      %351 = dma.done [#allocation24], 512
    $region197: #{tpu_custom_call.1} parent=1 // pred_fallthru
      _
    // Predicated region
    $region198: #{tpu_custom_call.1} parent=1 // pred_check
      _
    $region199: #{tpu_custom_call.1} parent=1 // pred_check_branch
      %353 = sbr.rel (0) target = $region201
    $region200: #{tpu_custom_call.1} parent=1 // pred_region
      %354 = dma.done [#allocation24], 512
    $region201: #{tpu_custom_call.1} parent=1 // pred_fallthru
      _
    // Predicated region
    $region202: #{tpu_custom_call.1} parent=1 // pred_check
      _
    $region203: #{tpu_custom_call.1} parent=1 // pred_check_branch
      %356 = sbr.rel (0) target = $region205
    $region204: #{tpu_custom_call.1} parent=1 // pred_region
      %357 = dma.done [#allocation27], 512
    $region205: #{tpu_custom_call.1} parent=1 // pred_fallthru
      _
    %v358 = vld [vmem:[#allocation8] sm:$0xf]
    %v359 = vld [vmem:[%s9] sm:$0xff]
    %v360 = vld [vmem:[%s9 + $0x8] sm:$0xff]
    %v361 = vld [vmem:[%s9 + $0x10] sm:$0xff]
    %v362 = vld [vmem:[%s9 + $0x18] sm:$0xff]
    %v363 = vld [vmem:[%s9 + $0x20] sm:$0xff]
    %v364 = vld [vmem:[%s9 + $0x28] sm:$0xff]
    %v365 = vld [vmem:[%s9 + $0x30] sm:$0xff]
    %v366 = vld [vmem:[%s9 + $0x38] sm:$0xff]
    %v367 = vld [vmem:[%s9 + $0x40] sm:$0xff]
    %v368 = vld [vmem:[%s9 + $0x48] sm:$0xff]
    %v369 = vld [vmem:[%s9 + $0x50] sm:$0xff]
    %v370 = vld [vmem:[%s9 + $0x58] sm:$0xff]
    %v371 = vld [vmem:[%s9 + $0x60] sm:$0xff]
    %v372 = vld [vmem:[%s9 + $0x68] sm:$0xff]
    %v373 = vld [vmem:[%s9 + $0x70] sm:$0xff]
    %v374 = vld [vmem:[%s9 + $0x78] sm:$0xff]
    %v375 = vld [vmem:[%s11] sm:$0xff]
    %v376 = vld [vmem:[%s11 + $0x8] sm:$0xff]
    %v377 = vld [vmem:[%s11 + $0x10] sm:$0xff]
    %v378 = vld [vmem:[%s11 + $0x18] sm:$0xff]
    %v379 = vld [vmem:[%s13] sm:$0xff]
    %v380 = vld [vmem:[%s13 + $0x8] sm:$0xff]
    %v381 = vld [vmem:[%s13 + $0x10] sm:$0xff]
    %v382 = vld [vmem:[%s13 + $0x18] sm:$0xff]
    %v383 = vld [vmem:[%s13 + $0x20] sm:$0xff]
    %v384 = vld [vmem:[%s13 + $0x28] sm:$0xff]
    %v385 = vld [vmem:[%s13 + $0x30] sm:$0xff]
    %v386 = vld [vmem:[%s13 + $0x38] sm:$0xff]
    %v387 = vld [vmem:[%s13 + $0x40] sm:$0xff]
    %v388 = vld [vmem:[%s13 + $0x48] sm:$0xff]
    %v389 = vld [vmem:[%s13 + $0x50] sm:$0xff]
    %v390 = vld [vmem:[%s13 + $0x58] sm:$0xff]
    %v391 = vld [vmem:[%s13 + $0x60] sm:$0xff]
    %v392 = vld [vmem:[%s13 + $0x68] sm:$0xff]
    %v393 = vld [vmem:[%s13 + $0x70] sm:$0xff]
    %v394 = vld [vmem:[%s13 + $0x78] sm:$0xff]
    %v395 = vld [vmem:[#allocation2] sm:$0xff]
    %v396 = vld [vmem:[#allocation2 + $0x8] sm:$0xff]
    %v397 = vld [vmem:[#allocation5] sm:$0xff]
    %v398 = vld [vmem:[#allocation5 + $0x8] sm:$0xff]
    %v399 = vld [vmem:[#allocation7] sm:$0xff]
    %v400 = vld [vmem:[#allocation7 + $0x8] sm:$0xff]
    %v401 = vld [vmem:[%s15] sm:$0xff]
    %v402 = vld [vmem:[%s15 + $0x8] sm:$0xff]
    %v403 = vld [vmem:[%s15 + $0x10] sm:$0xff]
    %v404 = vld [vmem:[%s15 + $0x18] sm:$0xff]
    %v405 = vld [vmem:[%s17] sm:$0xff]
    %v406 = vld [vmem:[%s17 + $0x8] sm:$0xff]
    %v407 = vld [vmem:[%s17 + $0x10] sm:$0xff]
    %v408 = vld [vmem:[%s17 + $0x18] sm:$0xff]
    %vm409 = vcmask 261120
    %v411 = vsel %vm409, %v397, 0
    %v414 = vsel %vm409, %v398, 0
    %416 = vmatprep.subr.mxu0 0.0
    %417 = vmatpush1.msra.mxu0 0.0
    %418 = vmatprep.subr.mxu0 0.0
    %419 = vmatpush1.msra.mxu0 0.0
    %420 = vmatprep.subr.mxu0 0.0
    %421 = vmatpush1.msra.mxu0 0.0
    %422 = vmatprep.subr.mxu0 0.0
    %423 = vmatpush1.msra.mxu0 0.0
    %424 = vmatprep.subr.mxu0 0.0
    %425 = vmatpush1.msra.mxu0 0.0
    %426 = vmatprep.subr.mxu0 0.0
    %427 = vmatpush1.msra.mxu0 0.0
    %428 = vmatprep.subr.mxu0 0.0
    %429 = vmatpush1.msra.mxu0 0.0
    %430 = vmatprep.subr.mxu0 0.0
    %431 = vmatpush1.msra.mxu0 0.0
    %432 = vmatprep.subr.mxu0 0.0
    %433 = vmatpush1.msra.mxu0 0.0
    %434 = vmatprep.subr.mxu0 0.0
    %435 = vmatpush1.msra.mxu0 0.0
    %436 = vmatprep.subr.mxu0 0.0
    %437 = vmatpush1.msra.mxu0 0.0
    %438 = vmatprep.subr.mxu0 0.0
    %439 = vmatpush1.msra.mxu0 0.0
    %440 = vmatprep.subr.mxu0 0.0
    %441 = vmatpush1.msra.mxu0 %v408
    %442 = vmatprep.subr.mxu0 0.0
    %443 = vmatpush1.msra.mxu0 %v407
    %444 = vmatprep.subr.mxu0 0.0
    %445 = vmatpush1.msra.mxu0 %v406
    %446 = vmatprep.subr.mxu0 0.0
    %447 = vmatpush1.msra.mxu0 %v405
    %448 = vmatprep.subr.mxu0 0.0
    %449 = vmatpush2.msra.mxu0 0.0
    %450 = vmatprep.subr.mxu0 0.0
    %451 = vmatpush2.msra.mxu0 0.0
    %452 = vmatprep.subr.mxu0 0.0
    %453 = vmatpush2.msra.mxu0 0.0
    %454 = vmatprep.subr.mxu0 0.0
    %455 = vmatpush2.msra.mxu0 0.0
    %456 = vmatprep.subr.mxu0 0.0
    %457 = vmatpush2.msra.mxu0 0.0
    %458 = vmatprep.subr.mxu0 0.0
    %459 = vmatpush2.msra.mxu0 0.0
    %460 = vmatprep.subr.mxu0 0.0
    %461 = vmatpush2.msra.mxu0 0.0
    %462 = vmatprep.subr.mxu0 0.0
    %463 = vmatpush2.msra.mxu0 0.0
    %464 = vmatprep.subr.mxu0 0.0
    %465 = vmatpush2.msra.mxu0 0.0
    %466 = vmatprep.subr.mxu0 0.0
    %467 = vmatpush2.msra.mxu0 0.0
    %468 = vmatprep.subr.mxu0 0.0
    %469 = vmatpush2.msra.mxu0 0.0
    %470 = vmatprep.subr.mxu0 0.0
    %471 = vmatpush2.msra.mxu0 0.0
    %472 = vmatprep.subr.mxu0 0.0
    %473 = vmatpush2.msra.mxu0 0.0
    %474 = vmatprep.subr.mxu0 0.0
    %475 = vmatpush2.msra.mxu0 0.0
    %476 = vmatprep.subr.mxu0 0.0
    %477 = vmatpush2.msra.mxu0 0.0
    %478 = vmatprep.subr.mxu0 0.0
    %479 = vmatpush2.msra.mxu0 0.0
    %480 = vmatprep.mubr.f32.mxu0 0.0
    %481 = vmatmul.mubr.f32.gmra.mxu0 %v411
    %v482 = vpop.f32.mrf.mxu0
    %v483 = vadd.f32 0.0, %v482
    %v484 = vpop.f32.mrf.mxu0
    %485 = vmatprep.mubr.f32.mxu0 0.0
    %486 = vmatmul.mubr.f32.gmra.mxu0 %v414
    %v487 = vpop.f32.mrf.mxu0
    %v488 = vadd.f32 0.0, %v487
    %v489 = vpop.f32.mrf.mxu0
    %490 = vdwg.mxu0
    %v492 = vsel %vm409, %v395, 0
    %v495 = vsel %vm409, %v396, 0
    %497 = vmatprep.subr.mxu0 0.0
    %498 = vmatpush1.msra.mxu0 0.0
    %499 = vmatprep.subr.mxu0 0.0
    %500 = vmatpush1.msra.mxu0 0.0
    %501 = vmatprep.subr.mxu0 0.0
    %502 = vmatpush1.msra.mxu0 0.0
    %503 = vmatprep.subr.mxu0 0.0
    %504 = vmatpush1.msra.mxu0 0.0
    %505 = vmatprep.subr.mxu0 0.0
    %506 = vmatpush1.msra.mxu0 0.0
    %507 = vmatprep.subr.mxu0 0.0
    %508 = vmatpush1.msra.mxu0 0.0
    %509 = vmatprep.subr.mxu0 0.0
    %510 = vmatpush1.msra.mxu0 0.0
    %511 = vmatprep.subr.mxu0 0.0
    %512 = vmatpush1.msra.mxu0 0.0
    %513 = vmatprep.subr.mxu0 0.0
    %514 = vmatpush1.msra.mxu0 0.0
    %515 = vmatprep.subr.mxu0 0.0
    %516 = vmatpush1.msra.mxu0 0.0
    %517 = vmatprep.subr.mxu0 0.0
    %518 = vmatpush1.msra.mxu0 0.0
    %519 = vmatprep.subr.mxu0 0.0
    %520 = vmatpush1.msra.mxu0 0.0
    %521 = vmatprep.subr.mxu0 0.0
    %522 = vmatpush1.msra.mxu0 %v404
    %523 = vmatprep.subr.mxu0 0.0
    %524 = vmatpush1.msra.mxu0 %v403
    %525 = vmatprep.subr.mxu0 0.0
    %526 = vmatpush1.msra.mxu0 %v402
    %527 = vmatprep.subr.mxu0 0.0
    %528 = vmatpush1.msra.mxu0 %v401
    %529 = vmatprep.subr.mxu0 0.0
    %530 = vmatpush2.msra.mxu0 0.0
    %531 = vmatprep.subr.mxu0 0.0
    %532 = vmatpush2.msra.mxu0 0.0
    %533 = vmatprep.subr.mxu0 0.0
    %534 = vmatpush2.msra.mxu0 0.0
    %535 = vmatprep.subr.mxu0 0.0
    %536 = vmatpush2.msra.mxu0 0.0
    %537 = vmatprep.subr.mxu0 0.0
    %538 = vmatpush2.msra.mxu0 0.0
    %539 = vmatprep.subr.mxu0 0.0
    %540 = vmatpush2.msra.mxu0 0.0
    %541 = vmatprep.subr.mxu0 0.0
    %542 = vmatpush2.msra.mxu0 0.0
    %543 = vmatprep.subr.mxu0 0.0
    %544 = vmatpush2.msra.mxu0 0.0
    %545 = vmatprep.subr.mxu0 0.0
    %546 = vmatpush2.msra.mxu0 0.0
    %547 = vmatprep.subr.mxu0 0.0
    %548 = vmatpush2.msra.mxu0 0.0
    %549 = vmatprep.subr.mxu0 0.0
    %550 = vmatpush2.msra.mxu0 0.0
    %551 = vmatprep.subr.mxu0 0.0
    %552 = vmatpush2.msra.mxu0 0.0
    %553 = vmatprep.subr.mxu0 0.0
    %554 = vmatpush2.msra.mxu0 0.0
    %555 = vmatprep.subr.mxu0 0.0
    %556 = vmatpush2.msra.mxu0 0.0
    %557 = vmatprep.subr.mxu0 0.0
    %558 = vmatpush2.msra.mxu0 0.0
    %559 = vmatprep.subr.mxu0 0.0
    %560 = vmatpush2.msra.mxu0 0.0
    %561 = vmatprep.mubr.f32.mxu0 0.0
    %562 = vmatmul.mubr.f32.gmra.mxu0 %v492
    %v563 = vpop.f32.mrf.mxu0
    %v564 = vadd.f32 %v483, %v563
    %v565 = vpop.f32.mrf.mxu0
    %566 = vmatprep.mubr.f32.mxu0 0.0
    %567 = vmatmul.mubr.f32.gmra.mxu0 %v495
    %v568 = vpop.f32.mrf.mxu0
    %v569 = vadd.f32 %v488, %v568
    %v570 = vpop.f32.mrf.mxu0
    %571 = vdwg.mxu0
    %v572 = vld [vmem:[%s19] sm:$0x1]
    %v574 = vlaneseq
    %v575 = vshrl.u32 %v574, 7
    %v576 = vsub.s32 0, %v575
    %v577 = vrot.slane %v572, %v576
    %v579 = vadd.f32 %v564, %v577
    %v580 = vadd.f32 %v569, %v577
    %v581 = vtanh.pop %v579
    %v582 = vtanh.pop %v580
    %v583 = vld [vmem:[%s21] sm:$0xff]
    %v584 = vld [vmem:[%s21 + $0x8] sm:$0xff]
    %v585 = vld [vmem:[%s21 + $0x10] sm:$0xff]
    %v586 = vld [vmem:[%s21 + $0x18] sm:$0xff]
    %v587 = vld [vmem:[%s23] sm:$0xff]
    %v588 = vld [vmem:[%s23 + $0x8] sm:$0xff]
    %v589 = vld [vmem:[%s23 + $0x10] sm:$0xff]
    %v590 = vld [vmem:[%s23 + $0x18] sm:$0xff]
    %591 = vmatprep.subr.mxu0 0.0
    %592 = vmatpush1.msra.mxu0 0.0
    %593 = vmatprep.subr.mxu0 0.0
    %594 = vmatpush1.msra.mxu0 0.0
    %595 = vmatprep.subr.mxu0 0.0
    %596 = vmatpush1.msra.mxu0 0.0
    %597 = vmatprep.subr.mxu0 0.0
    %598 = vmatpush1.msra.mxu0 0.0
    %599 = vmatprep.subr.mxu0 0.0
    %600 = vmatpush1.msra.mxu0 0.0
    %601 = vmatprep.subr.mxu0 0.0
    %602 = vmatpush1.msra.mxu0 0.0
    %603 = vmatprep.subr.mxu0 0.0
    %604 = vmatpush1.msra.mxu0 0.0
    %605 = vmatprep.subr.mxu0 0.0
    %606 = vmatpush1.msra.mxu0 0.0
    %607 = vmatprep.subr.mxu0 0.0
    %608 = vmatpush1.msra.mxu0 0.0
    %609 = vmatprep.subr.mxu0 0.0
    %610 = vmatpush1.msra.mxu0 0.0
    %611 = vmatprep.subr.mxu0 0.0
    %612 = vmatpush1.msra.mxu0 0.0
    %613 = vmatprep.subr.mxu0 0.0
    %614 = vmatpush1.msra.mxu0 0.0
    %615 = vmatprep.subr.mxu0 0.0
    %616 = vmatpush1.msra.mxu0 %v590
    %617 = vmatprep.subr.mxu0 0.0
    %618 = vmatpush1.msra.mxu0 %v589
    %619 = vmatprep.subr.mxu0 0.0
    %620 = vmatpush1.msra.mxu0 %v588
    %621 = vmatprep.subr.mxu0 0.0
    %622 = vmatpush1.msra.mxu0 %v587
    %623 = vmatprep.subr.mxu0 0.0
    %624 = vmatpush2.msra.mxu0 0.0
    %625 = vmatprep.subr.mxu0 0.0
    %626 = vmatpush2.msra.mxu0 0.0
    %627 = vmatprep.subr.mxu0 0.0
    %628 = vmatpush2.msra.mxu0 0.0
    %629 = vmatprep.subr.mxu0 0.0
    %630 = vmatpush2.msra.mxu0 0.0
    %631 = vmatprep.subr.mxu0 0.0
    %632 = vmatpush2.msra.mxu0 0.0
    %633 = vmatprep.subr.mxu0 0.0
    %634 = vmatpush2.msra.mxu0 0.0
    %635 = vmatprep.subr.mxu0 0.0
    %636 = vmatpush2.msra.mxu0 0.0
    %637 = vmatprep.subr.mxu0 0.0
    %638 = vmatpush2.msra.mxu0 0.0
    %639 = vmatprep.subr.mxu0 0.0
    %640 = vmatpush2.msra.mxu0 0.0
    %641 = vmatprep.subr.mxu0 0.0
    %642 = vmatpush2.msra.mxu0 0.0
    %643 = vmatprep.subr.mxu0 0.0
    %644 = vmatpush2.msra.mxu0 0.0
    %645 = vmatprep.subr.mxu0 0.0
    %646 = vmatpush2.msra.mxu0 0.0
    %647 = vmatprep.subr.mxu0 0.0
    %648 = vmatpush2.msra.mxu0 0.0
    %649 = vmatprep.subr.mxu0 0.0
    %650 = vmatpush2.msra.mxu0 0.0
    %651 = vmatprep.subr.mxu0 0.0
    %652 = vmatpush2.msra.mxu0 0.0
    %653 = vmatprep.subr.mxu0 0.0
    %654 = vmatpush2.msra.mxu0 0.0
    %655 = vmatprep.mubr.f32.mxu0 0.0
    %656 = vmatmul.mubr.f32.gmra.mxu0 %v411
    %v657 = vpop.f32.mrf.mxu0
    %v658 = vadd.f32 0.0, %v657
    %v659 = vpop.f32.mrf.mxu0
    %660 = vmatprep.mubr.f32.mxu0 0.0
    %661 = vmatmul.mubr.f32.gmra.mxu0 %v414
    %v662 = vpop.f32.mrf.mxu0
    %v663 = vadd.f32 0.0, %v662
    %v664 = vpop.f32.mrf.mxu0
    %665 = vdwg.mxu0
    %666 = vmatprep.subr.mxu0 0.0
    %667 = vmatpush1.msra.mxu0 0.0
    %668 = vmatprep.subr.mxu0 0.0
    %669 = vmatpush1.msra.mxu0 0.0
    %670 = vmatprep.subr.mxu0 0.0
    %671 = vmatpush1.msra.mxu0 0.0
    %672 = vmatprep.subr.mxu0 0.0
    %673 = vmatpush1.msra.mxu0 0.0
    %674 = vmatprep.subr.mxu0 0.0
    %675 = vmatpush1.msra.mxu0 0.0
    %676 = vmatprep.subr.mxu0 0.0
    %677 = vmatpush1.msra.mxu0 0.0
    %678 = vmatprep.subr.mxu0 0.0
    %679 = vmatpush1.msra.mxu0 0.0
    %680 = vmatprep.subr.mxu0 0.0
    %681 = vmatpush1.msra.mxu0 0.0
    %682 = vmatprep.subr.mxu0 0.0
    %683 = vmatpush1.msra.mxu0 0.0
    %684 = vmatprep.subr.mxu0 0.0
    %685 = vmatpush1.msra.mxu0 0.0
    %686 = vmatprep.subr.mxu0 0.0
    %687 = vmatpush1.msra.mxu0 0.0
    %688 = vmatprep.subr.mxu0 0.0
    %689 = vmatpush1.msra.mxu0 0.0
    %690 = vmatprep.subr.mxu0 0.0
    %691 = vmatpush1.msra.mxu0 %v586
    %692 = vmatprep.subr.mxu0 0.0
    %693 = vmatpush1.msra.mxu0 %v585
    %694 = vmatprep.subr.mxu0 0.0
    %695 = vmatpush1.msra.mxu0 %v584
    %696 = vmatprep.subr.mxu0 0.0
    %697 = vmatpush1.msra.mxu0 %v583
    %698 = vmatprep.subr.mxu0 0.0
    %699 = vmatpush2.msra.mxu0 0.0
    %700 = vmatprep.subr.mxu0 0.0
    %701 = vmatpush2.msra.mxu0 0.0
    %702 = vmatprep.subr.mxu0 0.0
    %703 = vmatpush2.msra.mxu0 0.0
    %704 = vmatprep.subr.mxu0 0.0
    %705 = vmatpush2.msra.mxu0 0.0
    %706 = vmatprep.subr.mxu0 0.0
    %707 = vmatpush2.msra.mxu0 0.0
    %708 = vmatprep.subr.mxu0 0.0
    %709 = vmatpush2.msra.mxu0 0.0
    %710 = vmatprep.subr.mxu0 0.0
    %711 = vmatpush2.msra.mxu0 0.0
    %712 = vmatprep.subr.mxu0 0.0
    %713 = vmatpush2.msra.mxu0 0.0
    %714 = vmatprep.subr.mxu0 0.0
    %715 = vmatpush2.msra.mxu0 0.0
    %716 = vmatprep.subr.mxu0 0.0
    %717 = vmatpush2.msra.mxu0 0.0
    %718 = vmatprep.subr.mxu0 0.0
    %719 = vmatpush2.msra.mxu0 0.0
    %720 = vmatprep.subr.mxu0 0.0
    %721 = vmatpush2.msra.mxu0 0.0
    %722 = vmatprep.subr.mxu0 0.0
    %723 = vmatpush2.msra.mxu0 0.0
    %724 = vmatprep.subr.mxu0 0.0
    %725 = vmatpush2.msra.mxu0 0.0
    %726 = vmatprep.subr.mxu0 0.0
    %727 = vmatpush2.msra.mxu0 0.0
    %728 = vmatprep.subr.mxu0 0.0
    %729 = vmatpush2.msra.mxu0 0.0
    %730 = vmatprep.mubr.f32.mxu0 0.0
    %731 = vmatmul.mubr.f32.gmra.mxu0 %v492
    %v732 = vpop.f32.mrf.mxu0
    %v733 = vadd.f32 %v658, %v732
    %v734 = vpop.f32.mrf.mxu0
    %735 = vmatprep.mubr.f32.mxu0 0.0
    %736 = vmatmul.mubr.f32.gmra.mxu0 %v495
    %v737 = vpop.f32.mrf.mxu0
    %v738 = vadd.f32 %v663, %v737
    %v739 = vpop.f32.mrf.mxu0
    %740 = vdwg.mxu0
    %v741 = vld [vmem:[#allocation10] sm:$0x1]
    %v743 = vlaneseq
    %v744 = vshrl.u32 %v743, 7
    %v745 = vsub.s32 0, %v744
    %v746 = vrot.slane %v741, %v745
    %v748 = vadd.f32 %v733, %v746
    %v749 = vadd.f32 %v738, %v746
    %v750 = vxor.u32 %v748, 2147483648
    %v751 = vxor.u32 %v749, 2147483648
    %v752 = vmul.f32 %v750, 1.442695
    %v753 = vpow.pop %v752
    %v754 = vmul.f32 %v751, 1.442695
    %v755 = vpow.pop %v754
    %v756 = vadd.f32 %v753, 1.0
    %v757 = vadd.f32 %v755, 1.0
    %v758 = vrcp.pop %v756
    %v759 = vmul.f32 1.0, %v758
    %v760 = vrcp.pop %v757
    %v761 = vmul.f32 1.0, %v760
    %v762 = vmul.f32 %v759, %v581
    %v763 = vmul.f32 %v761, %v582
    %v764 = vsub.f32 1.0, %v759
    %v765 = vsub.f32 1.0, %v761
    %v766 = vmul.f32 %v764, %v395
    %v767 = vmul.f32 %v765, %v396
    %v768 = vadd.f32 %v762, %v766
    %v769 = vadd.f32 %v763, %v767
    %v770 = vld [vmem:[%s31] sm:$0xff]
    %v771 = vld [vmem:[%s31 + $0x8] sm:$0xff]
    %v772 = vld [vmem:[%s31 + $0x10] sm:$0xff]
    %v773 = vld [vmem:[%s31 + $0x18] sm:$0xff]
    %v774 = vld [vmem:[%s33] sm:$0xff]
    %v775 = vld [vmem:[%s33 + $0x8] sm:$0xff]
    %v776 = vld [vmem:[%s33 + $0x10] sm:$0xff]
    %v777 = vld [vmem:[%s33 + $0x18] sm:$0xff]
    %v779 = vsel %vm409, %v399, 0
    %v782 = vsel %vm409, %v400, 0
    %784 = vmatprep.subr.mxu0 0.0
    %785 = vmatpush1.msra.mxu0 0.0
    %786 = vmatprep.subr.mxu0 0.0
    %787 = vmatpush1.msra.mxu0 0.0
    %788 = vmatprep.subr.mxu0 0.0
    %789 = vmatpush1.msra.mxu0 0.0
    %790 = vmatprep.subr.mxu0 0.0
    %791 = vmatpush1.msra.mxu0 0.0
    %792 = vmatprep.subr.mxu0 0.0
    %793 = vmatpush1.msra.mxu0 0.0
    %794 = vmatprep.subr.mxu0 0.0
    %795 = vmatpush1.msra.mxu0 0.0
    %796 = vmatprep.subr.mxu0 0.0
    %797 = vmatpush1.msra.mxu0 0.0
    %798 = vmatprep.subr.mxu0 0.0
    %799 = vmatpush1.msra.mxu0 0.0
    %800 = vmatprep.subr.mxu0 0.0
    %801 = vmatpush1.msra.mxu0 0.0
    %802 = vmatprep.subr.mxu0 0.0
    %803 = vmatpush1.msra.mxu0 0.0
    %804 = vmatprep.subr.mxu0 0.0
    %805 = vmatpush1.msra.mxu0 0.0
    %806 = vmatprep.subr.mxu0 0.0
    %807 = vmatpush1.msra.mxu0 0.0
    %808 = vmatprep.subr.mxu0 0.0
    %809 = vmatpush1.msra.mxu0 %v777
    %810 = vmatprep.subr.mxu0 0.0
    %811 = vmatpush1.msra.mxu0 %v776
    %812 = vmatprep.subr.mxu0 0.0
    %813 = vmatpush1.msra.mxu0 %v775
    %814 = vmatprep.subr.mxu0 0.0
    %815 = vmatpush1.msra.mxu0 %v774
    %816 = vmatprep.subr.mxu0 0.0
    %817 = vmatpush2.msra.mxu0 0.0
    %818 = vmatprep.subr.mxu0 0.0
    %819 = vmatpush2.msra.mxu0 0.0
    %820 = vmatprep.subr.mxu0 0.0
    %821 = vmatpush2.msra.mxu0 0.0
    %822 = vmatprep.subr.mxu0 0.0
    %823 = vmatpush2.msra.mxu0 0.0
    %824 = vmatprep.subr.mxu0 0.0
    %825 = vmatpush2.msra.mxu0 0.0
    %826 = vmatprep.subr.mxu0 0.0
    %827 = vmatpush2.msra.mxu0 0.0
    %828 = vmatprep.subr.mxu0 0.0
    %829 = vmatpush2.msra.mxu0 0.0
    %830 = vmatprep.subr.mxu0 0.0
    %831 = vmatpush2.msra.mxu0 0.0
    %832 = vmatprep.subr.mxu0 0.0
    %833 = vmatpush2.msra.mxu0 0.0
    %834 = vmatprep.subr.mxu0 0.0
    %835 = vmatpush2.msra.mxu0 0.0
    %836 = vmatprep.subr.mxu0 0.0
    %837 = vmatpush2.msra.mxu0 0.0
    %838 = vmatprep.subr.mxu0 0.0
    %839 = vmatpush2.msra.mxu0 0.0
    %840 = vmatprep.subr.mxu0 0.0
    %841 = vmatpush2.msra.mxu0 0.0
    %842 = vmatprep.subr.mxu0 0.0
    %843 = vmatpush2.msra.mxu0 0.0
    %844 = vmatprep.subr.mxu0 0.0
    %845 = vmatpush2.msra.mxu0 0.0
    %846 = vmatprep.subr.mxu0 0.0
    %847 = vmatpush2.msra.mxu0 0.0
    %848 = vmatprep.mubr.f32.mxu0 0.0
    %849 = vmatmul.mubr.f32.gmra.mxu0 %v779
    %v850 = vpop.f32.mrf.mxu0
    %v851 = vadd.f32 0.0, %v850
    %v852 = vpop.f32.mrf.mxu0
    %853 = vmatprep.mubr.f32.mxu0 0.0
    %854 = vmatmul.mubr.f32.gmra.mxu0 %v782
    %v855 = vpop.f32.mrf.mxu0
    %v856 = vadd.f32 0.0, %v855
    %v857 = vpop.f32.mrf.mxu0
    %858 = vdwg.mxu0
    %859 = vmatprep.subr.mxu0 0.0
    %860 = vmatpush1.msra.mxu0 0.0
    %861 = vmatprep.subr.mxu0 0.0
    %862 = vmatpush1.msra.mxu0 0.0
    %863 = vmatprep.subr.mxu0 0.0
    %864 = vmatpush1.msra.mxu0 0.0
    %865 = vmatprep.subr.mxu0 0.0
    %866 = vmatpush1.msra.mxu0 0.0
    %867 = vmatprep.subr.mxu0 0.0
    %868 = vmatpush1.msra.mxu0 0.0
    %869 = vmatprep.subr.mxu0 0.0
    %870 = vmatpush1.msra.mxu0 0.0
    %871 = vmatprep.subr.mxu0 0.0
    %872 = vmatpush1.msra.mxu0 0.0
    %873 = vmatprep.subr.mxu0 0.0
    %874 = vmatpush1.msra.mxu0 0.0
    %875 = vmatprep.subr.mxu0 0.0
    %876 = vmatpush1.msra.mxu0 0.0
    %877 = vmatprep.subr.mxu0 0.0
    %878 = vmatpush1.msra.mxu0 0.0
    %879 = vmatprep.subr.mxu0 0.0
    %880 = vmatpush1.msra.mxu0 0.0
    %881 = vmatprep.subr.mxu0 0.0
    %882 = vmatpush1.msra.mxu0 0.0
    %883 = vmatprep.subr.mxu0 0.0
    %884 = vmatpush1.msra.mxu0 %v773
    %885 = vmatprep.subr.mxu0 0.0
    %886 = vmatpush1.msra.mxu0 %v772
    %887 = vmatprep.subr.mxu0 0.0
    %888 = vmatpush1.msra.mxu0 %v771
    %889 = vmatprep.subr.mxu0 0.0
    %890 = vmatpush1.msra.mxu0 %v770
    %891 = vmatprep.subr.mxu0 0.0
    %892 = vmatpush2.msra.mxu0 0.0
    %893 = vmatprep.subr.mxu0 0.0
    %894 = vmatpush2.msra.mxu0 0.0
    %895 = vmatprep.subr.mxu0 0.0
    %896 = vmatpush2.msra.mxu0 0.0
    %897 = vmatprep.subr.mxu0 0.0
    %898 = vmatpush2.msra.mxu0 0.0
    %899 = vmatprep.subr.mxu0 0.0
    %900 = vmatpush2.msra.mxu0 0.0
    %901 = vmatprep.subr.mxu0 0.0
    %902 = vmatpush2.msra.mxu0 0.0
    %903 = vmatprep.subr.mxu0 0.0
    %904 = vmatpush2.msra.mxu0 0.0
    %905 = vmatprep.subr.mxu0 0.0
    %906 = vmatpush2.msra.mxu0 0.0
    %907 = vmatprep.subr.mxu0 0.0
    %908 = vmatpush2.msra.mxu0 0.0
    %909 = vmatprep.subr.mxu0 0.0
    %910 = vmatpush2.msra.mxu0 0.0
    %911 = vmatprep.subr.mxu0 0.0
    %912 = vmatpush2.msra.mxu0 0.0
    %913 = vmatprep.subr.mxu0 0.0
    %914 = vmatpush2.msra.mxu0 0.0
    %915 = vmatprep.subr.mxu0 0.0
    %916 = vmatpush2.msra.mxu0 0.0
    %917 = vmatprep.subr.mxu0 0.0
    %918 = vmatpush2.msra.mxu0 0.0
    %919 = vmatprep.subr.mxu0 0.0
    %920 = vmatpush2.msra.mxu0 0.0
    %921 = vmatprep.subr.mxu0 0.0
    %922 = vmatpush2.msra.mxu0 0.0
    %923 = vmatprep.mubr.f32.mxu0 0.0
    %924 = vmatmul.mubr.f32.gmra.mxu0 %v492
    %v925 = vpop.f32.mrf.mxu0
    %v926 = vadd.f32 %v851, %v925
    %v927 = vpop.f32.mrf.mxu0
    %928 = vmatprep.mubr.f32.mxu0 0.0
    %929 = vmatmul.mubr.f32.gmra.mxu0 %v495
    %v930 = vpop.f32.mrf.mxu0
    %v931 = vadd.f32 %v856, %v930
    %v932 = vpop.f32.mrf.mxu0
    %933 = vdwg.mxu0
    %v934 = vld [vmem:[#allocation11] sm:$0x1]
    %v936 = vlaneseq
    %v937 = vshrl.u32 %v936, 7
    %v938 = vsub.s32 0, %v937
    %v939 = vrot.slane %v934, %v938
    %v941 = vadd.f32 %v926, %v939
    %v942 = vadd.f32 %v931, %v939
    %v943 = vtanh.pop %v941
    %v944 = vtanh.pop %v942
    %v945 = vld [vmem:[#allocation13] sm:$0xff]
    %v946 = vld [vmem:[#allocation13 + $0x8] sm:$0xff]
    %v947 = vld [vmem:[#allocation13 + $0x10] sm:$0xff]
    %v948 = vld [vmem:[#allocation13 + $0x18] sm:$0xff]
    %v949 = vld [vmem:[#allocation14] sm:$0xff]
    %v950 = vld [vmem:[#allocation14 + $0x8] sm:$0xff]
    %v951 = vld [vmem:[#allocation14 + $0x10] sm:$0xff]
    %v952 = vld [vmem:[#allocation14 + $0x18] sm:$0xff]
    %953 = vmatprep.subr.mxu0 0.0
    %954 = vmatpush1.msra.mxu0 0.0
    %955 = vmatprep.subr.mxu0 0.0
    %956 = vmatpush1.msra.mxu0 0.0
    %957 = vmatprep.subr.mxu0 0.0
    %958 = vmatpush1.msra.mxu0 0.0
    %959 = vmatprep.subr.mxu0 0.0
    %960 = vmatpush1.msra.mxu0 0.0
    %961 = vmatprep.subr.mxu0 0.0
    %962 = vmatpush1.msra.mxu0 0.0
    %963 = vmatprep.subr.mxu0 0.0
    %964 = vmatpush1.msra.mxu0 0.0
    %965 = vmatprep.subr.mxu0 0.0
    %966 = vmatpush1.msra.mxu0 0.0
    %967 = vmatprep.subr.mxu0 0.0
    %968 = vmatpush1.msra.mxu0 0.0
    %969 = vmatprep.subr.mxu0 0.0
    %970 = vmatpush1.msra.mxu0 0.0
    %971 = vmatprep.subr.mxu0 0.0
    %972 = vmatpush1.msra.mxu0 0.0
    %973 = vmatprep.subr.mxu0 0.0
    %974 = vmatpush1.msra.mxu0 0.0
    %975 = vmatprep.subr.mxu0 0.0
    %976 = vmatpush1.msra.mxu0 0.0
    %977 = vmatprep.subr.mxu0 0.0
    %978 = vmatpush1.msra.mxu0 %v952
    %979 = vmatprep.subr.mxu0 0.0
    %980 = vmatpush1.msra.mxu0 %v951
    %981 = vmatprep.subr.mxu0 0.0
    %982 = vmatpush1.msra.mxu0 %v950
    %983 = vmatprep.subr.mxu0 0.0
    %984 = vmatpush1.msra.mxu0 %v949
    %985 = vmatprep.subr.mxu0 0.0
    %986 = vmatpush2.msra.mxu0 0.0
    %987 = vmatprep.subr.mxu0 0.0
    %988 = vmatpush2.msra.mxu0 0.0
    %989 = vmatprep.subr.mxu0 0.0
    %990 = vmatpush2.msra.mxu0 0.0
    %991 = vmatprep.subr.mxu0 0.0
    %992 = vmatpush2.msra.mxu0 0.0
    %993 = vmatprep.subr.mxu0 0.0
    %994 = vmatpush2.msra.mxu0 0.0
    %995 = vmatprep.subr.mxu0 0.0
    %996 = vmatpush2.msra.mxu0 0.0
    %997 = vmatprep.subr.mxu0 0.0
    %998 = vmatpush2.msra.mxu0 0.0
    %999 = vmatprep.subr.mxu0 0.0
    %1000 = vmatpush2.msra.mxu0 0.0
    %1001 = vmatprep.subr.mxu0 0.0
    %1002 = vmatpush2.msra.mxu0 0.0
    %1003 = vmatprep.subr.mxu0 0.0
    %1004 = vmatpush2.msra.mxu0 0.0
    %1005 = vmatprep.subr.mxu0 0.0
    %1006 = vmatpush2.msra.mxu0 0.0
    %1007 = vmatprep.subr.mxu0 0.0
    %1008 = vmatpush2.msra.mxu0 0.0
    %1009 = vmatprep.subr.mxu0 0.0
    %1010 = vmatpush2.msra.mxu0 0.0
    %1011 = vmatprep.subr.mxu0 0.0
    %1012 = vmatpush2.msra.mxu0 0.0
    %1013 = vmatprep.subr.mxu0 0.0
    %1014 = vmatpush2.msra.mxu0 0.0
    %1015 = vmatprep.subr.mxu0 0.0
    %1016 = vmatpush2.msra.mxu0 0.0
    %1017 = vmatprep.mubr.f32.mxu0 0.0
    %1018 = vmatmul.mubr.f32.gmra.mxu0 %v779
    %v1019 = vpop.f32.mrf.mxu0
    %v1020 = vadd.f32 0.0, %v1019
    %v1021 = vpop.f32.mrf.mxu0
    %1022 = vmatprep.mubr.f32.mxu0 0.0
    %1023 = vmatmul.mubr.f32.gmra.mxu0 %v782
    %v1024 = vpop.f32.mrf.mxu0
    %v1025 = vadd.f32 0.0, %v1024
    %v1026 = vpop.f32.mrf.mxu0
    %1027 = vdwg.mxu0
    %1028 = vmatprep.subr.mxu0 0.0
    %1029 = vmatpush1.msra.mxu0 0.0
    %1030 = vmatprep.subr.mxu0 0.0
    %1031 = vmatpush1.msra.mxu0 0.0
    %1032 = vmatprep.subr.mxu0 0.0
    %1033 = vmatpush1.msra.mxu0 0.0
    %1034 = vmatprep.subr.mxu0 0.0
    %1035 = vmatpush1.msra.mxu0 0.0
    %1036 = vmatprep.subr.mxu0 0.0
    %1037 = vmatpush1.msra.mxu0 0.0
    %1038 = vmatprep.subr.mxu0 0.0
    %1039 = vmatpush1.msra.mxu0 0.0
    %1040 = vmatprep.subr.mxu0 0.0
    %1041 = vmatpush1.msra.mxu0 0.0
    %1042 = vmatprep.subr.mxu0 0.0
    %1043 = vmatpush1.msra.mxu0 0.0
    %1044 = vmatprep.subr.mxu0 0.0
    %1045 = vmatpush1.msra.mxu0 0.0
    %1046 = vmatprep.subr.mxu0 0.0
    %1047 = vmatpush1.msra.mxu0 0.0
    %1048 = vmatprep.subr.mxu0 0.0
    %1049 = vmatpush1.msra.mxu0 0.0
    %1050 = vmatprep.subr.mxu0 0.0
    %1051 = vmatpush1.msra.mxu0 0.0
    %1052 = vmatprep.subr.mxu0 0.0
    %1053 = vmatpush1.msra.mxu0 %v948
    %1054 = vmatprep.subr.mxu0 0.0
    %1055 = vmatpush1.msra.mxu0 %v947
    %1056 = vmatprep.subr.mxu0 0.0
    %1057 = vmatpush1.msra.mxu0 %v946
    %1058 = vmatprep.subr.mxu0 0.0
    %1059 = vmatpush1.msra.mxu0 %v945
    %1060 = vmatprep.subr.mxu0 0.0
    %1061 = vmatpush2.msra.mxu0 0.0
    %1062 = vmatprep.subr.mxu0 0.0
    %1063 = vmatpush2.msra.mxu0 0.0
    %1064 = vmatprep.subr.mxu0 0.0
    %1065 = vmatpush2.msra.mxu0 0.0
    %1066 = vmatprep.subr.mxu0 0.0
    %1067 = vmatpush2.msra.mxu0 0.0
    %1068 = vmatprep.subr.mxu0 0.0
    %1069 = vmatpush2.msra.mxu0 0.0
    %1070 = vmatprep.subr.mxu0 0.0
    %1071 = vmatpush2.msra.mxu0 0.0
    %1072 = vmatprep.subr.mxu0 0.0
    %1073 = vmatpush2.msra.mxu0 0.0
    %1074 = vmatprep.subr.mxu0 0.0
    %1075 = vmatpush2.msra.mxu0 0.0
    %1076 = vmatprep.subr.mxu0 0.0
    %1077 = vmatpush2.msra.mxu0 0.0
    %1078 = vmatprep.subr.mxu0 0.0
    %1079 = vmatpush2.msra.mxu0 0.0
    %1080 = vmatprep.subr.mxu0 0.0
    %1081 = vmatpush2.msra.mxu0 0.0
    %1082 = vmatprep.subr.mxu0 0.0
    %1083 = vmatpush2.msra.mxu0 0.0
    %1084 = vmatprep.subr.mxu0 0.0
    %1085 = vmatpush2.msra.mxu0 0.0
    %1086 = vmatprep.subr.mxu0 0.0
    %1087 = vmatpush2.msra.mxu0 0.0
    %1088 = vmatprep.subr.mxu0 0.0
    %1089 = vmatpush2.msra.mxu0 0.0
    %1090 = vmatprep.subr.mxu0 0.0
    %1091 = vmatpush2.msra.mxu0 0.0
    %1092 = vmatprep.mubr.f32.mxu0 0.0
    %1093 = vmatmul.mubr.f32.gmra.mxu0 %v492
    %v1094 = vpop.f32.mrf.mxu0
    %v1095 = vadd.f32 %v1020, %v1094
    %v1096 = vpop.f32.mrf.mxu0
    %1097 = vmatprep.mubr.f32.mxu0 0.0
    %1098 = vmatmul.mubr.f32.gmra.mxu0 %v495
    %v1099 = vpop.f32.mrf.mxu0
    %v1100 = vadd.f32 %v1025, %v1099
    %v1101 = vpop.f32.mrf.mxu0
    %1102 = vdwg.mxu0
    %v1103 = vld [vmem:[%s41] sm:$0x1]
    %v1105 = vlaneseq
    %v1106 = vshrl.u32 %v1105, 7
    %v1107 = vsub.s32 0, %v1106
    %v1108 = vrot.slane %v1103, %v1107
    %v1110 = vadd.f32 %v1095, %v1108
    %v1111 = vadd.f32 %v1100, %v1108
    %v1112 = vxor.u32 %v1110, 2147483648
    %v1113 = vxor.u32 %v1111, 2147483648
    %v1114 = vmul.f32 %v1112, 1.442695
    %v1115 = vpow.pop %v1114
    %v1116 = vmul.f32 %v1113, 1.442695
    %v1117 = vpow.pop %v1116
    %v1118 = vadd.f32 %v1115, 1.0
    %v1119 = vadd.f32 %v1117, 1.0
    %v1120 = vrcp.pop %v1118
    %v1121 = vmul.f32 1.0, %v1120
    %v1122 = vrcp.pop %v1119
    %v1123 = vmul.f32 1.0, %v1122
    %v1124 = vmul.f32 %v1121, %v943
    %v1125 = vmul.f32 %v1123, %v944
    %v1126 = vsub.f32 1.0, %v1121
    %v1127 = vsub.f32 1.0, %v1123
    %v1128 = vmul.f32 %v1126, %v395
    %v1129 = vmul.f32 %v1127, %v396
    %v1130 = vadd.f32 %v1124, %v1128
    %v1131 = vadd.f32 %v1125, %v1129
    %v1132 = vld [vmem:[%s27] sm:$0xff]
    %v1133 = vld [vmem:[%s27 + $0x8] sm:$0xff]
    %v1134 = vld [vmem:[%s27 + $0x10] sm:$0xff]
    %v1135 = vld [vmem:[%s27 + $0x18] sm:$0xff]
    %1136 = vmatprep.subr.mxu0 0.0
    %1137 = vmatpush1.msra.mxu0 0.0
    %1138 = vmatprep.subr.mxu0 0.0
    %1139 = vmatpush1.msra.mxu0 0.0
    %1140 = vmatprep.subr.mxu0 0.0
    %1141 = vmatpush1.msra.mxu0 0.0
    %1142 = vmatprep.subr.mxu0 0.0
    %1143 = vmatpush1.msra.mxu0 0.0
    %1144 = vmatprep.subr.mxu0 0.0
    %1145 = vmatpush1.msra.mxu0 0.0
    %1146 = vmatprep.subr.mxu0 0.0
    %1147 = vmatpush1.msra.mxu0 0.0
    %1148 = vmatprep.subr.mxu0 0.0
    %1149 = vmatpush1.msra.mxu0 0.0
    %1150 = vmatprep.subr.mxu0 0.0
    %1151 = vmatpush1.msra.mxu0 0.0
    %1152 = vmatprep.subr.mxu0 0.0
    %1153 = vmatpush1.msra.mxu0 0.0
    %1154 = vmatprep.subr.mxu0 0.0
    %1155 = vmatpush1.msra.mxu0 0.0
    %1156 = vmatprep.subr.mxu0 0.0
    %1157 = vmatpush1.msra.mxu0 0.0
    %1158 = vmatprep.subr.mxu0 0.0
    %1159 = vmatpush1.msra.mxu0 0.0
    %1160 = vmatprep.subr.mxu0 0.0
    %1161 = vmatpush1.msra.mxu0 %v1135
    %1162 = vmatprep.subr.mxu0 0.0
    %1163 = vmatpush1.msra.mxu0 %v1134
    %1164 = vmatprep.subr.mxu0 0.0
    %1165 = vmatpush1.msra.mxu0 %v1133
    %1166 = vmatprep.subr.mxu0 0.0
    %1167 = vmatpush1.msra.mxu0 %v1132
    %1168 = vmatprep.subr.mxu0 0.0
    %1169 = vmatpush2.msra.mxu0 0.0
    %1170 = vmatprep.subr.mxu0 0.0
    %1171 = vmatpush2.msra.mxu0 0.0
    %1172 = vmatprep.subr.mxu0 0.0
    %1173 = vmatpush2.msra.mxu0 0.0
    %1174 = vmatprep.subr.mxu0 0.0
    %1175 = vmatpush2.msra.mxu0 0.0
    %1176 = vmatprep.subr.mxu0 0.0
    %1177 = vmatpush2.msra.mxu0 0.0
    %1178 = vmatprep.subr.mxu0 0.0
    %1179 = vmatpush2.msra.mxu0 0.0
    %1180 = vmatprep.subr.mxu0 0.0
    %1181 = vmatpush2.msra.mxu0 0.0
    %1182 = vmatprep.subr.mxu0 0.0
    %1183 = vmatpush2.msra.mxu0 0.0
    %1184 = vmatprep.subr.mxu0 0.0
    %1185 = vmatpush2.msra.mxu0 0.0
    %1186 = vmatprep.subr.mxu0 0.0
    %1187 = vmatpush2.msra.mxu0 0.0
    %1188 = vmatprep.subr.mxu0 0.0
    %1189 = vmatpush2.msra.mxu0 0.0
    %1190 = vmatprep.subr.mxu0 0.0
    %1191 = vmatpush2.msra.mxu0 0.0
    %1192 = vmatprep.subr.mxu0 0.0
    %1193 = vmatpush2.msra.mxu0 0.0
    %1194 = vmatprep.subr.mxu0 0.0
    %1195 = vmatpush2.msra.mxu0 0.0
    %1196 = vmatprep.subr.mxu0 0.0
    %1197 = vmatpush2.msra.mxu0 0.0
    %1198 = vmatprep.subr.mxu0 0.0
    %1199 = vmatpush2.msra.mxu0 0.0
    %1200 = vmatprep.mubr.f32.mxu0 0.0
    %1201 = vmatmul.mubr.f32.gmra.mxu0 %v492
    %v1202 = vpop.f32.mrf.mxu0
    %v1203 = vadd.f32 0.0, %v1202
    %v1204 = vpop.f32.mrf.mxu0
    %1205 = vmatprep.mubr.f32.mxu0 0.0
    %1206 = vmatmul.mubr.f32.gmra.mxu0 %v495
    %v1207 = vpop.f32.mrf.mxu0
    %v1208 = vadd.f32 0.0, %v1207
    %v1209 = vpop.f32.mrf.mxu0
    %1210 = vdwg.mxu0
    %v1211 = vld [vmem:[#allocation16] sm:$0xff]
    %v1212 = vld [vmem:[#allocation16 + $0x8] sm:$0xff]
    %v1213 = vld [vmem:[#allocation16 + $0x10] sm:$0xff]
    %v1214 = vld [vmem:[#allocation16 + $0x18] sm:$0xff]
    %1215 = vmatprep.subr.mxu0 0.0
    %1216 = vmatpush1.msra.mxu0 0.0
    %1217 = vmatprep.subr.mxu0 0.0
    %1218 = vmatpush1.msra.mxu0 0.0
    %1219 = vmatprep.subr.mxu0 0.0
    %1220 = vmatpush1.msra.mxu0 0.0
    %1221 = vmatprep.subr.mxu0 0.0
    %1222 = vmatpush1.msra.mxu0 0.0
    %1223 = vmatprep.subr.mxu0 0.0
    %1224 = vmatpush1.msra.mxu0 0.0
    %1225 = vmatprep.subr.mxu0 0.0
    %1226 = vmatpush1.msra.mxu0 0.0
    %1227 = vmatprep.subr.mxu0 0.0
    %1228 = vmatpush1.msra.mxu0 0.0
    %1229 = vmatprep.subr.mxu0 0.0
    %1230 = vmatpush1.msra.mxu0 0.0
    %1231 = vmatprep.subr.mxu0 0.0
    %1232 = vmatpush1.msra.mxu0 0.0
    %1233 = vmatprep.subr.mxu0 0.0
    %1234 = vmatpush1.msra.mxu0 0.0
    %1235 = vmatprep.subr.mxu0 0.0
    %1236 = vmatpush1.msra.mxu0 0.0
    %1237 = vmatprep.subr.mxu0 0.0
    %1238 = vmatpush1.msra.mxu0 0.0
    %1239 = vmatprep.subr.mxu0 0.0
    %1240 = vmatpush1.msra.mxu0 %v1214
    %1241 = vmatprep.subr.mxu0 0.0
    %1242 = vmatpush1.msra.mxu0 %v1213
    %1243 = vmatprep.subr.mxu0 0.0
    %1244 = vmatpush1.msra.mxu0 %v1212
    %1245 = vmatprep.subr.mxu0 0.0
    %1246 = vmatpush1.msra.mxu0 %v1211
    %1247 = vmatprep.subr.mxu0 0.0
    %1248 = vmatpush2.msra.mxu0 0.0
    %1249 = vmatprep.subr.mxu0 0.0
    %1250 = vmatpush2.msra.mxu0 0.0
    %1251 = vmatprep.subr.mxu0 0.0
    %1252 = vmatpush2.msra.mxu0 0.0
    %1253 = vmatprep.subr.mxu0 0.0
    %1254 = vmatpush2.msra.mxu0 0.0
    %1255 = vmatprep.subr.mxu0 0.0
    %1256 = vmatpush2.msra.mxu0 0.0
    %1257 = vmatprep.subr.mxu0 0.0
    %1258 = vmatpush2.msra.mxu0 0.0
    %1259 = vmatprep.subr.mxu0 0.0
    %1260 = vmatpush2.msra.mxu0 0.0
    %1261 = vmatprep.subr.mxu0 0.0
    %1262 = vmatpush2.msra.mxu0 0.0
    %1263 = vmatprep.subr.mxu0 0.0
    %1264 = vmatpush2.msra.mxu0 0.0
    %1265 = vmatprep.subr.mxu0 0.0
    %1266 = vmatpush2.msra.mxu0 0.0
    %1267 = vmatprep.subr.mxu0 0.0
    %1268 = vmatpush2.msra.mxu0 0.0
    %1269 = vmatprep.subr.mxu0 0.0
    %1270 = vmatpush2.msra.mxu0 0.0
    %1271 = vmatprep.subr.mxu0 0.0
    %1272 = vmatpush2.msra.mxu0 0.0
    %1273 = vmatprep.subr.mxu0 0.0
    %1274 = vmatpush2.msra.mxu0 0.0
    %1275 = vmatprep.subr.mxu0 0.0
    %1276 = vmatpush2.msra.mxu0 0.0
    %1277 = vmatprep.subr.mxu0 0.0
    %1278 = vmatpush2.msra.mxu0 0.0
    %1279 = vmatprep.mubr.f32.mxu0 0.0
    %1280 = vmatmul.mubr.f32.gmra.mxu0 %v492
    %v1281 = vpop.f32.mrf.mxu0
    %v1282 = vadd.f32 0.0, %v1281
    %v1283 = vpop.f32.mrf.mxu0
    %1284 = vmatprep.mubr.f32.mxu0 0.0
    %1285 = vmatmul.mubr.f32.gmra.mxu0 %v495
    %v1286 = vpop.f32.mrf.mxu0
    %v1287 = vadd.f32 0.0, %v1286
    %v1288 = vpop.f32.mrf.mxu0
    %1289 = vdwg.mxu0
    %v1290 = vld [vmem:[%s29] sm:$0xff]
    %v1291 = vld [vmem:[%s29 + $0x8] sm:$0xff]
    %v1292 = vld [vmem:[%s29 + $0x10] sm:$0xff]
    %v1293 = vld [vmem:[%s29 + $0x18] sm:$0xff]
    %v1295 = vsel %vm409, %v768, 0
    %v1298 = vsel %vm409, %v769, 0
    %1300 = vmatprep.subr.mxu0 0.0
    %1301 = vmatpush1.msra.mxu0 0.0
    %1302 = vmatprep.subr.mxu0 0.0
    %1303 = vmatpush1.msra.mxu0 0.0
    %1304 = vmatprep.subr.mxu0 0.0
    %1305 = vmatpush1.msra.mxu0 0.0
    %1306 = vmatprep.subr.mxu0 0.0
    %1307 = vmatpush1.msra.mxu0 0.0
    %1308 = vmatprep.subr.mxu0 0.0
    %1309 = vmatpush1.msra.mxu0 0.0
    %1310 = vmatprep.subr.mxu0 0.0
    %1311 = vmatpush1.msra.mxu0 0.0
    %1312 = vmatprep.subr.mxu0 0.0
    %1313 = vmatpush1.msra.mxu0 0.0
    %1314 = vmatprep.subr.mxu0 0.0
    %1315 = vmatpush1.msra.mxu0 0.0
    %1316 = vmatprep.subr.mxu0 0.0
    %1317 = vmatpush1.msra.mxu0 0.0
    %1318 = vmatprep.subr.mxu0 0.0
    %1319 = vmatpush1.msra.mxu0 0.0
    %1320 = vmatprep.subr.mxu0 0.0
    %1321 = vmatpush1.msra.mxu0 0.0
    %1322 = vmatprep.subr.mxu0 0.0
    %1323 = vmatpush1.msra.mxu0 0.0
    %1324 = vmatprep.subr.mxu0 0.0
    %1325 = vmatpush1.msra.mxu0 %v1293
    %1326 = vmatprep.subr.mxu0 0.0
    %1327 = vmatpush1.msra.mxu0 %v1292
    %1328 = vmatprep.subr.mxu0 0.0
    %1329 = vmatpush1.msra.mxu0 %v1291
    %1330 = vmatprep.subr.mxu0 0.0
    %1331 = vmatpush1.msra.mxu0 %v1290
    %1332 = vmatprep.subr.mxu0 0.0
    %1333 = vmatpush2.msra.mxu0 0.0
    %1334 = vmatprep.subr.mxu0 0.0
    %1335 = vmatpush2.msra.mxu0 0.0
    %1336 = vmatprep.subr.mxu0 0.0
    %1337 = vmatpush2.msra.mxu0 0.0
    %1338 = vmatprep.subr.mxu0 0.0
    %1339 = vmatpush2.msra.mxu0 0.0
    %1340 = vmatprep.subr.mxu0 0.0
    %1341 = vmatpush2.msra.mxu0 0.0
    %1342 = vmatprep.subr.mxu0 0.0
    %1343 = vmatpush2.msra.mxu0 0.0
    %1344 = vmatprep.subr.mxu0 0.0
    %1345 = vmatpush2.msra.mxu0 0.0
    %1346 = vmatprep.subr.mxu0 0.0
    %1347 = vmatpush2.msra.mxu0 0.0
    %1348 = vmatprep.subr.mxu0 0.0
    %1349 = vmatpush2.msra.mxu0 0.0
    %1350 = vmatprep.subr.mxu0 0.0
    %1351 = vmatpush2.msra.mxu0 0.0
    %1352 = vmatprep.subr.mxu0 0.0
    %1353 = vmatpush2.msra.mxu0 0.0
    %1354 = vmatprep.subr.mxu0 0.0
    %1355 = vmatpush2.msra.mxu0 0.0
    %1356 = vmatprep.subr.mxu0 0.0
    %1357 = vmatpush2.msra.mxu0 0.0
    %1358 = vmatprep.subr.mxu0 0.0
    %1359 = vmatpush2.msra.mxu0 0.0
    %1360 = vmatprep.subr.mxu0 0.0
    %1361 = vmatpush2.msra.mxu0 0.0
    %1362 = vmatprep.subr.mxu0 0.0
    %1363 = vmatpush2.msra.mxu0 0.0
    %1364 = vmatprep.mubr.f32.mxu0 0.0
    %1365 = vmatmul.mubr.f32.gmra.mxu0 %v1295
    %v1366 = vpop.f32.mrf.mxu0
    %v1367 = vadd.f32 0.0, %v1366
    %v1368 = vpop.f32.mrf.mxu0
    %1369 = vmatprep.mubr.f32.mxu0 0.0
    %1370 = vmatmul.mubr.f32.gmra.mxu0 %v1298
    %v1371 = vpop.f32.mrf.mxu0
    %v1372 = vadd.f32 0.0, %v1371
    %v1373 = vpop.f32.mrf.mxu0
    %1374 = vdwg.mxu0
    %v1375 = vld [vmem:[#allocation17] sm:$0xff]
    %v1376 = vld [vmem:[#allocation17 + $0x8] sm:$0xff]
    %v1377 = vld [vmem:[#allocation17 + $0x10] sm:$0xff]
    %v1378 = vld [vmem:[#allocation17 + $0x18] sm:$0xff]
    %v1380 = vsel %vm409, %v1130, 0
    %v1383 = vsel %vm409, %v1131, 0
    %1385 = vmatprep.subr.mxu0 0.0
    %1386 = vmatpush1.msra.mxu0 0.0
    %1387 = vmatprep.subr.mxu0 0.0
    %1388 = vmatpush1.msra.mxu0 0.0
    %1389 = vmatprep.subr.mxu0 0.0
    %1390 = vmatpush1.msra.mxu0 0.0
    %1391 = vmatprep.subr.mxu0 0.0
    %1392 = vmatpush1.msra.mxu0 0.0
    %1393 = vmatprep.subr.mxu0 0.0
    %1394 = vmatpush1.msra.mxu0 0.0
    %1395 = vmatprep.subr.mxu0 0.0
    %1396 = vmatpush1.msra.mxu0 0.0
    %1397 = vmatprep.subr.mxu0 0.0
    %1398 = vmatpush1.msra.mxu0 0.0
    %1399 = vmatprep.subr.mxu0 0.0
    %1400 = vmatpush1.msra.mxu0 0.0
    %1401 = vmatprep.subr.mxu0 0.0
    %1402 = vmatpush1.msra.mxu0 0.0
    %1403 = vmatprep.subr.mxu0 0.0
    %1404 = vmatpush1.msra.mxu0 0.0
    %1405 = vmatprep.subr.mxu0 0.0
    %1406 = vmatpush1.msra.mxu0 0.0
    %1407 = vmatprep.subr.mxu0 0.0
    %1408 = vmatpush1.msra.mxu0 0.0
    %1409 = vmatprep.subr.mxu0 0.0
    %1410 = vmatpush1.msra.mxu0 %v1378
    %1411 = vmatprep.subr.mxu0 0.0
    %1412 = vmatpush1.msra.mxu0 %v1377
    %1413 = vmatprep.subr.mxu0 0.0
    %1414 = vmatpush1.msra.mxu0 %v1376
    %1415 = vmatprep.subr.mxu0 0.0
    %1416 = vmatpush1.msra.mxu0 %v1375
    %1417 = vmatprep.subr.mxu0 0.0
    %1418 = vmatpush2.msra.mxu0 0.0
    %1419 = vmatprep.subr.mxu0 0.0
    %1420 = vmatpush2.msra.mxu0 0.0
    %1421 = vmatprep.subr.mxu0 0.0
    %1422 = vmatpush2.msra.mxu0 0.0
    %1423 = vmatprep.subr.mxu0 0.0
    %1424 = vmatpush2.msra.mxu0 0.0
    %1425 = vmatprep.subr.mxu0 0.0
    %1426 = vmatpush2.msra.mxu0 0.0
    %1427 = vmatprep.subr.mxu0 0.0
    %1428 = vmatpush2.msra.mxu0 0.0
    %1429 = vmatprep.subr.mxu0 0.0
    %1430 = vmatpush2.msra.mxu0 0.0
    %1431 = vmatprep.subr.mxu0 0.0
    %1432 = vmatpush2.msra.mxu0 0.0
    %1433 = vmatprep.subr.mxu0 0.0
    %1434 = vmatpush2.msra.mxu0 0.0
    %1435 = vmatprep.subr.mxu0 0.0
    %1436 = vmatpush2.msra.mxu0 0.0
    %1437 = vmatprep.subr.mxu0 0.0
    %1438 = vmatpush2.msra.mxu0 0.0
    %1439 = vmatprep.subr.mxu0 0.0
    %1440 = vmatpush2.msra.mxu0 0.0
    %1441 = vmatprep.subr.mxu0 0.0
    %1442 = vmatpush2.msra.mxu0 0.0
    %1443 = vmatprep.subr.mxu0 0.0
    %1444 = vmatpush2.msra.mxu0 0.0
    %1445 = vmatprep.subr.mxu0 0.0
    %1446 = vmatpush2.msra.mxu0 0.0
    %1447 = vmatprep.subr.mxu0 0.0
    %1448 = vmatpush2.msra.mxu0 0.0
    %1449 = vmatprep.mubr.f32.mxu0 0.0
    %1450 = vmatmul.mubr.f32.gmra.mxu0 %v1380
    %v1451 = vpop.f32.mrf.mxu0
    %v1452 = vadd.f32 0.0, %v1451
    %v1453 = vpop.f32.mrf.mxu0
    %1454 = vmatprep.mubr.f32.mxu0 0.0
    %1455 = vmatmul.mubr.f32.gmra.mxu0 %v1383
    %v1456 = vpop.f32.mrf.mxu0
    %v1457 = vadd.f32 0.0, %v1456
    %v1458 = vpop.f32.mrf.mxu0
    %1459 = vdwg.mxu0
    %vm1460 = vcmask 31744
    %v1461 = vsel %vm1460, 1.0, 0.0
    %1462 = vadd.xlane.f32.xlu0 %v1461
    %v1463 = vpop.xlane.xlu0 %1462
    %v1464 = vrcp.pop %v1463
    %v1465 = vmul.f32 1.0, %v1464
    %v1467 = vsel %vm1460, %v1465, 0
    %vm1469 = vcmask 1043456
    %v1471 = vsel %vm1469, %v358, 0
    %1473 = vmatprep.subr.mxu0 0.0
    %1474 = vmatpush1.msra.mxu0 0.0
    %1475 = vmatprep.subr.mxu0 0.0
    %1476 = vmatpush1.msra.mxu0 0.0
    %1477 = vmatprep.subr.mxu0 0.0
    %1478 = vmatpush1.msra.mxu0 0.0
    %1479 = vmatprep.subr.mxu0 0.0
    %1480 = vmatpush1.msra.mxu0 0.0
    %1481 = vmatprep.subr.mxu0 0.0
    %1482 = vmatpush1.msra.mxu0 0.0
    %1483 = vmatprep.subr.mxu0 0.0
    %1484 = vmatpush1.msra.mxu0 0.0
    %1485 = vmatprep.subr.mxu0 0.0
    %1486 = vmatpush1.msra.mxu0 0.0
    %1487 = vmatprep.subr.mxu0 0.0
    %1488 = vmatpush1.msra.mxu0 0.0
    %1489 = vmatprep.subr.mxu0 0.0
    %1490 = vmatpush1.msra.mxu0 0.0
    %1491 = vmatprep.subr.mxu0 0.0
    %1492 = vmatpush1.msra.mxu0 0.0
    %1493 = vmatprep.subr.mxu0 0.0
    %1494 = vmatpush1.msra.mxu0 0.0
    %1495 = vmatprep.subr.mxu0 0.0
    %1496 = vmatpush1.msra.mxu0 0.0
    %1497 = vmatprep.subr.mxu0 0.0
    %1498 = vmatpush1.msra.mxu0 0.0
    %1499 = vmatprep.subr.mxu0 0.0
    %1500 = vmatpush1.msra.mxu0 0.0
    %1501 = vmatprep.subr.mxu0 0.0
    %1502 = vmatpush1.msra.mxu0 0.0
    %1503 = vmatprep.subr.mxu0 0.0
    %1504 = vmatpush1.msra.mxu0 %v1471
    %1505 = vmatprep.subr.mxu0 0.0
    %1506 = vmatpush2.msra.mxu0 0.0
    %1507 = vmatprep.subr.mxu0 0.0
    %1508 = vmatpush2.msra.mxu0 0.0
    %1509 = vmatprep.subr.mxu0 0.0
    %1510 = vmatpush2.msra.mxu0 0.0
    %1511 = vmatprep.subr.mxu0 0.0
    %1512 = vmatpush2.msra.mxu0 0.0
    %1513 = vmatprep.subr.mxu0 0.0
    %1514 = vmatpush2.msra.mxu0 0.0
    %1515 = vmatprep.subr.mxu0 0.0
    %1516 = vmatpush2.msra.mxu0 0.0
    %1517 = vmatprep.subr.mxu0 0.0
    %1518 = vmatpush2.msra.mxu0 0.0
    %1519 = vmatprep.subr.mxu0 0.0
    %1520 = vmatpush2.msra.mxu0 0.0
    %1521 = vmatprep.subr.mxu0 0.0
    %1522 = vmatpush2.msra.mxu0 0.0
    %1523 = vmatprep.subr.mxu0 0.0
    %1524 = vmatpush2.msra.mxu0 0.0
    %1525 = vmatprep.subr.mxu0 0.0
    %1526 = vmatpush2.msra.mxu0 0.0
    %1527 = vmatprep.subr.mxu0 0.0
    %1528 = vmatpush2.msra.mxu0 0.0
    %1529 = vmatprep.subr.mxu0 0.0
    %1530 = vmatpush2.msra.mxu0 0.0
    %1531 = vmatprep.subr.mxu0 0.0
    %1532 = vmatpush2.msra.mxu0 0.0
    %1533 = vmatprep.subr.mxu0 0.0
    %1534 = vmatpush2.msra.mxu0 0.0
    %1535 = vmatprep.subr.mxu0 0.0
    %1536 = vmatpush2.msra.mxu0 0.0
    %1537 = vmatprep.mubr.f32.mxu0 0.0
    %1538 = vmatmul.mubr.f32.gmra.mxu0 %v1467
    %v1539 = vpop.f32.mrf.mxu0
    %v1540 = vadd.f32 0.0, %v1539
    %v1541 = vpop.f32.mrf.mxu0
    %1542 = vmatprep.mubr.f32.mxu0 0.0
    %1543 = vmatmul.mubr.f32.gmra.mxu0 %v1467
    %v1544 = vpop.f32.mrf.mxu0
    %v1545 = vadd.f32 0.0, %v1544
    %v1546 = vpop.f32.mrf.mxu0
    %1547 = vmatprep.mubr.f32.mxu0 0.0
    %1548 = vmatmul.mubr.f32.gmra.mxu0 %v1467
    %v1549 = vpop.f32.mrf.mxu0
    %v1550 = vadd.f32 0.0, %v1549
    %v1551 = vpop.f32.mrf.mxu0
    %1552 = vmatprep.mubr.f32.mxu0 0.0
    %1553 = vmatmul.mubr.f32.gmra.mxu0 %v1467
    %v1554 = vpop.f32.mrf.mxu0
    %v1555 = vadd.f32 0.0, %v1554
    %v1556 = vpop.f32.mrf.mxu0
    %1557 = vmatprep.mubr.f32.mxu0 0.0
    %1558 = vmatmul.mubr.f32.gmra.mxu0 %v1467
    %v1559 = vpop.f32.mrf.mxu0
    %v1560 = vadd.f32 0.0, %v1559
    %v1561 = vpop.f32.mrf.mxu0
    %1562 = vmatprep.mubr.f32.mxu0 0.0
    %1563 = vmatmul.mubr.f32.gmra.mxu0 %v1467
    %v1564 = vpop.f32.mrf.mxu0
    %v1565 = vadd.f32 0.0, %v1564
    %v1566 = vpop.f32.mrf.mxu0
    %1567 = vmatprep.mubr.f32.mxu0 0.0
    %1568 = vmatmul.mubr.f32.gmra.mxu0 %v1467
    %v1569 = vpop.f32.mrf.mxu0
    %v1570 = vadd.f32 0.0, %v1569
    %v1571 = vpop.f32.mrf.mxu0
    %1572 = vmatprep.mubr.f32.mxu0 0.0
    %1573 = vmatmul.mubr.f32.gmra.mxu0 %v1467
    %v1574 = vpop.f32.mrf.mxu0
    %v1575 = vadd.f32 0.0, %v1574
    %v1576 = vpop.f32.mrf.mxu0
    %1577 = vdwg.mxu0
    %v1578 = vmul.f32 %v1540, %v1203
    %v1579 = vmul.f32 %v1545, %v1208
    %v1580 = vmul.f32 %v1550, %v1282
    %v1581 = vmul.f32 %v1555, %v1287
    %v1582 = vmul.f32 %v1560, %v1367
    %v1583 = vmul.f32 %v1565, %v1372
    %v1584 = vmul.f32 %v1570, %v1452
    %v1585 = vmul.f32 %v1575, %v1457
    %v1586 = vrot.slane %v1578, 4
    %v1587 = vadd.f32 %v1578, %v1586
    %v1588 = vrot.slane %v1587, 2
    %v1589 = vadd.f32 %v1587, %v1588
    %v1590 = vrot.slane %v1589, 1
    %v1591 = vadd.f32 %v1589, %v1590
    %v1592 = vrot.slane %v1579, 4
    %v1593 = vadd.f32 %v1579, %v1592
    %v1594 = vrot.slane %v1593, 2
    %v1595 = vadd.f32 %v1593, %v1594
    %v1596 = vrot.slane %v1595, 1
    %v1597 = vadd.f32 %v1595, %v1596
    %v1598 = vrot.slane %v1580, 4
    %v1599 = vadd.f32 %v1580, %v1598
    %v1600 = vrot.slane %v1599, 2
    %v1601 = vadd.f32 %v1599, %v1600
    %v1602 = vrot.slane %v1601, 1
    %v1603 = vadd.f32 %v1601, %v1602
    %v1604 = vrot.slane %v1581, 4
    %v1605 = vadd.f32 %v1581, %v1604
    %v1606 = vrot.slane %v1605, 2
    %v1607 = vadd.f32 %v1605, %v1606
    %v1608 = vrot.slane %v1607, 1
    %v1609 = vadd.f32 %v1607, %v1608
    %v1610 = vrot.slane %v1582, 4
    %v1611 = vadd.f32 %v1582, %v1610
    %v1612 = vrot.slane %v1611, 2
    %v1613 = vadd.f32 %v1611, %v1612
    %v1614 = vrot.slane %v1613, 1
    %v1615 = vadd.f32 %v1613, %v1614
    %v1616 = vrot.slane %v1583, 4
    %v1617 = vadd.f32 %v1583, %v1616
    %v1618 = vrot.slane %v1617, 2
    %v1619 = vadd.f32 %v1617, %v1618
    %v1620 = vrot.slane %v1619, 1
    %v1621 = vadd.f32 %v1619, %v1620
    %v1622 = vrot.slane %v1584, 4
    %v1623 = vadd.f32 %v1584, %v1622
    %v1624 = vrot.slane %v1623, 2
    %v1625 = vadd.f32 %v1623, %v1624
    %v1626 = vrot.slane %v1625, 1
    %v1627 = vadd.f32 %v1625, %v1626
    %v1628 = vrot.slane %v1585, 4
    %v1629 = vadd.f32 %v1585, %v1628
    %v1630 = vrot.slane %v1629, 2
    %v1631 = vadd.f32 %v1629, %v1630
    %v1632 = vrot.slane %v1631, 1
    %v1633 = vadd.f32 %v1631, %v1632
    %v1634 = vmul.f32 %v1591, %v1591
    %v1635 = vmul.f32 %v1597, %v1597
    %v1636 = vmul.f32 %v1603, %v1603
    %v1637 = vmul.f32 %v1609, %v1609
    %v1638 = vmul.f32 %v1615, %v1615
    %v1639 = vmul.f32 %v1621, %v1621
    %v1640 = vmul.f32 %v1627, %v1627
    %v1641 = vmul.f32 %v1633, %v1633
    %vm1650 = vcmask 1041409
    %v1651 = vsel %vm1650, %v1635, %v1634
    %vm1652 = vcmask 1042434
    %v1653 = vsel %vm1652, %v1636, %v1651
    %vm1654 = vcmask 1043459
    %v1655 = vsel %vm1654, %v1637, %v1653
    %vm1656 = vcmask 1044484
    %v1657 = vsel %vm1656, %v1638, %v1655
    %vm1658 = vcmask 1045509
    %v1659 = vsel %vm1658, %v1639, %v1657
    %vm1660 = vcmask 1046534
    %v1661 = vsel %vm1660, %v1640, %v1659
    %vm1662 = vcmask 1047559
    %v1663 = vsel %vm1662, %v1641, %v1661
    %1665 = vmatprep.subr.mxu0 0.0
    %1666 = vmatpush1.msra.mxu0 %v374
    %1667 = vmatprep.subr.mxu0 0.0
    %1668 = vmatpush1.msra.mxu0 %v373
    %1669 = vmatprep.subr.mxu0 0.0
    %1670 = vmatpush1.msra.mxu0 %v372
    %1671 = vmatprep.subr.mxu0 0.0
    %1672 = vmatpush1.msra.mxu0 %v371
    %1673 = vmatprep.subr.mxu0 0.0
    %1674 = vmatpush1.msra.mxu0 %v370
    %1675 = vmatprep.subr.mxu0 0.0
    %1676 = vmatpush1.msra.mxu0 %v369
    %1677 = vmatprep.subr.mxu0 0.0
    %1678 = vmatpush1.msra.mxu0 %v368
    %1679 = vmatprep.subr.mxu0 0.0
    %1680 = vmatpush1.msra.mxu0 %v367
    %1681 = vmatprep.subr.mxu0 0.0
    %1682 = vmatpush1.msra.mxu0 %v366
    %1683 = vmatprep.subr.mxu0 0.0
    %1684 = vmatpush1.msra.mxu0 %v365
    %1685 = vmatprep.subr.mxu0 0.0
    %1686 = vmatpush1.msra.mxu0 %v364
    %1687 = vmatprep.subr.mxu0 0.0
    %1688 = vmatpush1.msra.mxu0 %v363
    %1689 = vmatprep.subr.mxu0 0.0
    %1690 = vmatpush1.msra.mxu0 %v362
    %1691 = vmatprep.subr.mxu0 0.0
    %1692 = vmatpush1.msra.mxu0 %v361
    %1693 = vmatprep.subr.mxu0 0.0
    %1694 = vmatpush1.msra.mxu0 %v360
    %1695 = vmatprep.subr.mxu0 0.0
    %1696 = vmatpush1.msra.mxu0 %v359
    %1697 = vmatprep.subr.mxu0 0.0
    %1698 = vmatpush2.msra.mxu0 0.0
    %1699 = vmatprep.subr.mxu0 0.0
    %1700 = vmatpush2.msra.mxu0 0.0
    %1701 = vmatprep.subr.mxu0 0.0
    %1702 = vmatpush2.msra.mxu0 0.0
    %1703 = vmatprep.subr.mxu0 0.0
    %1704 = vmatpush2.msra.mxu0 0.0
    %1705 = vmatprep.subr.mxu0 0.0
    %1706 = vmatpush2.msra.mxu0 0.0
    %1707 = vmatprep.subr.mxu0 0.0
    %1708 = vmatpush2.msra.mxu0 0.0
    %1709 = vmatprep.subr.mxu0 0.0
    %1710 = vmatpush2.msra.mxu0 0.0
    %1711 = vmatprep.subr.mxu0 0.0
    %1712 = vmatpush2.msra.mxu0 0.0
    %1713 = vmatprep.subr.mxu0 0.0
    %1714 = vmatpush2.msra.mxu0 0.0
    %1715 = vmatprep.subr.mxu0 0.0
    %1716 = vmatpush2.msra.mxu0 0.0
    %1717 = vmatprep.subr.mxu0 0.0
    %1718 = vmatpush2.msra.mxu0 0.0
    %1719 = vmatprep.subr.mxu0 0.0
    %1720 = vmatpush2.msra.mxu0 0.0
    %1721 = vmatprep.subr.mxu0 0.0
    %1722 = vmatpush2.msra.mxu0 0.0
    %1723 = vmatprep.subr.mxu0 0.0
    %1724 = vmatpush2.msra.mxu0 0.0
    %1725 = vmatprep.subr.mxu0 0.0
    %1726 = vmatpush2.msra.mxu0 0.0
    %1727 = vmatprep.subr.mxu0 0.0
    %1728 = vmatpush2.msra.mxu0 0.0
    %1729 = vmatprep.mubr.f32.mxu0 0.0
    %1730 = vmatmul.mubr.f32.gmra.mxu0 %v1663
    %v1731 = vpop.f32.mrf.mxu0
    %v1732 = vadd.f32 0.0, %v1731
    %v1733 = vpop.f32.mrf.mxu0
    %1734 = vdwg.mxu0
    %v1736 = vsel %vm1460, %v1732, 0
    %1738 = vmatprep.subr.mxu0 0.0
    %1739 = vmatpush1.msra.mxu0 0.0
    %1740 = vmatprep.subr.mxu0 0.0
    %1741 = vmatpush1.msra.mxu0 0.0
    %1742 = vmatprep.subr.mxu0 0.0
    %1743 = vmatpush1.msra.mxu0 0.0
    %1744 = vmatprep.subr.mxu0 0.0
    %1745 = vmatpush1.msra.mxu0 0.0
    %1746 = vmatprep.subr.mxu0 0.0
    %1747 = vmatpush1.msra.mxu0 0.0
    %1748 = vmatprep.subr.mxu0 0.0
    %1749 = vmatpush1.msra.mxu0 0.0
    %1750 = vmatprep.subr.mxu0 0.0
    %1751 = vmatpush1.msra.mxu0 0.0
    %1752 = vmatprep.subr.mxu0 0.0
    %1753 = vmatpush1.msra.mxu0 0.0
    %1754 = vmatprep.subr.mxu0 0.0
    %1755 = vmatpush1.msra.mxu0 0.0
    %1756 = vmatprep.subr.mxu0 0.0
    %1757 = vmatpush1.msra.mxu0 0.0
    %1758 = vmatprep.subr.mxu0 0.0
    %1759 = vmatpush1.msra.mxu0 0.0
    %1760 = vmatprep.subr.mxu0 0.0
    %1761 = vmatpush1.msra.mxu0 0.0
    %1762 = vmatprep.subr.mxu0 0.0
    %1763 = vmatpush1.msra.mxu0 0.0
    %1764 = vmatprep.subr.mxu0 0.0
    %1765 = vmatpush1.msra.mxu0 0.0
    %1766 = vmatprep.subr.mxu0 0.0
    %1767 = vmatpush1.msra.mxu0 0.0
    %1768 = vmatprep.subr.mxu0 0.0
    %1769 = vmatpush1.msra.mxu0 %v1471
    %1770 = vmatprep.subr.mxu0 0.0
    %1771 = vmatpush2.msra.mxu0 0.0
    %1772 = vmatprep.subr.mxu0 0.0
    %1773 = vmatpush2.msra.mxu0 0.0
    %1774 = vmatprep.subr.mxu0 0.0
    %1775 = vmatpush2.msra.mxu0 0.0
    %1776 = vmatprep.subr.mxu0 0.0
    %1777 = vmatpush2.msra.mxu0 0.0
    %1778 = vmatprep.subr.mxu0 0.0
    %1779 = vmatpush2.msra.mxu0 0.0
    %1780 = vmatprep.subr.mxu0 0.0
    %1781 = vmatpush2.msra.mxu0 0.0
    %1782 = vmatprep.subr.mxu0 0.0
    %1783 = vmatpush2.msra.mxu0 0.0
    %1784 = vmatprep.subr.mxu0 0.0
    %1785 = vmatpush2.msra.mxu0 0.0
    %1786 = vmatprep.subr.mxu0 0.0
    %1787 = vmatpush2.msra.mxu0 0.0
    %1788 = vmatprep.subr.mxu0 0.0
    %1789 = vmatpush2.msra.mxu0 0.0
    %1790 = vmatprep.subr.mxu0 0.0
    %1791 = vmatpush2.msra.mxu0 0.0
    %1792 = vmatprep.subr.mxu0 0.0
    %1793 = vmatpush2.msra.mxu0 0.0
    %1794 = vmatprep.subr.mxu0 0.0
    %1795 = vmatpush2.msra.mxu0 0.0
    %1796 = vmatprep.subr.mxu0 0.0
    %1797 = vmatpush2.msra.mxu0 0.0
    %1798 = vmatprep.subr.mxu0 0.0
    %1799 = vmatpush2.msra.mxu0 0.0
    %1800 = vmatprep.subr.mxu0 0.0
    %1801 = vmatpush2.msra.mxu0 0.0
    %1802 = vmatprep.mubr.f32.mxu0 0.0
    %1803 = vmatmul.mubr.f32.gmra.mxu0 %v1736
    %v1804 = vpop.f32.mrf.mxu0
    %v1805 = vadd.f32 0.0, %v1804
    %v1806 = vpop.f32.mrf.mxu0
    %1807 = vdwg.mxu0
    %v1808 = vadd.f32 %v1805, 1.0
    %v1809 = vrcp.pop %v1808
    %v1810 = vmul.f32 %v1805, %v1809
    %v1812 = vrot.slane %v1810, 1
    %v1813 = vrot.slane %v1810, 2
    %v1814 = vrot.slane %v1810, 3
    %v1815 = vrot.slane %v1810, 4
    %v1816 = vrot.slane %v1810, 5
    %v1817 = vrot.slane %v1810, 6
    %v1818 = vrot.slane %v1810, 7
    %v1827 = vmul.f32 %v1591, %v1810
    %v1828 = vmul.f32 %v1597, %v1812
    %v1829 = vmul.f32 %v1603, %v1813
    %v1830 = vmul.f32 %v1609, %v1814
    %v1831 = vmul.f32 %v1615, %v1815
    %v1832 = vmul.f32 %v1621, %v1816
    %v1833 = vmul.f32 %v1627, %v1817
    %v1834 = vmul.f32 %v1633, %v1818
    %v1835 = vadd.f32 %v1805, 1e-08
    %v1836 = vrsqrt.pop %v1835
    %v1838 = vrot.slane %v1836, 1
    %v1839 = vrot.slane %v1836, 2
    %v1840 = vrot.slane %v1836, 3
    %v1841 = vrot.slane %v1836, 4
    %v1842 = vrot.slane %v1836, 5
    %v1843 = vrot.slane %v1836, 6
    %v1844 = vrot.slane %v1836, 7
    %v1853 = vmul.f32 %v1827, %v1836
    %v1854 = vmul.f32 %v1828, %v1838
    %v1855 = vmul.f32 %v1829, %v1839
    %v1856 = vmul.f32 %v1830, %v1840
    %v1857 = vmul.f32 %v1831, %v1841
    %v1858 = vmul.f32 %v1832, %v1842
    %v1859 = vmul.f32 %v1833, %v1843
    %v1860 = vmul.f32 %v1834, %v1844
    %v1861 = vlaneseq
    %v1862 = vshrl.u32 %v1861, 7
    %v1863 = vsub.s32 0, %v1862
    %v1864 = vrot.slane %v1853, %v1863
    %v1865 = vlaneseq
    %v1866 = vshrl.u32 %v1865, 7
    %v1867 = vsub.s32 0, %v1866
    %v1868 = vrot.slane %v1854, %v1867
    %v1869 = vlaneseq
    %v1870 = vshrl.u32 %v1869, 7
    %v1871 = vsub.s32 0, %v1870
    %v1872 = vrot.slane %v1855, %v1871
    %v1873 = vlaneseq
    %v1874 = vshrl.u32 %v1873, 7
    %v1875 = vsub.s32 0, %v1874
    %v1876 = vrot.slane %v1856, %v1875
    %v1877 = vlaneseq
    %v1878 = vshrl.u32 %v1877, 7
    %v1879 = vsub.s32 0, %v1878
    %v1880 = vrot.slane %v1857, %v1879
    %v1881 = vlaneseq
    %v1882 = vshrl.u32 %v1881, 7
    %v1883 = vsub.s32 0, %v1882
    %v1884 = vrot.slane %v1858, %v1883
    %v1885 = vlaneseq
    %v1886 = vshrl.u32 %v1885, 7
    %v1887 = vsub.s32 0, %v1886
    %v1888 = vrot.slane %v1859, %v1887
    %v1889 = vlaneseq
    %v1890 = vshrl.u32 %v1889, 7
    %v1891 = vsub.s32 0, %v1890
    %v1892 = vrot.slane %v1860, %v1891
    %v1893 = vmul.f32 %v1203, %v1864
    %v1894 = vmul.f32 %v1208, %v1868
    %v1895 = vmul.f32 %v1282, %v1872
    %v1896 = vmul.f32 %v1287, %v1876
    %v1897 = vmul.f32 %v1367, %v1880
    %v1898 = vmul.f32 %v1372, %v1884
    %v1899 = vmul.f32 %v1452, %v1888
    %v1900 = vmul.f32 %v1457, %v1892
    %1901 = vmatprep.subr.mxu0 0.0
    %1902 = vmatpush1.msra.mxu0 %v374
    %1903 = vmatprep.subr.mxu0 0.0
    %1904 = vmatpush1.msra.mxu0 %v373
    %1905 = vmatprep.subr.mxu0 0.0
    %1906 = vmatpush1.msra.mxu0 %v372
    %1907 = vmatprep.subr.mxu0 0.0
    %1908 = vmatpush1.msra.mxu0 %v371
    %1909 = vmatprep.subr.mxu0 0.0
    %1910 = vmatpush1.msra.mxu0 %v370
    %1911 = vmatprep.subr.mxu0 0.0
    %1912 = vmatpush1.msra.mxu0 %v369
    %1913 = vmatprep.subr.mxu0 0.0
    %1914 = vmatpush1.msra.mxu0 %v368
    %1915 = vmatprep.subr.mxu0 0.0
    %1916 = vmatpush1.msra.mxu0 %v367
    %1917 = vmatprep.subr.mxu0 0.0
    %1918 = vmatpush1.msra.mxu0 %v366
    %1919 = vmatprep.subr.mxu0 0.0
    %1920 = vmatpush1.msra.mxu0 %v365
    %1921 = vmatprep.subr.mxu0 0.0
    %1922 = vmatpush1.msra.mxu0 %v364
    %1923 = vmatprep.subr.mxu0 0.0
    %1924 = vmatpush1.msra.mxu0 %v363
    %1925 = vmatprep.subr.mxu0 0.0
    %1926 = vmatpush1.msra.mxu0 %v362
    %1927 = vmatprep.subr.mxu0 0.0
    %1928 = vmatpush1.msra.mxu0 %v361
    %1929 = vmatprep.subr.mxu0 0.0
    %1930 = vmatpush1.msra.mxu0 %v360
    %1931 = vmatprep.subr.mxu0 0.0
    %1932 = vmatpush1.msra.mxu0 %v359
    %1933 = vmatprep.subr.mxu0 0.0
    %1934 = vmatpush2.msra.mxu0 0.0
    %1935 = vmatprep.subr.mxu0 0.0
    %1936 = vmatpush2.msra.mxu0 0.0
    %1937 = vmatprep.subr.mxu0 0.0
    %1938 = vmatpush2.msra.mxu0 0.0
    %1939 = vmatprep.subr.mxu0 0.0
    %1940 = vmatpush2.msra.mxu0 0.0
    %1941 = vmatprep.subr.mxu0 0.0
    %1942 = vmatpush2.msra.mxu0 0.0
    %1943 = vmatprep.subr.mxu0 0.0
    %1944 = vmatpush2.msra.mxu0 0.0
    %1945 = vmatprep.subr.mxu0 0.0
    %1946 = vmatpush2.msra.mxu0 0.0
    %1947 = vmatprep.subr.mxu0 0.0
    %1948 = vmatpush2.msra.mxu0 0.0
    %1949 = vmatprep.subr.mxu0 0.0
    %1950 = vmatpush2.msra.mxu0 0.0
    %1951 = vmatprep.subr.mxu0 0.0
    %1952 = vmatpush2.msra.mxu0 0.0
    %1953 = vmatprep.subr.mxu0 0.0
    %1954 = vmatpush2.msra.mxu0 0.0
    %1955 = vmatprep.subr.mxu0 0.0
    %1956 = vmatpush2.msra.mxu0 0.0
    %1957 = vmatprep.subr.mxu0 0.0
    %1958 = vmatpush2.msra.mxu0 0.0
    %1959 = vmatprep.subr.mxu0 0.0
    %1960 = vmatpush2.msra.mxu0 0.0
    %1961 = vmatprep.subr.mxu0 0.0
    %1962 = vmatpush2.msra.mxu0 0.0
    %1963 = vmatprep.subr.mxu0 0.0
    %1964 = vmatpush2.msra.mxu0 0.0
    %1965 = vmatprep.mubr.f32.mxu0 0.0
    %1966 = vmatmul.mubr.f32.gmra.mxu0 %v1893
    %v1967 = vpop.f32.mrf.mxu0
    %v1968 = vadd.f32 0.0, %v1967
    %v1969 = vpop.f32.mrf.mxu0
    %1970 = vmatprep.mubr.f32.mxu0 0.0
    %1971 = vmatmul.mubr.f32.gmra.mxu0 %v1894
    %v1972 = vpop.f32.mrf.mxu0
    %v1973 = vadd.f32 0.0, %v1972
    %v1974 = vpop.f32.mrf.mxu0
    %1975 = vmatprep.mubr.f32.mxu0 0.0
    %1976 = vmatmul.mubr.f32.gmra.mxu0 %v1895
    %v1977 = vpop.f32.mrf.mxu0
    %v1978 = vadd.f32 0.0, %v1977
    %v1979 = vpop.f32.mrf.mxu0
    %1980 = vmatprep.mubr.f32.mxu0 0.0
    %1981 = vmatmul.mubr.f32.gmra.mxu0 %v1896
    %v1982 = vpop.f32.mrf.mxu0
    %v1983 = vadd.f32 0.0, %v1982
    %v1984 = vpop.f32.mrf.mxu0
    %1985 = vmatprep.mubr.f32.mxu0 0.0
    %1986 = vmatmul.mubr.f32.gmra.mxu0 %v1897
    %v1987 = vpop.f32.mrf.mxu0
    %v1988 = vadd.f32 0.0, %v1987
    %v1989 = vpop.f32.mrf.mxu0
    %1990 = vmatprep.mubr.f32.mxu0 0.0
    %1991 = vmatmul.mubr.f32.gmra.mxu0 %v1898
    %v1992 = vpop.f32.mrf.mxu0
    %v1993 = vadd.f32 0.0, %v1992
    %v1994 = vpop.f32.mrf.mxu0
    %1995 = vmatprep.mubr.f32.mxu0 0.0
    %1996 = vmatmul.mubr.f32.gmra.mxu0 %v1899
    %v1997 = vpop.f32.mrf.mxu0
    %v1998 = vadd.f32 0.0, %v1997
    %v1999 = vpop.f32.mrf.mxu0
    %2000 = vmatprep.mubr.f32.mxu0 0.0
    %2001 = vmatmul.mubr.f32.gmra.mxu0 %v1900
    %v2002 = vpop.f32.mrf.mxu0
    %v2003 = vadd.f32 0.0, %v2002
    %v2004 = vpop.f32.mrf.mxu0
    %2005 = vdwg.mxu0
    %v2006 = vadd.f32 %v1968, 0.0
    %v2007 = vadd.f32 %v1973, 0.0
    %v2008 = vadd.f32 %v1978, 0.0
    %v2009 = vadd.f32 %v1983, 0.0
    %v2010 = vadd.f32 %v1988, 0.0
    %v2011 = vadd.f32 %v1993, 0.0
    %v2012 = vadd.f32 %v1998, 0.0
    %v2013 = vadd.f32 %v2003, 0.0
    %v2014 = vsel %vm1460, %v2006, -inf
    %2015 = vmax.xlane.f32.xlu0 %v2014
    %v2016 = vpop.xlane.xlu0 %2015
    %v2017 = vsel %vm1460, %v2007, -inf
    %2018 = vmax.xlane.f32.xlu0 %v2017
    %v2019 = vpop.xlane.xlu0 %2018
    %v2020 = vsel %vm1460, %v2008, -inf
    %2021 = vmax.xlane.f32.xlu0 %v2020
    %v2022 = vpop.xlane.xlu0 %2021
    %v2023 = vsel %vm1460, %v2009, -inf
    %2024 = vmax.xlane.f32.xlu0 %v2023
    %v2025 = vpop.xlane.xlu0 %2024
    %v2026 = vsel %vm1460, %v2010, -inf
    %2027 = vmax.xlane.f32.xlu0 %v2026
    %v2028 = vpop.xlane.xlu0 %2027
    %v2029 = vsel %vm1460, %v2011, -inf
    %2030 = vmax.xlane.f32.xlu0 %v2029
    %v2031 = vpop.xlane.xlu0 %2030
    %v2032 = vsel %vm1460, %v2012, -inf
    %2033 = vmax.xlane.f32.xlu0 %v2032
    %v2034 = vpop.xlane.xlu0 %2033
    %v2035 = vsel %vm1460, %v2013, -inf
    %2036 = vmax.xlane.f32.xlu0 %v2035
    %v2037 = vpop.xlane.xlu0 %2036
    %v2038 = vsub.f32 %v2006, %v2016
    %v2039 = vsub.f32 %v2007, %v2019
    %v2040 = vsub.f32 %v2008, %v2022
    %v2041 = vsub.f32 %v2009, %v2025
    %v2042 = vsub.f32 %v2010, %v2028
    %v2043 = vsub.f32 %v2011, %v2031
    %v2044 = vsub.f32 %v2012, %v2034
    %v2045 = vsub.f32 %v2013, %v2037
    %v2046 = vmul.f32 %v2038, 1.442695
    %v2047 = vpow.pop %v2046
    %v2048 = vmul.f32 %v2039, 1.442695
    %v2049 = vpow.pop %v2048
    %v2050 = vmul.f32 %v2040, 1.442695
    %v2051 = vpow.pop %v2050
    %v2052 = vmul.f32 %v2041, 1.442695
    %v2053 = vpow.pop %v2052
    %v2054 = vmul.f32 %v2042, 1.442695
    %v2055 = vpow.pop %v2054
    %v2056 = vmul.f32 %v2043, 1.442695
    %v2057 = vpow.pop %v2056
    %v2058 = vmul.f32 %v2044, 1.442695
    %v2059 = vpow.pop %v2058
    %v2060 = vmul.f32 %v2045, 1.442695
    %v2061 = vpow.pop %v2060
    %v2062 = vsel %vm1460, %v2047, 0.0
    %2063 = vadd.xlane.f32.xlu0 %v2062
    %v2064 = vpop.xlane.xlu0 %2063
    %v2065 = vsel %vm1460, %v2049, 0.0
    %2066 = vadd.xlane.f32.xlu0 %v2065
    %v2067 = vpop.xlane.xlu0 %2066
    %v2068 = vsel %vm1460, %v2051, 0.0
    %2069 = vadd.xlane.f32.xlu0 %v2068
    %v2070 = vpop.xlane.xlu0 %2069
    %v2071 = vsel %vm1460, %v2053, 0.0
    %2072 = vadd.xlane.f32.xlu0 %v2071
    %v2073 = vpop.xlane.xlu0 %2072
    %v2074 = vsel %vm1460, %v2055, 0.0
    %2075 = vadd.xlane.f32.xlu0 %v2074
    %v2076 = vpop.xlane.xlu0 %2075
    %v2077 = vsel %vm1460, %v2057, 0.0
    %2078 = vadd.xlane.f32.xlu0 %v2077
    %v2079 = vpop.xlane.xlu0 %2078
    %v2080 = vsel %vm1460, %v2059, 0.0
    %2081 = vadd.xlane.f32.xlu0 %v2080
    %v2082 = vpop.xlane.xlu0 %2081
    %v2083 = vsel %vm1460, %v2061, 0.0
    %2084 = vadd.xlane.f32.xlu0 %v2083
    %v2085 = vpop.xlane.xlu0 %2084
    %v2086 = vrcp.pop %v2064
    %v2087 = vmul.f32 %v2047, %v2086
    %v2088 = vrcp.pop %v2067
    %v2089 = vmul.f32 %v2049, %v2088
    %v2090 = vrcp.pop %v2070
    %v2091 = vmul.f32 %v2051, %v2090
    %v2092 = vrcp.pop %v2073
    %v2093 = vmul.f32 %v2053, %v2092
    %v2094 = vrcp.pop %v2076
    %v2095 = vmul.f32 %v2055, %v2094
    %v2096 = vrcp.pop %v2079
    %v2097 = vmul.f32 %v2057, %v2096
    %v2098 = vrcp.pop %v2082
    %v2099 = vmul.f32 %v2059, %v2098
    %v2100 = vrcp.pop %v2085
    %v2101 = vmul.f32 %v2061, %v2100
    %v2103 = vsel %vm1460, %v2087, 0
    %v2106 = vsel %vm1460, %v2089, 0
    %v2109 = vsel %vm1460, %v2091, 0
    %v2112 = vsel %vm1460, %v2093, 0
    %v2115 = vsel %vm1460, %v2095, 0
    %v2118 = vsel %vm1460, %v2097, 0
    %v2121 = vsel %vm1460, %v2099, 0
    %v2124 = vsel %vm1460, %v2101, 0
    %2126 = vmatprep.subr.mxu0 0.0
    %2127 = vmatpush1.msra.mxu0 0.0
    %2128 = vmatprep.subr.mxu0 0.0
    %2129 = vmatpush1.msra.mxu0 0.0
    %2130 = vmatprep.subr.mxu0 0.0
    %2131 = vmatpush1.msra.mxu0 0.0
    %2132 = vmatprep.subr.mxu0 0.0
    %2133 = vmatpush1.msra.mxu0 0.0
    %2134 = vmatprep.subr.mxu0 0.0
    %2135 = vmatpush1.msra.mxu0 0.0
    %2136 = vmatprep.subr.mxu0 0.0
    %2137 = vmatpush1.msra.mxu0 0.0
    %2138 = vmatprep.subr.mxu0 0.0
    %2139 = vmatpush1.msra.mxu0 0.0
    %2140 = vmatprep.subr.mxu0 0.0
    %2141 = vmatpush1.msra.mxu0 0.0
    %2142 = vmatprep.subr.mxu0 0.0
    %2143 = vmatpush1.msra.mxu0 0.0
    %2144 = vmatprep.subr.mxu0 0.0
    %2145 = vmatpush1.msra.mxu0 0.0
    %2146 = vmatprep.subr.mxu0 0.0
    %2147 = vmatpush1.msra.mxu0 0.0
    %2148 = vmatprep.subr.mxu0 0.0
    %2149 = vmatpush1.msra.mxu0 0.0
    %2150 = vmatprep.subr.mxu0 0.0
    %2151 = vmatpush1.msra.mxu0 0.0
    %2152 = vmatprep.subr.mxu0 0.0
    %2153 = vmatpush1.msra.mxu0 0.0
    %2154 = vmatprep.subr.mxu0 0.0
    %2155 = vmatpush1.msra.mxu0 0.0
    %2156 = vmatprep.subr.mxu0 0.0
    %2157 = vmatpush1.msra.mxu0 %v1471
    %2158 = vmatprep.subr.mxu0 0.0
    %2159 = vmatpush2.msra.mxu0 0.0
    %2160 = vmatprep.subr.mxu0 0.0
    %2161 = vmatpush2.msra.mxu0 0.0
    %2162 = vmatprep.subr.mxu0 0.0
    %2163 = vmatpush2.msra.mxu0 0.0
    %2164 = vmatprep.subr.mxu0 0.0
    %2165 = vmatpush2.msra.mxu0 0.0
    %2166 = vmatprep.subr.mxu0 0.0
    %2167 = vmatpush2.msra.mxu0 0.0
    %2168 = vmatprep.subr.mxu0 0.0
    %2169 = vmatpush2.msra.mxu0 0.0
    %2170 = vmatprep.subr.mxu0 0.0
    %2171 = vmatpush2.msra.mxu0 0.0
    %2172 = vmatprep.subr.mxu0 0.0
    %2173 = vmatpush2.msra.mxu0 0.0
    %2174 = vmatprep.subr.mxu0 0.0
    %2175 = vmatpush2.msra.mxu0 0.0
    %2176 = vmatprep.subr.mxu0 0.0
    %2177 = vmatpush2.msra.mxu0 0.0
    %2178 = vmatprep.subr.mxu0 0.0
    %2179 = vmatpush2.msra.mxu0 0.0
    %2180 = vmatprep.subr.mxu0 0.0
    %2181 = vmatpush2.msra.mxu0 0.0
    %2182 = vmatprep.subr.mxu0 0.0
    %2183 = vmatpush2.msra.mxu0 0.0
    %2184 = vmatprep.subr.mxu0 0.0
    %2185 = vmatpush2.msra.mxu0 0.0
    %2186 = vmatprep.subr.mxu0 0.0
    %2187 = vmatpush2.msra.mxu0 0.0
    %2188 = vmatprep.subr.mxu0 0.0
    %2189 = vmatpush2.msra.mxu0 0.0
    %2190 = vmatprep.mubr.f32.mxu0 0.0
    %2191 = vmatmul.mubr.f32.gmra.mxu0 %v2103
    %v2192 = vpop.f32.mrf.mxu0
    %v2193 = vadd.f32 0.0, %v2192
    %v2194 = vpop.f32.mrf.mxu0
    %2195 = vmatprep.mubr.f32.mxu0 0.0
    %2196 = vmatmul.mubr.f32.gmra.mxu0 %v2106
    %v2197 = vpop.f32.mrf.mxu0
    %v2198 = vadd.f32 0.0, %v2197
    %v2199 = vpop.f32.mrf.mxu0
    %2200 = vmatprep.mubr.f32.mxu0 0.0
    %2201 = vmatmul.mubr.f32.gmra.mxu0 %v2109
    %v2202 = vpop.f32.mrf.mxu0
    %v2203 = vadd.f32 0.0, %v2202
    %v2204 = vpop.f32.mrf.mxu0
    %2205 = vmatprep.mubr.f32.mxu0 0.0
    %2206 = vmatmul.mubr.f32.gmra.mxu0 %v2112
    %v2207 = vpop.f32.mrf.mxu0
    %v2208 = vadd.f32 0.0, %v2207
    %v2209 = vpop.f32.mrf.mxu0
    %2210 = vmatprep.mubr.f32.mxu0 0.0
    %2211 = vmatmul.mubr.f32.gmra.mxu0 %v2115
    %v2212 = vpop.f32.mrf.mxu0
    %v2213 = vadd.f32 0.0, %v2212
    %v2214 = vpop.f32.mrf.mxu0
    %2215 = vmatprep.mubr.f32.mxu0 0.0
    %2216 = vmatmul.mubr.f32.gmra.mxu0 %v2118
    %v2217 = vpop.f32.mrf.mxu0
    %v2218 = vadd.f32 0.0, %v2217
    %v2219 = vpop.f32.mrf.mxu0
    %2220 = vmatprep.mubr.f32.mxu0 0.0
    %2221 = vmatmul.mubr.f32.gmra.mxu0 %v2121
    %v2222 = vpop.f32.mrf.mxu0
    %v2223 = vadd.f32 0.0, %v2222
    %v2224 = vpop.f32.mrf.mxu0
    %2225 = vmatprep.mubr.f32.mxu0 0.0
    %2226 = vmatmul.mubr.f32.gmra.mxu0 %v2124
    %v2227 = vpop.f32.mrf.mxu0
    %v2228 = vadd.f32 0.0, %v2227
    %v2229 = vpop.f32.mrf.mxu0
    %2230 = vdwg.mxu0
    %v2231 = vmul.f32 %v2193, %v1203
    %v2232 = vmul.f32 %v2198, %v1208
    %v2233 = vmul.f32 %v2203, %v1282
    %v2234 = vmul.f32 %v2208, %v1287
    %v2235 = vmul.f32 %v2213, %v1367
    %v2236 = vmul.f32 %v2218, %v1372
    %v2237 = vmul.f32 %v2223, %v1452
    %v2238 = vmul.f32 %v2228, %v1457
    %v2239 = vrot.slane %v2231, 4
    %v2240 = vadd.f32 %v2231, %v2239
    %v2241 = vrot.slane %v2240, 2
    %v2242 = vadd.f32 %v2240, %v2241
    %v2243 = vrot.slane %v2242, 1
    %v2244 = vadd.f32 %v2242, %v2243
    %v2245 = vrot.slane %v2232, 4
    %v2246 = vadd.f32 %v2232, %v2245
    %v2247 = vrot.slane %v2246, 2
    %v2248 = vadd.f32 %v2246, %v2247
    %v2249 = vrot.slane %v2248, 1
    %v2250 = vadd.f32 %v2248, %v2249
    %v2251 = vrot.slane %v2233, 4
    %v2252 = vadd.f32 %v2233, %v2251
    %v2253 = vrot.slane %v2252, 2
    %v2254 = vadd.f32 %v2252, %v2253
    %v2255 = vrot.slane %v2254, 1
    %v2256 = vadd.f32 %v2254, %v2255
    %v2257 = vrot.slane %v2234, 4
    %v2258 = vadd.f32 %v2234, %v2257
    %v2259 = vrot.slane %v2258, 2
    %v2260 = vadd.f32 %v2258, %v2259
    %v2261 = vrot.slane %v2260, 1
    %v2262 = vadd.f32 %v2260, %v2261
    %v2263 = vrot.slane %v2235, 4
    %v2264 = vadd.f32 %v2235, %v2263
    %v2265 = vrot.slane %v2264, 2
    %v2266 = vadd.f32 %v2264, %v2265
    %v2267 = vrot.slane %v2266, 1
    %v2268 = vadd.f32 %v2266, %v2267
    %v2269 = vrot.slane %v2236, 4
    %v2270 = vadd.f32 %v2236, %v2269
    %v2271 = vrot.slane %v2270, 2
    %v2272 = vadd.f32 %v2270, %v2271
    %v2273 = vrot.slane %v2272, 1
    %v2274 = vadd.f32 %v2272, %v2273
    %v2275 = vrot.slane %v2237, 4
    %v2276 = vadd.f32 %v2237, %v2275
    %v2277 = vrot.slane %v2276, 2
    %v2278 = vadd.f32 %v2276, %v2277
    %v2279 = vrot.slane %v2278, 1
    %v2280 = vadd.f32 %v2278, %v2279
    %v2281 = vrot.slane %v2238, 4
    %v2282 = vadd.f32 %v2238, %v2281
    %v2283 = vrot.slane %v2282, 2
    %v2284 = vadd.f32 %v2282, %v2283
    %v2285 = vrot.slane %v2284, 1
    %v2286 = vadd.f32 %v2284, %v2285
    %v2287 = vmul.f32 %v2244, %v2244
    %v2288 = vmul.f32 %v2250, %v2250
    %v2289 = vmul.f32 %v2256, %v2256
    %v2290 = vmul.f32 %v2262, %v2262
    %v2291 = vmul.f32 %v2268, %v2268
    %v2292 = vmul.f32 %v2274, %v2274
    %v2293 = vmul.f32 %v2280, %v2280
    %v2294 = vmul.f32 %v2286, %v2286
    %v2303 = vsel %vm1650, %v2288, %v2287
    %v2304 = vsel %vm1652, %v2289, %v2303
    %v2305 = vsel %vm1654, %v2290, %v2304
    %v2306 = vsel %vm1656, %v2291, %v2305
    %v2307 = vsel %vm1658, %v2292, %v2306
    %v2308 = vsel %vm1660, %v2293, %v2307
    %v2309 = vsel %vm1662, %v2294, %v2308
    %2311 = vmatprep.subr.mxu0 0.0
    %2312 = vmatpush1.msra.mxu0 %v374
    %2313 = vmatprep.subr.mxu0 0.0
    %2314 = vmatpush1.msra.mxu0 %v373
    %2315 = vmatprep.subr.mxu0 0.0
    %2316 = vmatpush1.msra.mxu0 %v372
    %2317 = vmatprep.subr.mxu0 0.0
    %2318 = vmatpush1.msra.mxu0 %v371
    %2319 = vmatprep.subr.mxu0 0.0
    %2320 = vmatpush1.msra.mxu0 %v370
    %2321 = vmatprep.subr.mxu0 0.0
    %2322 = vmatpush1.msra.mxu0 %v369
    %2323 = vmatprep.subr.mxu0 0.0
    %2324 = vmatpush1.msra.mxu0 %v368
    %2325 = vmatprep.subr.mxu0 0.0
    %2326 = vmatpush1.msra.mxu0 %v367
    %2327 = vmatprep.subr.mxu0 0.0
    %2328 = vmatpush1.msra.mxu0 %v366
    %2329 = vmatprep.subr.mxu0 0.0
    %2330 = vmatpush1.msra.mxu0 %v365
    %2331 = vmatprep.subr.mxu0 0.0
    %2332 = vmatpush1.msra.mxu0 %v364
    %2333 = vmatprep.subr.mxu0 0.0
    %2334 = vmatpush1.msra.mxu0 %v363
    %2335 = vmatprep.subr.mxu0 0.0
    %2336 = vmatpush1.msra.mxu0 %v362
    %2337 = vmatprep.subr.mxu0 0.0
    %2338 = vmatpush1.msra.mxu0 %v361
    %2339 = vmatprep.subr.mxu0 0.0
    %2340 = vmatpush1.msra.mxu0 %v360
    %2341 = vmatprep.subr.mxu0 0.0
    %2342 = vmatpush1.msra.mxu0 %v359
    %2343 = vmatprep.subr.mxu0 0.0
    %2344 = vmatpush2.msra.mxu0 0.0
    %2345 = vmatprep.subr.mxu0 0.0
    %2346 = vmatpush2.msra.mxu0 0.0
    %2347 = vmatprep.subr.mxu0 0.0
    %2348 = vmatpush2.msra.mxu0 0.0
    %2349 = vmatprep.subr.mxu0 0.0
    %2350 = vmatpush2.msra.mxu0 0.0
    %2351 = vmatprep.subr.mxu0 0.0
    %2352 = vmatpush2.msra.mxu0 0.0
    %2353 = vmatprep.subr.mxu0 0.0
    %2354 = vmatpush2.msra.mxu0 0.0
    %2355 = vmatprep.subr.mxu0 0.0
    %2356 = vmatpush2.msra.mxu0 0.0
    %2357 = vmatprep.subr.mxu0 0.0
    %2358 = vmatpush2.msra.mxu0 0.0
    %2359 = vmatprep.subr.mxu0 0.0
    %2360 = vmatpush2.msra.mxu0 0.0
    %2361 = vmatprep.subr.mxu0 0.0
    %2362 = vmatpush2.msra.mxu0 0.0
    %2363 = vmatprep.subr.mxu0 0.0
    %2364 = vmatpush2.msra.mxu0 0.0
    %2365 = vmatprep.subr.mxu0 0.0
    %2366 = vmatpush2.msra.mxu0 0.0
    %2367 = vmatprep.subr.mxu0 0.0
    %2368 = vmatpush2.msra.mxu0 0.0
    %2369 = vmatprep.subr.mxu0 0.0
    %2370 = vmatpush2.msra.mxu0 0.0
    %2371 = vmatprep.subr.mxu0 0.0
    %2372 = vmatpush2.msra.mxu0 0.0
    %2373 = vmatprep.subr.mxu0 0.0
    %2374 = vmatpush2.msra.mxu0 0.0
    %2375 = vmatprep.mubr.f32.mxu0 0.0
    %2376 = vmatmul.mubr.f32.gmra.mxu0 %v2309
    %v2377 = vpop.f32.mrf.mxu0
    %v2378 = vadd.f32 0.0, %v2377
    %v2379 = vpop.f32.mrf.mxu0
    %2380 = vdwg.mxu0
    %v2382 = vsel %vm1460, %v2378, 0
    %2384 = vmatprep.subr.mxu0 0.0
    %2385 = vmatpush1.msra.mxu0 0.0
    %2386 = vmatprep.subr.mxu0 0.0
    %2387 = vmatpush1.msra.mxu0 0.0
    %2388 = vmatprep.subr.mxu0 0.0
    %2389 = vmatpush1.msra.mxu0 0.0
    %2390 = vmatprep.subr.mxu0 0.0
    %2391 = vmatpush1.msra.mxu0 0.0
    %2392 = vmatprep.subr.mxu0 0.0
    %2393 = vmatpush1.msra.mxu0 0.0
    %2394 = vmatprep.subr.mxu0 0.0
    %2395 = vmatpush1.msra.mxu0 0.0
    %2396 = vmatprep.subr.mxu0 0.0
    %2397 = vmatpush1.msra.mxu0 0.0
    %2398 = vmatprep.subr.mxu0 0.0
    %2399 = vmatpush1.msra.mxu0 0.0
    %2400 = vmatprep.subr.mxu0 0.0
    %2401 = vmatpush1.msra.mxu0 0.0
    %2402 = vmatprep.subr.mxu0 0.0
    %2403 = vmatpush1.msra.mxu0 0.0
    %2404 = vmatprep.subr.mxu0 0.0
    %2405 = vmatpush1.msra.mxu0 0.0
    %2406 = vmatprep.subr.mxu0 0.0
    %2407 = vmatpush1.msra.mxu0 0.0
    %2408 = vmatprep.subr.mxu0 0.0
    %2409 = vmatpush1.msra.mxu0 0.0
    %2410 = vmatprep.subr.mxu0 0.0
    %2411 = vmatpush1.msra.mxu0 0.0
    %2412 = vmatprep.subr.mxu0 0.0
    %2413 = vmatpush1.msra.mxu0 0.0
    %2414 = vmatprep.subr.mxu0 0.0
    %2415 = vmatpush1.msra.mxu0 %v1471
    %2416 = vmatprep.subr.mxu0 0.0
    %2417 = vmatpush2.msra.mxu0 0.0
    %2418 = vmatprep.subr.mxu0 0.0
    %2419 = vmatpush2.msra.mxu0 0.0
    %2420 = vmatprep.subr.mxu0 0.0
    %2421 = vmatpush2.msra.mxu0 0.0
    %2422 = vmatprep.subr.mxu0 0.0
    %2423 = vmatpush2.msra.mxu0 0.0
    %2424 = vmatprep.subr.mxu0 0.0
    %2425 = vmatpush2.msra.mxu0 0.0
    %2426 = vmatprep.subr.mxu0 0.0
    %2427 = vmatpush2.msra.mxu0 0.0
    %2428 = vmatprep.subr.mxu0 0.0
    %2429 = vmatpush2.msra.mxu0 0.0
    %2430 = vmatprep.subr.mxu0 0.0
    %2431 = vmatpush2.msra.mxu0 0.0
    %2432 = vmatprep.subr.mxu0 0.0
    %2433 = vmatpush2.msra.mxu0 0.0
    %2434 = vmatprep.subr.mxu0 0.0
    %2435 = vmatpush2.msra.mxu0 0.0
    %2436 = vmatprep.subr.mxu0 0.0
    %2437 = vmatpush2.msra.mxu0 0.0
    %2438 = vmatprep.subr.mxu0 0.0
    %2439 = vmatpush2.msra.mxu0 0.0
    %2440 = vmatprep.subr.mxu0 0.0
    %2441 = vmatpush2.msra.mxu0 0.0
    %2442 = vmatprep.subr.mxu0 0.0
    %2443 = vmatpush2.msra.mxu0 0.0
    %2444 = vmatprep.subr.mxu0 0.0
    %2445 = vmatpush2.msra.mxu0 0.0
    %2446 = vmatprep.subr.mxu0 0.0
    %2447 = vmatpush2.msra.mxu0 0.0
    %2448 = vmatprep.mubr.f32.mxu0 0.0
    %2449 = vmatmul.mubr.f32.gmra.mxu0 %v2382
    %v2450 = vpop.f32.mrf.mxu0
    %v2451 = vadd.f32 0.0, %v2450
    %v2452 = vpop.f32.mrf.mxu0
    %2453 = vdwg.mxu0
    %v2454 = vadd.f32 %v2451, 1.0
    %v2455 = vrcp.pop %v2454
    %v2456 = vmul.f32 %v2451, %v2455
    %v2458 = vrot.slane %v2456, 1
    %v2459 = vrot.slane %v2456, 2
    %v2460 = vrot.slane %v2456, 3
    %v2461 = vrot.slane %v2456, 4
    %v2462 = vrot.slane %v2456, 5
    %v2463 = vrot.slane %v2456, 6
    %v2464 = vrot.slane %v2456, 7
    %v2473 = vmul.f32 %v2244, %v2456
    %v2474 = vmul.f32 %v2250, %v2458
    %v2475 = vmul.f32 %v2256, %v2459
    %v2476 = vmul.f32 %v2262, %v2460
    %v2477 = vmul.f32 %v2268, %v2461
    %v2478 = vmul.f32 %v2274, %v2462
    %v2479 = vmul.f32 %v2280, %v2463
    %v2480 = vmul.f32 %v2286, %v2464
    %v2481 = vadd.f32 %v2451, 1e-08
    %v2482 = vrsqrt.pop %v2481
    %v2484 = vrot.slane %v2482, 1
    %v2485 = vrot.slane %v2482, 2
    %v2486 = vrot.slane %v2482, 3
    %v2487 = vrot.slane %v2482, 4
    %v2488 = vrot.slane %v2482, 5
    %v2489 = vrot.slane %v2482, 6
    %v2490 = vrot.slane %v2482, 7
    %v2499 = vmul.f32 %v2473, %v2482
    %v2500 = vmul.f32 %v2474, %v2484
    %v2501 = vmul.f32 %v2475, %v2485
    %v2502 = vmul.f32 %v2476, %v2486
    %v2503 = vmul.f32 %v2477, %v2487
    %v2504 = vmul.f32 %v2478, %v2488
    %v2505 = vmul.f32 %v2479, %v2489
    %v2506 = vmul.f32 %v2480, %v2490
    %v2507 = vlaneseq
    %v2508 = vshrl.u32 %v2507, 7
    %v2509 = vsub.s32 0, %v2508
    %v2510 = vrot.slane %v2499, %v2509
    %v2511 = vlaneseq
    %v2512 = vshrl.u32 %v2511, 7
    %v2513 = vsub.s32 0, %v2512
    %v2514 = vrot.slane %v2500, %v2513
    %v2515 = vlaneseq
    %v2516 = vshrl.u32 %v2515, 7
    %v2517 = vsub.s32 0, %v2516
    %v2518 = vrot.slane %v2501, %v2517
    %v2519 = vlaneseq
    %v2520 = vshrl.u32 %v2519, 7
    %v2521 = vsub.s32 0, %v2520
    %v2522 = vrot.slane %v2502, %v2521
    %v2523 = vlaneseq
    %v2524 = vshrl.u32 %v2523, 7
    %v2525 = vsub.s32 0, %v2524
    %v2526 = vrot.slane %v2503, %v2525
    %v2527 = vlaneseq
    %v2528 = vshrl.u32 %v2527, 7
    %v2529 = vsub.s32 0, %v2528
    %v2530 = vrot.slane %v2504, %v2529
    %v2531 = vlaneseq
    %v2532 = vshrl.u32 %v2531, 7
    %v2533 = vsub.s32 0, %v2532
    %v2534 = vrot.slane %v2505, %v2533
    %v2535 = vlaneseq
    %v2536 = vshrl.u32 %v2535, 7
    %v2537 = vsub.s32 0, %v2536
    %v2538 = vrot.slane %v2506, %v2537
    %v2539 = vmul.f32 %v1203, %v2510
    %v2540 = vmul.f32 %v1208, %v2514
    %v2541 = vmul.f32 %v1282, %v2518
    %v2542 = vmul.f32 %v1287, %v2522
    %v2543 = vmul.f32 %v1367, %v2526
    %v2544 = vmul.f32 %v1372, %v2530
    %v2545 = vmul.f32 %v1452, %v2534
    %v2546 = vmul.f32 %v1457, %v2538
    %2547 = vmatprep.subr.mxu0 0.0
    %2548 = vmatpush1.msra.mxu0 %v374
    %2549 = vmatprep.subr.mxu0 0.0
    %2550 = vmatpush1.msra.mxu0 %v373
    %2551 = vmatprep.subr.mxu0 0.0
    %2552 = vmatpush1.msra.mxu0 %v372
    %2553 = vmatprep.subr.mxu0 0.0
    %2554 = vmatpush1.msra.mxu0 %v371
    %2555 = vmatprep.subr.mxu0 0.0
    %2556 = vmatpush1.msra.mxu0 %v370
    %2557 = vmatprep.subr.mxu0 0.0
    %2558 = vmatpush1.msra.mxu0 %v369
    %2559 = vmatprep.subr.mxu0 0.0
    %2560 = vmatpush1.msra.mxu0 %v368
    %2561 = vmatprep.subr.mxu0 0.0
    %2562 = vmatpush1.msra.mxu0 %v367
    %2563 = vmatprep.subr.mxu0 0.0
    %2564 = vmatpush1.msra.mxu0 %v366
    %2565 = vmatprep.subr.mxu0 0.0
    %2566 = vmatpush1.msra.mxu0 %v365
    %2567 = vmatprep.subr.mxu0 0.0
    %2568 = vmatpush1.msra.mxu0 %v364
    %2569 = vmatprep.subr.mxu0 0.0
    %2570 = vmatpush1.msra.mxu0 %v363
    %2571 = vmatprep.subr.mxu0 0.0
    %2572 = vmatpush1.msra.mxu0 %v362
    %2573 = vmatprep.subr.mxu0 0.0
    %2574 = vmatpush1.msra.mxu0 %v361
    %2575 = vmatprep.subr.mxu0 0.0
    %2576 = vmatpush1.msra.mxu0 %v360
    %2577 = vmatprep.subr.mxu0 0.0
    %2578 = vmatpush1.msra.mxu0 %v359
    %2579 = vmatprep.subr.mxu0 0.0
    %2580 = vmatpush2.msra.mxu0 0.0
    %2581 = vmatprep.subr.mxu0 0.0
    %2582 = vmatpush2.msra.mxu0 0.0
    %2583 = vmatprep.subr.mxu0 0.0
    %2584 = vmatpush2.msra.mxu0 0.0
    %2585 = vmatprep.subr.mxu0 0.0
    %2586 = vmatpush2.msra.mxu0 0.0
    %2587 = vmatprep.subr.mxu0 0.0
    %2588 = vmatpush2.msra.mxu0 0.0
    %2589 = vmatprep.subr.mxu0 0.0
    %2590 = vmatpush2.msra.mxu0 0.0
    %2591 = vmatprep.subr.mxu0 0.0
    %2592 = vmatpush2.msra.mxu0 0.0
    %2593 = vmatprep.subr.mxu0 0.0
    %2594 = vmatpush2.msra.mxu0 0.0
    %2595 = vmatprep.subr.mxu0 0.0
    %2596 = vmatpush2.msra.mxu0 0.0
    %2597 = vmatprep.subr.mxu0 0.0
    %2598 = vmatpush2.msra.mxu0 0.0
    %2599 = vmatprep.subr.mxu0 0.0
    %2600 = vmatpush2.msra.mxu0 0.0
    %2601 = vmatprep.subr.mxu0 0.0
    %2602 = vmatpush2.msra.mxu0 0.0
    %2603 = vmatprep.subr.mxu0 0.0
    %2604 = vmatpush2.msra.mxu0 0.0
    %2605 = vmatprep.subr.mxu0 0.0
    %2606 = vmatpush2.msra.mxu0 0.0
    %2607 = vmatprep.subr.mxu0 0.0
    %2608 = vmatpush2.msra.mxu0 0.0
    %2609 = vmatprep.subr.mxu0 0.0
    %2610 = vmatpush2.msra.mxu0 0.0
    %2611 = vmatprep.mubr.f32.mxu0 0.0
    %2612 = vmatmul.mubr.f32.gmra.mxu0 %v2539
    %v2613 = vpop.f32.mrf.mxu0
    %v2614 = vadd.f32 0.0, %v2613
    %v2615 = vpop.f32.mrf.mxu0
    %2616 = vmatprep.mubr.f32.mxu0 0.0
    %2617 = vmatmul.mubr.f32.gmra.mxu0 %v2540
    %v2618 = vpop.f32.mrf.mxu0
    %v2619 = vadd.f32 0.0, %v2618
    %v2620 = vpop.f32.mrf.mxu0
    %2621 = vmatprep.mubr.f32.mxu0 0.0
    %2622 = vmatmul.mubr.f32.gmra.mxu0 %v2541
    %v2623 = vpop.f32.mrf.mxu0
    %v2624 = vadd.f32 0.0, %v2623
    %v2625 = vpop.f32.mrf.mxu0
    %2626 = vmatprep.mubr.f32.mxu0 0.0
    %2627 = vmatmul.mubr.f32.gmra.mxu0 %v2542
    %v2628 = vpop.f32.mrf.mxu0
    %v2629 = vadd.f32 0.0, %v2628
    %v2630 = vpop.f32.mrf.mxu0
    %2631 = vmatprep.mubr.f32.mxu0 0.0
    %2632 = vmatmul.mubr.f32.gmra.mxu0 %v2543
    %v2633 = vpop.f32.mrf.mxu0
    %v2634 = vadd.f32 0.0, %v2633
    %v2635 = vpop.f32.mrf.mxu0
    %2636 = vmatprep.mubr.f32.mxu0 0.0
    %2637 = vmatmul.mubr.f32.gmra.mxu0 %v2544
    %v2638 = vpop.f32.mrf.mxu0
    %v2639 = vadd.f32 0.0, %v2638
    %v2640 = vpop.f32.mrf.mxu0
    %2641 = vmatprep.mubr.f32.mxu0 0.0
    %2642 = vmatmul.mubr.f32.gmra.mxu0 %v2545
    %v2643 = vpop.f32.mrf.mxu0
    %v2644 = vadd.f32 0.0, %v2643
    %v2645 = vpop.f32.mrf.mxu0
    %2646 = vmatprep.mubr.f32.mxu0 0.0
    %2647 = vmatmul.mubr.f32.gmra.mxu0 %v2546
    %v2648 = vpop.f32.mrf.mxu0
    %v2649 = vadd.f32 0.0, %v2648
    %v2650 = vpop.f32.mrf.mxu0
    %2651 = vdwg.mxu0
    %v2652 = vadd.f32 %v2006, %v2614
    %v2653 = vadd.f32 %v2007, %v2619
    %v2654 = vadd.f32 %v2008, %v2624
    %v2655 = vadd.f32 %v2009, %v2629
    %v2656 = vadd.f32 %v2010, %v2634
    %v2657 = vadd.f32 %v2011, %v2639
    %v2658 = vadd.f32 %v2012, %v2644
    %v2659 = vadd.f32 %v2013, %v2649
    %v2660 = vsel %vm1460, %v2652, -inf
    %2661 = vmax.xlane.f32.xlu0 %v2660
    %v2662 = vpop.xlane.xlu0 %2661
    %v2663 = vsel %vm1460, %v2653, -inf
    %2664 = vmax.xlane.f32.xlu0 %v2663
    %v2665 = vpop.xlane.xlu0 %2664
    %v2666 = vsel %vm1460, %v2654, -inf
    %2667 = vmax.xlane.f32.xlu0 %v2666
    %v2668 = vpop.xlane.xlu0 %2667
    %v2669 = vsel %vm1460, %v2655, -inf
    %2670 = vmax.xlane.f32.xlu0 %v2669
    %v2671 = vpop.xlane.xlu0 %2670
    %v2672 = vsel %vm1460, %v2656, -inf
    %2673 = vmax.xlane.f32.xlu0 %v2672
    %v2674 = vpop.xlane.xlu0 %2673
    %v2675 = vsel %vm1460, %v2657, -inf
    %2676 = vmax.xlane.f32.xlu0 %v2675
    %v2677 = vpop.xlane.xlu0 %2676
    %v2678 = vsel %vm1460, %v2658, -inf
    %2679 = vmax.xlane.f32.xlu0 %v2678
    %v2680 = vpop.xlane.xlu0 %2679
    %v2681 = vsel %vm1460, %v2659, -inf
    %2682 = vmax.xlane.f32.xlu0 %v2681
    %v2683 = vpop.xlane.xlu0 %2682
    %v2684 = vsub.f32 %v2652, %v2662
    %v2685 = vsub.f32 %v2653, %v2665
    %v2686 = vsub.f32 %v2654, %v2668
    %v2687 = vsub.f32 %v2655, %v2671
    %v2688 = vsub.f32 %v2656, %v2674
    %v2689 = vsub.f32 %v2657, %v2677
    %v2690 = vsub.f32 %v2658, %v2680
    %v2691 = vsub.f32 %v2659, %v2683
    %v2692 = vmul.f32 %v2684, 1.442695
    %v2693 = vpow.pop %v2692
    %v2694 = vmul.f32 %v2685, 1.442695
    %v2695 = vpow.pop %v2694
    %v2696 = vmul.f32 %v2686, 1.442695
    %v2697 = vpow.pop %v2696
    %v2698 = vmul.f32 %v2687, 1.442695
    %v2699 = vpow.pop %v2698
    %v2700 = vmul.f32 %v2688, 1.442695
    %v2701 = vpow.pop %v2700
    %v2702 = vmul.f32 %v2689, 1.442695
    %v2703 = vpow.pop %v2702
    %v2704 = vmul.f32 %v2690, 1.442695
    %v2705 = vpow.pop %v2704
    %v2706 = vmul.f32 %v2691, 1.442695
    %v2707 = vpow.pop %v2706
    %v2708 = vsel %vm1460, %v2693, 0.0
    %2709 = vadd.xlane.f32.xlu0 %v2708
    %v2710 = vpop.xlane.xlu0 %2709
    %v2711 = vsel %vm1460, %v2695, 0.0
    %2712 = vadd.xlane.f32.xlu0 %v2711
    %v2713 = vpop.xlane.xlu0 %2712
    %v2714 = vsel %vm1460, %v2697, 0.0
    %2715 = vadd.xlane.f32.xlu0 %v2714
    %v2716 = vpop.xlane.xlu0 %2715
    %v2717 = vsel %vm1460, %v2699, 0.0
    %2718 = vadd.xlane.f32.xlu0 %v2717
    %v2719 = vpop.xlane.xlu0 %2718
    %v2720 = vsel %vm1460, %v2701, 0.0
    %2721 = vadd.xlane.f32.xlu0 %v2720
    %v2722 = vpop.xlane.xlu0 %2721
    %v2723 = vsel %vm1460, %v2703, 0.0
    %2724 = vadd.xlane.f32.xlu0 %v2723
    %v2725 = vpop.xlane.xlu0 %2724
    %v2726 = vsel %vm1460, %v2705, 0.0
    %2727 = vadd.xlane.f32.xlu0 %v2726
    %v2728 = vpop.xlane.xlu0 %2727
    %v2729 = vsel %vm1460, %v2707, 0.0
    %2730 = vadd.xlane.f32.xlu0 %v2729
    %v2731 = vpop.xlane.xlu0 %2730
    %v2732 = vrcp.pop %v2710
    %v2733 = vmul.f32 %v2693, %v2732
    %v2734 = vrcp.pop %v2713
    %v2735 = vmul.f32 %v2695, %v2734
    %v2736 = vrcp.pop %v2716
    %v2737 = vmul.f32 %v2697, %v2736
    %v2738 = vrcp.pop %v2719
    %v2739 = vmul.f32 %v2699, %v2738
    %v2740 = vrcp.pop %v2722
    %v2741 = vmul.f32 %v2701, %v2740
    %v2742 = vrcp.pop %v2725
    %v2743 = vmul.f32 %v2703, %v2742
    %v2744 = vrcp.pop %v2728
    %v2745 = vmul.f32 %v2705, %v2744
    %v2746 = vrcp.pop %v2731
    %v2747 = vmul.f32 %v2707, %v2746
    %v2749 = vsel %vm1460, %v2733, 0
    %v2752 = vsel %vm1460, %v2735, 0
    %v2755 = vsel %vm1460, %v2737, 0
    %v2758 = vsel %vm1460, %v2739, 0
    %v2761 = vsel %vm1460, %v2741, 0
    %v2764 = vsel %vm1460, %v2743, 0
    %v2767 = vsel %vm1460, %v2745, 0
    %v2770 = vsel %vm1460, %v2747, 0
    %2772 = vmatprep.subr.mxu0 0.0
    %2773 = vmatpush1.msra.mxu0 0.0
    %2774 = vmatprep.subr.mxu0 0.0
    %2775 = vmatpush1.msra.mxu0 0.0
    %2776 = vmatprep.subr.mxu0 0.0
    %2777 = vmatpush1.msra.mxu0 0.0
    %2778 = vmatprep.subr.mxu0 0.0
    %2779 = vmatpush1.msra.mxu0 0.0
    %2780 = vmatprep.subr.mxu0 0.0
    %2781 = vmatpush1.msra.mxu0 0.0
    %2782 = vmatprep.subr.mxu0 0.0
    %2783 = vmatpush1.msra.mxu0 0.0
    %2784 = vmatprep.subr.mxu0 0.0
    %2785 = vmatpush1.msra.mxu0 0.0
    %2786 = vmatprep.subr.mxu0 0.0
    %2787 = vmatpush1.msra.mxu0 0.0
    %2788 = vmatprep.subr.mxu0 0.0
    %2789 = vmatpush1.msra.mxu0 0.0
    %2790 = vmatprep.subr.mxu0 0.0
    %2791 = vmatpush1.msra.mxu0 0.0
    %2792 = vmatprep.subr.mxu0 0.0
    %2793 = vmatpush1.msra.mxu0 0.0
    %2794 = vmatprep.subr.mxu0 0.0
    %2795 = vmatpush1.msra.mxu0 0.0
    %2796 = vmatprep.subr.mxu0 0.0
    %2797 = vmatpush1.msra.mxu0 0.0
    %2798 = vmatprep.subr.mxu0 0.0
    %2799 = vmatpush1.msra.mxu0 0.0
    %2800 = vmatprep.subr.mxu0 0.0
    %2801 = vmatpush1.msra.mxu0 0.0
    %2802 = vmatprep.subr.mxu0 0.0
    %2803 = vmatpush1.msra.mxu0 %v1471
    %2804 = vmatprep.subr.mxu0 0.0
    %2805 = vmatpush2.msra.mxu0 0.0
    %2806 = vmatprep.subr.mxu0 0.0
    %2807 = vmatpush2.msra.mxu0 0.0
    %2808 = vmatprep.subr.mxu0 0.0
    %2809 = vmatpush2.msra.mxu0 0.0
    %2810 = vmatprep.subr.mxu0 0.0
    %2811 = vmatpush2.msra.mxu0 0.0
    %2812 = vmatprep.subr.mxu0 0.0
    %2813 = vmatpush2.msra.mxu0 0.0
    %2814 = vmatprep.subr.mxu0 0.0
    %2815 = vmatpush2.msra.mxu0 0.0
    %2816 = vmatprep.subr.mxu0 0.0
    %2817 = vmatpush2.msra.mxu0 0.0
    %2818 = vmatprep.subr.mxu0 0.0
    %2819 = vmatpush2.msra.mxu0 0.0
    %2820 = vmatprep.subr.mxu0 0.0
    %2821 = vmatpush2.msra.mxu0 0.0
    %2822 = vmatprep.subr.mxu0 0.0
    %2823 = vmatpush2.msra.mxu0 0.0
    %2824 = vmatprep.subr.mxu0 0.0
    %2825 = vmatpush2.msra.mxu0 0.0
    %2826 = vmatprep.subr.mxu0 0.0
    %2827 = vmatpush2.msra.mxu0 0.0
    %2828 = vmatprep.subr.mxu0 0.0
    %2829 = vmatpush2.msra.mxu0 0.0
    %2830 = vmatprep.subr.mxu0 0.0
    %2831 = vmatpush2.msra.mxu0 0.0
    %2832 = vmatprep.subr.mxu0 0.0
    %2833 = vmatpush2.msra.mxu0 0.0
    %2834 = vmatprep.subr.mxu0 0.0
    %2835 = vmatpush2.msra.mxu0 0.0
    %2836 = vmatprep.mubr.f32.mxu0 0.0
    %2837 = vmatmul.mubr.f32.gmra.mxu0 %v2749
    %v2838 = vpop.f32.mrf.mxu0
    %v2839 = vadd.f32 0.0, %v2838
    %v2840 = vpop.f32.mrf.mxu0
    %2841 = vmatprep.mubr.f32.mxu0 0.0
    %2842 = vmatmul.mubr.f32.gmra.mxu0 %v2752
    %v2843 = vpop.f32.mrf.mxu0
    %v2844 = vadd.f32 0.0, %v2843
    %v2845 = vpop.f32.mrf.mxu0
    %2846 = vmatprep.mubr.f32.mxu0 0.0
    %2847 = vmatmul.mubr.f32.gmra.mxu0 %v2755
    %v2848 = vpop.f32.mrf.mxu0
    %v2849 = vadd.f32 0.0, %v2848
    %v2850 = vpop.f32.mrf.mxu0
    %2851 = vmatprep.mubr.f32.mxu0 0.0
    %2852 = vmatmul.mubr.f32.gmra.mxu0 %v2758
    %v2853 = vpop.f32.mrf.mxu0
    %v2854 = vadd.f32 0.0, %v2853
    %v2855 = vpop.f32.mrf.mxu0
    %2856 = vmatprep.mubr.f32.mxu0 0.0
    %2857 = vmatmul.mubr.f32.gmra.mxu0 %v2761
    %v2858 = vpop.f32.mrf.mxu0
    %v2859 = vadd.f32 0.0, %v2858
    %v2860 = vpop.f32.mrf.mxu0
    %2861 = vmatprep.mubr.f32.mxu0 0.0
    %2862 = vmatmul.mubr.f32.gmra.mxu0 %v2764
    %v2863 = vpop.f32.mrf.mxu0
    %v2864 = vadd.f32 0.0, %v2863
    %v2865 = vpop.f32.mrf.mxu0
    %2866 = vmatprep.mubr.f32.mxu0 0.0
    %2867 = vmatmul.mubr.f32.gmra.mxu0 %v2767
    %v2868 = vpop.f32.mrf.mxu0
    %v2869 = vadd.f32 0.0, %v2868
    %v2870 = vpop.f32.mrf.mxu0
    %2871 = vmatprep.mubr.f32.mxu0 0.0
    %2872 = vmatmul.mubr.f32.gmra.mxu0 %v2770
    %v2873 = vpop.f32.mrf.mxu0
    %v2874 = vadd.f32 0.0, %v2873
    %v2875 = vpop.f32.mrf.mxu0
    %2876 = vdwg.mxu0
    %v2877 = vmul.f32 %v2839, %v1203
    %v2878 = vmul.f32 %v2844, %v1208
    %v2879 = vmul.f32 %v2849, %v1282
    %v2880 = vmul.f32 %v2854, %v1287
    %v2881 = vmul.f32 %v2859, %v1367
    %v2882 = vmul.f32 %v2864, %v1372
    %v2883 = vmul.f32 %v2869, %v1452
    %v2884 = vmul.f32 %v2874, %v1457
    %v2885 = vrot.slane %v2877, 4
    %v2886 = vadd.f32 %v2877, %v2885
    %v2887 = vrot.slane %v2886, 2
    %v2888 = vadd.f32 %v2886, %v2887
    %v2889 = vrot.slane %v2888, 1
    %v2890 = vadd.f32 %v2888, %v2889
    %v2891 = vrot.slane %v2878, 4
    %v2892 = vadd.f32 %v2878, %v2891
    %v2893 = vrot.slane %v2892, 2
    %v2894 = vadd.f32 %v2892, %v2893
    %v2895 = vrot.slane %v2894, 1
    %v2896 = vadd.f32 %v2894, %v2895
    %v2897 = vrot.slane %v2879, 4
    %v2898 = vadd.f32 %v2879, %v2897
    %v2899 = vrot.slane %v2898, 2
    %v2900 = vadd.f32 %v2898, %v2899
    %v2901 = vrot.slane %v2900, 1
    %v2902 = vadd.f32 %v2900, %v2901
    %v2903 = vrot.slane %v2880, 4
    %v2904 = vadd.f32 %v2880, %v2903
    %v2905 = vrot.slane %v2904, 2
    %v2906 = vadd.f32 %v2904, %v2905
    %v2907 = vrot.slane %v2906, 1
    %v2908 = vadd.f32 %v2906, %v2907
    %v2909 = vrot.slane %v2881, 4
    %v2910 = vadd.f32 %v2881, %v2909
    %v2911 = vrot.slane %v2910, 2
    %v2912 = vadd.f32 %v2910, %v2911
    %v2913 = vrot.slane %v2912, 1
    %v2914 = vadd.f32 %v2912, %v2913
    %v2915 = vrot.slane %v2882, 4
    %v2916 = vadd.f32 %v2882, %v2915
    %v2917 = vrot.slane %v2916, 2
    %v2918 = vadd.f32 %v2916, %v2917
    %v2919 = vrot.slane %v2918, 1
    %v2920 = vadd.f32 %v2918, %v2919
    %v2921 = vrot.slane %v2883, 4
    %v2922 = vadd.f32 %v2883, %v2921
    %v2923 = vrot.slane %v2922, 2
    %v2924 = vadd.f32 %v2922, %v2923
    %v2925 = vrot.slane %v2924, 1
    %v2926 = vadd.f32 %v2924, %v2925
    %v2927 = vrot.slane %v2884, 4
    %v2928 = vadd.f32 %v2884, %v2927
    %v2929 = vrot.slane %v2928, 2
    %v2930 = vadd.f32 %v2928, %v2929
    %v2931 = vrot.slane %v2930, 1
    %v2932 = vadd.f32 %v2930, %v2931
    %v2933 = vmul.f32 %v2890, %v2890
    %v2934 = vmul.f32 %v2896, %v2896
    %v2935 = vmul.f32 %v2902, %v2902
    %v2936 = vmul.f32 %v2908, %v2908
    %v2937 = vmul.f32 %v2914, %v2914
    %v2938 = vmul.f32 %v2920, %v2920
    %v2939 = vmul.f32 %v2926, %v2926
    %v2940 = vmul.f32 %v2932, %v2932
    %v2949 = vsel %vm1650, %v2934, %v2933
    %v2950 = vsel %vm1652, %v2935, %v2949
    %v2951 = vsel %vm1654, %v2936, %v2950
    %v2952 = vsel %vm1656, %v2937, %v2951
    %v2953 = vsel %vm1658, %v2938, %v2952
    %v2954 = vsel %vm1660, %v2939, %v2953
    %v2955 = vsel %vm1662, %v2940, %v2954
    %2957 = vmatprep.subr.mxu0 0.0
    %2958 = vmatpush1.msra.mxu0 %v374
    %2959 = vmatprep.subr.mxu0 0.0
    %2960 = vmatpush1.msra.mxu0 %v373
    %2961 = vmatprep.subr.mxu0 0.0
    %2962 = vmatpush1.msra.mxu0 %v372
    %2963 = vmatprep.subr.mxu0 0.0
    %2964 = vmatpush1.msra.mxu0 %v371
    %2965 = vmatprep.subr.mxu0 0.0
    %2966 = vmatpush1.msra.mxu0 %v370
    %2967 = vmatprep.subr.mxu0 0.0
    %2968 = vmatpush1.msra.mxu0 %v369
    %2969 = vmatprep.subr.mxu0 0.0
    %2970 = vmatpush1.msra.mxu0 %v368
    %2971 = vmatprep.subr.mxu0 0.0
    %2972 = vmatpush1.msra.mxu0 %v367
    %2973 = vmatprep.subr.mxu0 0.0
    %2974 = vmatpush1.msra.mxu0 %v366
    %2975 = vmatprep.subr.mxu0 0.0
    %2976 = vmatpush1.msra.mxu0 %v365
    %2977 = vmatprep.subr.mxu0 0.0
    %2978 = vmatpush1.msra.mxu0 %v364
    %2979 = vmatprep.subr.mxu0 0.0
    %2980 = vmatpush1.msra.mxu0 %v363
    %2981 = vmatprep.subr.mxu0 0.0
    %2982 = vmatpush1.msra.mxu0 %v362
    %2983 = vmatprep.subr.mxu0 0.0
    %2984 = vmatpush1.msra.mxu0 %v361
    %2985 = vmatprep.subr.mxu0 0.0
    %2986 = vmatpush1.msra.mxu0 %v360
    %2987 = vmatprep.subr.mxu0 0.0
    %2988 = vmatpush1.msra.mxu0 %v359
    %2989 = vmatprep.subr.mxu0 0.0
    %2990 = vmatpush2.msra.mxu0 0.0
    %2991 = vmatprep.subr.mxu0 0.0
    %2992 = vmatpush2.msra.mxu0 0.0
    %2993 = vmatprep.subr.mxu0 0.0
    %2994 = vmatpush2.msra.mxu0 0.0
    %2995 = vmatprep.subr.mxu0 0.0
    %2996 = vmatpush2.msra.mxu0 0.0
    %2997 = vmatprep.subr.mxu0 0.0
    %2998 = vmatpush2.msra.mxu0 0.0
    %2999 = vmatprep.subr.mxu0 0.0
    %3000 = vmatpush2.msra.mxu0 0.0
    %3001 = vmatprep.subr.mxu0 0.0
    %3002 = vmatpush2.msra.mxu0 0.0
    %3003 = vmatprep.subr.mxu0 0.0
    %3004 = vmatpush2.msra.mxu0 0.0
    %3005 = vmatprep.subr.mxu0 0.0
    %3006 = vmatpush2.msra.mxu0 0.0
    %3007 = vmatprep.subr.mxu0 0.0
    %3008 = vmatpush2.msra.mxu0 0.0
    %3009 = vmatprep.subr.mxu0 0.0
    %3010 = vmatpush2.msra.mxu0 0.0
    %3011 = vmatprep.subr.mxu0 0.0
    %3012 = vmatpush2.msra.mxu0 0.0
    %3013 = vmatprep.subr.mxu0 0.0
    %3014 = vmatpush2.msra.mxu0 0.0
    %3015 = vmatprep.subr.mxu0 0.0
    %3016 = vmatpush2.msra.mxu0 0.0
    %3017 = vmatprep.subr.mxu0 0.0
    %3018 = vmatpush2.msra.mxu0 0.0
    %3019 = vmatprep.subr.mxu0 0.0
    %3020 = vmatpush2.msra.mxu0 0.0
    %3021 = vmatprep.mubr.f32.mxu0 0.0
    %3022 = vmatmul.mubr.f32.gmra.mxu0 %v2955
    %v3023 = vpop.f32.mrf.mxu0
    %v3024 = vadd.f32 0.0, %v3023
    %v3025 = vpop.f32.mrf.mxu0
    %3026 = vdwg.mxu0
    %v3028 = vsel %vm1460, %v3024, 0
    %3030 = vmatprep.subr.mxu0 0.0
    %3031 = vmatpush1.msra.mxu0 0.0
    %3032 = vmatprep.subr.mxu0 0.0
    %3033 = vmatpush1.msra.mxu0 0.0
    %3034 = vmatprep.subr.mxu0 0.0
    %3035 = vmatpush1.msra.mxu0 0.0
    %3036 = vmatprep.subr.mxu0 0.0
    %3037 = vmatpush1.msra.mxu0 0.0
    %3038 = vmatprep.subr.mxu0 0.0
    %3039 = vmatpush1.msra.mxu0 0.0
    %3040 = vmatprep.subr.mxu0 0.0
    %3041 = vmatpush1.msra.mxu0 0.0
    %3042 = vmatprep.subr.mxu0 0.0
    %3043 = vmatpush1.msra.mxu0 0.0
    %3044 = vmatprep.subr.mxu0 0.0
    %3045 = vmatpush1.msra.mxu0 0.0
    %3046 = vmatprep.subr.mxu0 0.0
    %3047 = vmatpush1.msra.mxu0 0.0
    %3048 = vmatprep.subr.mxu0 0.0
    %3049 = vmatpush1.msra.mxu0 0.0
    %3050 = vmatprep.subr.mxu0 0.0
    %3051 = vmatpush1.msra.mxu0 0.0
    %3052 = vmatprep.subr.mxu0 0.0
    %3053 = vmatpush1.msra.mxu0 0.0
    %3054 = vmatprep.subr.mxu0 0.0
    %3055 = vmatpush1.msra.mxu0 0.0
    %3056 = vmatprep.subr.mxu0 0.0
    %3057 = vmatpush1.msra.mxu0 0.0
    %3058 = vmatprep.subr.mxu0 0.0
    %3059 = vmatpush1.msra.mxu0 0.0
    %3060 = vmatprep.subr.mxu0 0.0
    %3061 = vmatpush1.msra.mxu0 %v1471
    %3062 = vmatprep.subr.mxu0 0.0
    %3063 = vmatpush2.msra.mxu0 0.0
    %3064 = vmatprep.subr.mxu0 0.0
    %3065 = vmatpush2.msra.mxu0 0.0
    %3066 = vmatprep.subr.mxu0 0.0
    %3067 = vmatpush2.msra.mxu0 0.0
    %3068 = vmatprep.subr.mxu0 0.0
    %3069 = vmatpush2.msra.mxu0 0.0
    %3070 = vmatprep.subr.mxu0 0.0
    %3071 = vmatpush2.msra.mxu0 0.0
    %3072 = vmatprep.subr.mxu0 0.0
    %3073 = vmatpush2.msra.mxu0 0.0
    %3074 = vmatprep.subr.mxu0 0.0
    %3075 = vmatpush2.msra.mxu0 0.0
    %3076 = vmatprep.subr.mxu0 0.0
    %3077 = vmatpush2.msra.mxu0 0.0
    %3078 = vmatprep.subr.mxu0 0.0
    %3079 = vmatpush2.msra.mxu0 0.0
    %3080 = vmatprep.subr.mxu0 0.0
    %3081 = vmatpush2.msra.mxu0 0.0
    %3082 = vmatprep.subr.mxu0 0.0
    %3083 = vmatpush2.msra.mxu0 0.0
    %3084 = vmatprep.subr.mxu0 0.0
    %3085 = vmatpush2.msra.mxu0 0.0
    %3086 = vmatprep.subr.mxu0 0.0
    %3087 = vmatpush2.msra.mxu0 0.0
    %3088 = vmatprep.subr.mxu0 0.0
    %3089 = vmatpush2.msra.mxu0 0.0
    %3090 = vmatprep.subr.mxu0 0.0
    %3091 = vmatpush2.msra.mxu0 0.0
    %3092 = vmatprep.subr.mxu0 0.0
    %3093 = vmatpush2.msra.mxu0 0.0
    %3094 = vmatprep.mubr.f32.mxu0 0.0
    %3095 = vmatmul.mubr.f32.gmra.mxu0 %v3028
    %v3096 = vpop.f32.mrf.mxu0
    %v3097 = vadd.f32 0.0, %v3096
    %v3098 = vpop.f32.mrf.mxu0
    %3099 = vdwg.mxu0
    %v3100 = vadd.f32 %v3097, 1.0
    %v3101 = vrcp.pop %v3100
    %v3102 = vmul.f32 %v3097, %v3101
    %v3104 = vrot.slane %v3102, 1
    %v3105 = vrot.slane %v3102, 2
    %v3106 = vrot.slane %v3102, 3
    %v3107 = vrot.slane %v3102, 4
    %v3108 = vrot.slane %v3102, 5
    %v3109 = vrot.slane %v3102, 6
    %v3110 = vrot.slane %v3102, 7
    %v3119 = vmul.f32 %v2890, %v3102
    %v3120 = vmul.f32 %v2896, %v3104
    %v3121 = vmul.f32 %v2902, %v3105
    %v3122 = vmul.f32 %v2908, %v3106
    %v3123 = vmul.f32 %v2914, %v3107
    %v3124 = vmul.f32 %v2920, %v3108
    %v3125 = vmul.f32 %v2926, %v3109
    %v3126 = vmul.f32 %v2932, %v3110
    %v3127 = vadd.f32 %v3097, 1e-08
    %v3128 = vrsqrt.pop %v3127
    %v3130 = vrot.slane %v3128, 1
    %v3131 = vrot.slane %v3128, 2
    %v3132 = vrot.slane %v3128, 3
    %v3133 = vrot.slane %v3128, 4
    %v3134 = vrot.slane %v3128, 5
    %v3135 = vrot.slane %v3128, 6
    %v3136 = vrot.slane %v3128, 7
    %v3145 = vmul.f32 %v3119, %v3128
    %v3146 = vmul.f32 %v3120, %v3130
    %v3147 = vmul.f32 %v3121, %v3131
    %v3148 = vmul.f32 %v3122, %v3132
    %v3149 = vmul.f32 %v3123, %v3133
    %v3150 = vmul.f32 %v3124, %v3134
    %v3151 = vmul.f32 %v3125, %v3135
    %v3152 = vmul.f32 %v3126, %v3136
    %3153 = vmatprep.subr.mxu0 0.0
    %3154 = vmatpush1.msra.mxu0 0.0
    %3155 = vmatprep.subr.mxu0 0.0
    %3156 = vmatpush1.msra.mxu0 0.0
    %3157 = vmatprep.subr.mxu0 0.0
    %3158 = vmatpush1.msra.mxu0 0.0
    %3159 = vmatprep.subr.mxu0 0.0
    %3160 = vmatpush1.msra.mxu0 0.0
    %3161 = vmatprep.subr.mxu0 0.0
    %3162 = vmatpush1.msra.mxu0 0.0
    %3163 = vmatprep.subr.mxu0 0.0
    %3164 = vmatpush1.msra.mxu0 0.0
    %3165 = vmatprep.subr.mxu0 0.0
    %3166 = vmatpush1.msra.mxu0 0.0
    %3167 = vmatprep.subr.mxu0 0.0
    %3168 = vmatpush1.msra.mxu0 0.0
    %3169 = vmatprep.subr.mxu0 0.0
    %3170 = vmatpush1.msra.mxu0 0.0
    %3171 = vmatprep.subr.mxu0 0.0
    %3172 = vmatpush1.msra.mxu0 0.0
    %3173 = vmatprep.subr.mxu0 0.0
    %3174 = vmatpush1.msra.mxu0 0.0
    %3175 = vmatprep.subr.mxu0 0.0
    %3176 = vmatpush1.msra.mxu0 0.0
    %3177 = vmatprep.subr.mxu0 0.0
    %3178 = vmatpush1.msra.mxu0 %v378
    %3179 = vmatprep.subr.mxu0 0.0
    %3180 = vmatpush1.msra.mxu0 %v377
    %3181 = vmatprep.subr.mxu0 0.0
    %3182 = vmatpush1.msra.mxu0 %v376
    %3183 = vmatprep.subr.mxu0 0.0
    %3184 = vmatpush1.msra.mxu0 %v375
    %3185 = vmatprep.subr.mxu0 0.0
    %3186 = vmatpush2.msra.mxu0 0.0
    %3187 = vmatprep.subr.mxu0 0.0
    %3188 = vmatpush2.msra.mxu0 0.0
    %3189 = vmatprep.subr.mxu0 0.0
    %3190 = vmatpush2.msra.mxu0 0.0
    %3191 = vmatprep.subr.mxu0 0.0
    %3192 = vmatpush2.msra.mxu0 0.0
    %3193 = vmatprep.subr.mxu0 0.0
    %3194 = vmatpush2.msra.mxu0 0.0
    %3195 = vmatprep.subr.mxu0 0.0
    %3196 = vmatpush2.msra.mxu0 0.0
    %3197 = vmatprep.subr.mxu0 0.0
    %3198 = vmatpush2.msra.mxu0 0.0
    %3199 = vmatprep.subr.mxu0 0.0
    %3200 = vmatpush2.msra.mxu0 0.0
    %3201 = vmatprep.subr.mxu0 0.0
    %3202 = vmatpush2.msra.mxu0 0.0
    %3203 = vmatprep.subr.mxu0 0.0
    %3204 = vmatpush2.msra.mxu0 0.0
    %3205 = vmatprep.subr.mxu0 0.0
    %3206 = vmatpush2.msra.mxu0 0.0
    %3207 = vmatprep.subr.mxu0 0.0
    %3208 = vmatpush2.msra.mxu0 0.0
    %3209 = vmatprep.subr.mxu0 0.0
    %3210 = vmatpush2.msra.mxu0 0.0
    %3211 = vmatprep.subr.mxu0 0.0
    %3212 = vmatpush2.msra.mxu0 0.0
    %3213 = vmatprep.subr.mxu0 0.0
    %3214 = vmatpush2.msra.mxu0 0.0
    %3215 = vmatprep.subr.mxu0 0.0
    %3216 = vmatpush2.msra.mxu0 0.0
    %3217 = vmatprep.mubr.f32.mxu0 0.0
    %3218 = vmatmul.mubr.f32.gmra.mxu0 %v411
    %v3219 = vpop.f32.mrf.mxu0
    %v3220 = vadd.f32 0.0, %v3219
    %v3221 = vpop.f32.mrf.mxu0
    %3222 = vmatprep.mubr.f32.mxu0 0.0
    %3223 = vmatmul.mubr.f32.gmra.mxu0 %v414
    %v3224 = vpop.f32.mrf.mxu0
    %v3225 = vadd.f32 0.0, %v3224
    %v3226 = vpop.f32.mrf.mxu0
    %3227 = vdwg.mxu0
    %v3228 = vlaneseq
    %v3229 = vshrl.u32 %v3228, 7
    %v3230 = vsub.s32 0, %v3229
    %v3231 = vrot.slane %v3145, %v3230
    %v3232 = vlaneseq
    %v3233 = vshrl.u32 %v3232, 7
    %v3234 = vsub.s32 0, %v3233
    %v3235 = vrot.slane %v3146, %v3234
    %v3236 = vmul.f32 %v3220, %v3231
    %v3237 = vmul.f32 %v3225, %v3235
    %3238 = vmatprep.subr.mxu0 0.0
    %3239 = vmatpush1.msra.mxu0 %v374
    %3240 = vmatprep.subr.mxu0 0.0
    %3241 = vmatpush1.msra.mxu0 %v373
    %3242 = vmatprep.subr.mxu0 0.0
    %3243 = vmatpush1.msra.mxu0 %v372
    %3244 = vmatprep.subr.mxu0 0.0
    %3245 = vmatpush1.msra.mxu0 %v371
    %3246 = vmatprep.subr.mxu0 0.0
    %3247 = vmatpush1.msra.mxu0 %v370
    %3248 = vmatprep.subr.mxu0 0.0
    %3249 = vmatpush1.msra.mxu0 %v369
    %3250 = vmatprep.subr.mxu0 0.0
    %3251 = vmatpush1.msra.mxu0 %v368
    %3252 = vmatprep.subr.mxu0 0.0
    %3253 = vmatpush1.msra.mxu0 %v367
    %3254 = vmatprep.subr.mxu0 0.0
    %3255 = vmatpush1.msra.mxu0 %v366
    %3256 = vmatprep.subr.mxu0 0.0
    %3257 = vmatpush1.msra.mxu0 %v365
    %3258 = vmatprep.subr.mxu0 0.0
    %3259 = vmatpush1.msra.mxu0 %v364
    %3260 = vmatprep.subr.mxu0 0.0
    %3261 = vmatpush1.msra.mxu0 %v363
    %3262 = vmatprep.subr.mxu0 0.0
    %3263 = vmatpush1.msra.mxu0 %v362
    %3264 = vmatprep.subr.mxu0 0.0
    %3265 = vmatpush1.msra.mxu0 %v361
    %3266 = vmatprep.subr.mxu0 0.0
    %3267 = vmatpush1.msra.mxu0 %v360
    %3268 = vmatprep.subr.mxu0 0.0
    %3269 = vmatpush1.msra.mxu0 %v359
    %3270 = vmatprep.subr.mxu0 0.0
    %3271 = vmatpush2.msra.mxu0 0.0
    %3272 = vmatprep.subr.mxu0 0.0
    %3273 = vmatpush2.msra.mxu0 0.0
    %3274 = vmatprep.subr.mxu0 0.0
    %3275 = vmatpush2.msra.mxu0 0.0
    %3276 = vmatprep.subr.mxu0 0.0
    %3277 = vmatpush2.msra.mxu0 0.0
    %3278 = vmatprep.subr.mxu0 0.0
    %3279 = vmatpush2.msra.mxu0 0.0
    %3280 = vmatprep.subr.mxu0 0.0
    %3281 = vmatpush2.msra.mxu0 0.0
    %3282 = vmatprep.subr.mxu0 0.0
    %3283 = vmatpush2.msra.mxu0 0.0
    %3284 = vmatprep.subr.mxu0 0.0
    %3285 = vmatpush2.msra.mxu0 0.0
    %3286 = vmatprep.subr.mxu0 0.0
    %3287 = vmatpush2.msra.mxu0 0.0
    %3288 = vmatprep.subr.mxu0 0.0
    %3289 = vmatpush2.msra.mxu0 0.0
    %3290 = vmatprep.subr.mxu0 0.0
    %3291 = vmatpush2.msra.mxu0 0.0
    %3292 = vmatprep.subr.mxu0 0.0
    %3293 = vmatpush2.msra.mxu0 0.0
    %3294 = vmatprep.subr.mxu0 0.0
    %3295 = vmatpush2.msra.mxu0 0.0
    %3296 = vmatprep.subr.mxu0 0.0
    %3297 = vmatpush2.msra.mxu0 0.0
    %3298 = vmatprep.subr.mxu0 0.0
    %3299 = vmatpush2.msra.mxu0 0.0
    %3300 = vmatprep.subr.mxu0 0.0
    %3301 = vmatpush2.msra.mxu0 0.0
    %3302 = vmatprep.mubr.f32.mxu0 0.0
    %3303 = vmatmul.mubr.f32.gmra.mxu0 %v3236
    %v3304 = vpop.f32.mrf.mxu0
    %v3305 = vadd.f32 0.0, %v3304
    %v3306 = vpop.f32.mrf.mxu0
    %3307 = vmatprep.mubr.f32.mxu0 0.0
    %3308 = vmatmul.mubr.f32.gmra.mxu0 %v3237
    %v3309 = vpop.f32.mrf.mxu0
    %v3310 = vadd.f32 0.0, %v3309
    %v3311 = vpop.f32.mrf.mxu0
    %3312 = vdwg.mxu0
    %v3313 = vsel %vm1460, %v3305, -inf
    %3314 = vmax.xlane.f32.xlu0 %v3313
    %v3315 = vpop.xlane.xlu0 %3314
    %v3316 = vsel %vm1460, %v3310, -inf
    %3317 = vmax.xlane.f32.xlu0 %v3316
    %v3318 = vpop.xlane.xlu0 %3317
    %v3319 = vsub.f32 %v3305, %v3315
    %v3320 = vsub.f32 %v3310, %v3318
    %v3321 = vmul.f32 %v3319, 1.442695
    %v3322 = vpow.pop %v3321
    %v3323 = vmul.f32 %v3320, 1.442695
    %v3324 = vpow.pop %v3323
    %v3325 = vsel %vm1460, %v3322, 0.0
    %3326 = vadd.xlane.f32.xlu0 %v3325
    %v3327 = vpop.xlane.xlu0 %3326
    %v3328 = vsel %vm1460, %v3324, 0.0
    %3329 = vadd.xlane.f32.xlu0 %v3328
    %v3330 = vpop.xlane.xlu0 %3329
    %v3331 = vrcp.pop %v3327
    %v3332 = vmul.f32 %v3322, %v3331
    %v3333 = vrcp.pop %v3330
    %v3334 = vmul.f32 %v3324, %v3333
    %v3335 = vlaneseq
    %v3336 = vshrl.u32 %v3335, 7
    %v3337 = vsub.s32 0, %v3336
    %v3338 = vrot.slane %v3149, %v3337
    %v3339 = vlaneseq
    %v3340 = vshrl.u32 %v3339, 7
    %v3341 = vsub.s32 0, %v3340
    %v3342 = vrot.slane %v3150, %v3341
    %v3344 = vsel %vm1460, %v3332, 0
    %v3347 = vsel %vm1460, %v3334, 0
    %3349 = vmatprep.subr.mxu0 0.0
    %3350 = vmatpush1.msra.mxu0 0.0
    %3351 = vmatprep.subr.mxu0 0.0
    %3352 = vmatpush1.msra.mxu0 0.0
    %3353 = vmatprep.subr.mxu0 0.0
    %3354 = vmatpush1.msra.mxu0 0.0
    %3355 = vmatprep.subr.mxu0 0.0
    %3356 = vmatpush1.msra.mxu0 0.0
    %3357 = vmatprep.subr.mxu0 0.0
    %3358 = vmatpush1.msra.mxu0 0.0
    %3359 = vmatprep.subr.mxu0 0.0
    %3360 = vmatpush1.msra.mxu0 0.0
    %3361 = vmatprep.subr.mxu0 0.0
    %3362 = vmatpush1.msra.mxu0 0.0
    %3363 = vmatprep.subr.mxu0 0.0
    %3364 = vmatpush1.msra.mxu0 0.0
    %3365 = vmatprep.subr.mxu0 0.0
    %3366 = vmatpush1.msra.mxu0 0.0
    %3367 = vmatprep.subr.mxu0 0.0
    %3368 = vmatpush1.msra.mxu0 0.0
    %3369 = vmatprep.subr.mxu0 0.0
    %3370 = vmatpush1.msra.mxu0 0.0
    %3371 = vmatprep.subr.mxu0 0.0
    %3372 = vmatpush1.msra.mxu0 0.0
    %3373 = vmatprep.subr.mxu0 0.0
    %3374 = vmatpush1.msra.mxu0 0.0
    %3375 = vmatprep.subr.mxu0 0.0
    %3376 = vmatpush1.msra.mxu0 0.0
    %3377 = vmatprep.subr.mxu0 0.0
    %3378 = vmatpush1.msra.mxu0 0.0
    %3379 = vmatprep.subr.mxu0 0.0
    %3380 = vmatpush1.msra.mxu0 %v1471
    %3381 = vmatprep.subr.mxu0 0.0
    %3382 = vmatpush2.msra.mxu0 0.0
    %3383 = vmatprep.subr.mxu0 0.0
    %3384 = vmatpush2.msra.mxu0 0.0
    %3385 = vmatprep.subr.mxu0 0.0
    %3386 = vmatpush2.msra.mxu0 0.0
    %3387 = vmatprep.subr.mxu0 0.0
    %3388 = vmatpush2.msra.mxu0 0.0
    %3389 = vmatprep.subr.mxu0 0.0
    %3390 = vmatpush2.msra.mxu0 0.0
    %3391 = vmatprep.subr.mxu0 0.0
    %3392 = vmatpush2.msra.mxu0 0.0
    %3393 = vmatprep.subr.mxu0 0.0
    %3394 = vmatpush2.msra.mxu0 0.0
    %3395 = vmatprep.subr.mxu0 0.0
    %3396 = vmatpush2.msra.mxu0 0.0
    %3397 = vmatprep.subr.mxu0 0.0
    %3398 = vmatpush2.msra.mxu0 0.0
    %3399 = vmatprep.subr.mxu0 0.0
    %3400 = vmatpush2.msra.mxu0 0.0
    %3401 = vmatprep.subr.mxu0 0.0
    %3402 = vmatpush2.msra.mxu0 0.0
    %3403 = vmatprep.subr.mxu0 0.0
    %3404 = vmatpush2.msra.mxu0 0.0
    %3405 = vmatprep.subr.mxu0 0.0
    %3406 = vmatpush2.msra.mxu0 0.0
    %3407 = vmatprep.subr.mxu0 0.0
    %3408 = vmatpush2.msra.mxu0 0.0
    %3409 = vmatprep.subr.mxu0 0.0
    %3410 = vmatpush2.msra.mxu0 0.0
    %3411 = vmatprep.subr.mxu0 0.0
    %3412 = vmatpush2.msra.mxu0 0.0
    %3413 = vmatprep.mubr.f32.mxu0 0.0
    %3414 = vmatmul.mubr.f32.gmra.mxu0 %v3344
    %v3415 = vpop.f32.mrf.mxu0
    %v3416 = vadd.f32 0.0, %v3415
    %v3417 = vpop.f32.mrf.mxu0
    %3418 = vmatprep.mubr.f32.mxu0 0.0
    %3419 = vmatmul.mubr.f32.gmra.mxu0 %v3347
    %v3420 = vpop.f32.mrf.mxu0
    %v3421 = vadd.f32 0.0, %v3420
    %v3422 = vpop.f32.mrf.mxu0
    %3423 = vdwg.mxu0
    %v3424 = vmul.f32 %v3416, %v3338
    %v3425 = vmul.f32 %v3421, %v3342
    %3426 = vmatprep.subr.mxu0 0.0
    %3427 = vmatpush1.msra.mxu0 %v394
    %3428 = vmatprep.subr.mxu0 0.0
    %3429 = vmatpush1.msra.mxu0 %v393
    %3430 = vmatprep.subr.mxu0 0.0
    %3431 = vmatpush1.msra.mxu0 %v392
    %3432 = vmatprep.subr.mxu0 0.0
    %3433 = vmatpush1.msra.mxu0 %v391
    %3434 = vmatprep.subr.mxu0 0.0
    %3435 = vmatpush1.msra.mxu0 %v390
    %3436 = vmatprep.subr.mxu0 0.0
    %3437 = vmatpush1.msra.mxu0 %v389
    %3438 = vmatprep.subr.mxu0 0.0
    %3439 = vmatpush1.msra.mxu0 %v388
    %3440 = vmatprep.subr.mxu0 0.0
    %3441 = vmatpush1.msra.mxu0 %v387
    %3442 = vmatprep.subr.mxu0 0.0
    %3443 = vmatpush1.msra.mxu0 %v386
    %3444 = vmatprep.subr.mxu0 0.0
    %3445 = vmatpush1.msra.mxu0 %v385
    %3446 = vmatprep.subr.mxu0 0.0
    %3447 = vmatpush1.msra.mxu0 %v384
    %3448 = vmatprep.subr.mxu0 0.0
    %3449 = vmatpush1.msra.mxu0 %v383
    %3450 = vmatprep.subr.mxu0 0.0
    %3451 = vmatpush1.msra.mxu0 %v382
    %3452 = vmatprep.subr.mxu0 0.0
    %3453 = vmatpush1.msra.mxu0 %v381
    %3454 = vmatprep.subr.mxu0 0.0
    %3455 = vmatpush1.msra.mxu0 %v380
    %3456 = vmatprep.subr.mxu0 0.0
    %3457 = vmatpush1.msra.mxu0 %v379
    %3458 = vmatprep.subr.mxu0 0.0
    %3459 = vmatpush2.msra.mxu0 0.0
    %3460 = vmatprep.subr.mxu0 0.0
    %3461 = vmatpush2.msra.mxu0 0.0
    %3462 = vmatprep.subr.mxu0 0.0
    %3463 = vmatpush2.msra.mxu0 0.0
    %3464 = vmatprep.subr.mxu0 0.0
    %3465 = vmatpush2.msra.mxu0 0.0
    %3466 = vmatprep.subr.mxu0 0.0
    %3467 = vmatpush2.msra.mxu0 0.0
    %3468 = vmatprep.subr.mxu0 0.0
    %3469 = vmatpush2.msra.mxu0 0.0
    %3470 = vmatprep.subr.mxu0 0.0
    %3471 = vmatpush2.msra.mxu0 0.0
    %3472 = vmatprep.subr.mxu0 0.0
    %3473 = vmatpush2.msra.mxu0 0.0
    %3474 = vmatprep.subr.mxu0 0.0
    %3475 = vmatpush2.msra.mxu0 0.0
    %3476 = vmatprep.subr.mxu0 0.0
    %3477 = vmatpush2.msra.mxu0 0.0
    %3478 = vmatprep.subr.mxu0 0.0
    %3479 = vmatpush2.msra.mxu0 0.0
    %3480 = vmatprep.subr.mxu0 0.0
    %3481 = vmatpush2.msra.mxu0 0.0
    %3482 = vmatprep.subr.mxu0 0.0
    %3483 = vmatpush2.msra.mxu0 0.0
    %3484 = vmatprep.subr.mxu0 0.0
    %3485 = vmatpush2.msra.mxu0 0.0
    %3486 = vmatprep.subr.mxu0 0.0
    %3487 = vmatpush2.msra.mxu0 0.0
    %3488 = vmatprep.subr.mxu0 0.0
    %3489 = vmatpush2.msra.mxu0 0.0
    %3490 = vmatprep.mubr.f32.mxu0 0.0
    %3491 = vmatmul.mubr.f32.gmra.mxu0 %v3424
    %v3492 = vpop.f32.mrf.mxu0
    %v3493 = vadd.f32 0.0, %v3492
    %v3494 = vpop.f32.mrf.mxu0
    %3495 = vmatprep.mubr.f32.mxu0 0.0
    %3496 = vmatmul.mubr.f32.gmra.mxu0 %v3425
    %v3497 = vpop.f32.mrf.mxu0
    %v3498 = vadd.f32 0.0, %v3497
    %v3499 = vpop.f32.mrf.mxu0
    %3500 = vdwg.mxu0
    %v3501 = vmul.f32 %v3493, 0.5
    %v3502 = vmul.f32 %v3498, 0.5
    %v3503 = vmul.f32 %v3493, 0.044715
    %v3504 = vmul.f32 %v3498, 0.044715
    %v3505 = vmul.f32 %v3503, %v3493
    %v3506 = vmul.f32 %v3504, %v3498
    %v3507 = vmul.f32 %v3505, %v3493
    %v3508 = vmul.f32 %v3506, %v3498
    %v3509 = vadd.f32 %v3493, %v3507
    %v3510 = vadd.f32 %v3498, %v3508
    %v3511 = vmul.f32 %v3509, 0.7978846
    %v3512 = vmul.f32 %v3510, 0.7978846
    %v3513 = vtanh.pop %v3511
    %v3514 = vtanh.pop %v3512
    %v3515 = vadd.f32 %v3513, 1.0
    %v3516 = vadd.f32 %v3514, 1.0
    %v3517 = vmul.f32 %v3501, %v3515
    %v3518 = vmul.f32 %v3502, %v3516
    %3519 = vmatprep.subr.mxu0 0.0
    %3520 = vmatpush1.msra.mxu0 0.0
    %3521 = vmatprep.subr.mxu0 0.0
    %3522 = vmatpush1.msra.mxu0 0.0
    %3523 = vmatprep.subr.mxu0 0.0
    %3524 = vmatpush1.msra.mxu0 0.0
    %3525 = vmatprep.subr.mxu0 0.0
    %3526 = vmatpush1.msra.mxu0 0.0
    %3527 = vmatprep.subr.mxu0 0.0
    %3528 = vmatpush1.msra.mxu0 0.0
    %3529 = vmatprep.subr.mxu0 0.0
    %3530 = vmatpush1.msra.mxu0 0.0
    %3531 = vmatprep.subr.mxu0 0.0
    %3532 = vmatpush1.msra.mxu0 0.0
    %3533 = vmatprep.subr.mxu0 0.0
    %3534 = vmatpush1.msra.mxu0 0.0
    %3535 = vmatprep.subr.mxu0 0.0
    %3536 = vmatpush1.msra.mxu0 0.0
    %3537 = vmatprep.subr.mxu0 0.0
    %3538 = vmatpush1.msra.mxu0 0.0
    %3539 = vmatprep.subr.mxu0 0.0
    %3540 = vmatpush1.msra.mxu0 0.0
    %3541 = vmatprep.subr.mxu0 0.0
    %3542 = vmatpush1.msra.mxu0 0.0
    %3543 = vmatprep.subr.mxu0 0.0
    %3544 = vmatpush1.msra.mxu0 %v378
    %3545 = vmatprep.subr.mxu0 0.0
    %3546 = vmatpush1.msra.mxu0 %v377
    %3547 = vmatprep.subr.mxu0 0.0
    %3548 = vmatpush1.msra.mxu0 %v376
    %3549 = vmatprep.subr.mxu0 0.0
    %3550 = vmatpush1.msra.mxu0 %v375
    %3551 = vmatprep.subr.mxu0 0.0
    %3552 = vmatpush2.msra.mxu0 0.0
    %3553 = vmatprep.subr.mxu0 0.0
    %3554 = vmatpush2.msra.mxu0 0.0
    %3555 = vmatprep.subr.mxu0 0.0
    %3556 = vmatpush2.msra.mxu0 0.0
    %3557 = vmatprep.subr.mxu0 0.0
    %3558 = vmatpush2.msra.mxu0 0.0
    %3559 = vmatprep.subr.mxu0 0.0
    %3560 = vmatpush2.msra.mxu0 0.0
    %3561 = vmatprep.subr.mxu0 0.0
    %3562 = vmatpush2.msra.mxu0 0.0
    %3563 = vmatprep.subr.mxu0 0.0
    %3564 = vmatpush2.msra.mxu0 0.0
    %3565 = vmatprep.subr.mxu0 0.0
    %3566 = vmatpush2.msra.mxu0 0.0
    %3567 = vmatprep.subr.mxu0 0.0
    %3568 = vmatpush2.msra.mxu0 0.0
    %3569 = vmatprep.subr.mxu0 0.0
    %3570 = vmatpush2.msra.mxu0 0.0
    %3571 = vmatprep.subr.mxu0 0.0
    %3572 = vmatpush2.msra.mxu0 0.0
    %3573 = vmatprep.subr.mxu0 0.0
    %3574 = vmatpush2.msra.mxu0 0.0
    %3575 = vmatprep.subr.mxu0 0.0
    %3576 = vmatpush2.msra.mxu0 0.0
    %3577 = vmatprep.subr.mxu0 0.0
    %3578 = vmatpush2.msra.mxu0 0.0
    %3579 = vmatprep.subr.mxu0 0.0
    %3580 = vmatpush2.msra.mxu0 0.0
    %3581 = vmatprep.subr.mxu0 0.0
    %3582 = vmatpush2.msra.mxu0 0.0
    %3583 = vmatprep.mubr.f32.mxu0 0.0
    %3584 = vmatmul.mubr.f32.gmra.mxu0 %v779
    %v3585 = vpop.f32.mrf.mxu0
    %v3586 = vadd.f32 0.0, %v3585
    %v3587 = vpop.f32.mrf.mxu0
    %3588 = vmatprep.mubr.f32.mxu0 0.0
    %3589 = vmatmul.mubr.f32.gmra.mxu0 %v782
    %v3590 = vpop.f32.mrf.mxu0
    %v3591 = vadd.f32 0.0, %v3590
    %v3592 = vpop.f32.mrf.mxu0
    %3593 = vdwg.mxu0
    %v3594 = vlaneseq
    %v3595 = vshrl.u32 %v3594, 7
    %v3596 = vsub.s32 0, %v3595
    %v3597 = vrot.slane %v3147, %v3596
    %v3598 = vlaneseq
    %v3599 = vshrl.u32 %v3598, 7
    %v3600 = vsub.s32 0, %v3599
    %v3601 = vrot.slane %v3148, %v3600
    %v3602 = vmul.f32 %v3586, %v3597
    %v3603 = vmul.f32 %v3591, %v3601
    %3604 = vmatprep.subr.mxu0 0.0
    %3605 = vmatpush1.msra.mxu0 %v374
    %3606 = vmatprep.subr.mxu0 0.0
    %3607 = vmatpush1.msra.mxu0 %v373
    %3608 = vmatprep.subr.mxu0 0.0
    %3609 = vmatpush1.msra.mxu0 %v372
    %3610 = vmatprep.subr.mxu0 0.0
    %3611 = vmatpush1.msra.mxu0 %v371
    %3612 = vmatprep.subr.mxu0 0.0
    %3613 = vmatpush1.msra.mxu0 %v370
    %3614 = vmatprep.subr.mxu0 0.0
    %3615 = vmatpush1.msra.mxu0 %v369
    %3616 = vmatprep.subr.mxu0 0.0
    %3617 = vmatpush1.msra.mxu0 %v368
    %3618 = vmatprep.subr.mxu0 0.0
    %3619 = vmatpush1.msra.mxu0 %v367
    %3620 = vmatprep.subr.mxu0 0.0
    %3621 = vmatpush1.msra.mxu0 %v366
    %3622 = vmatprep.subr.mxu0 0.0
    %3623 = vmatpush1.msra.mxu0 %v365
    %3624 = vmatprep.subr.mxu0 0.0
    %3625 = vmatpush1.msra.mxu0 %v364
    %3626 = vmatprep.subr.mxu0 0.0
    %3627 = vmatpush1.msra.mxu0 %v363
    %3628 = vmatprep.subr.mxu0 0.0
    %3629 = vmatpush1.msra.mxu0 %v362
    %3630 = vmatprep.subr.mxu0 0.0
    %3631 = vmatpush1.msra.mxu0 %v361
    %3632 = vmatprep.subr.mxu0 0.0
    %3633 = vmatpush1.msra.mxu0 %v360
    %3634 = vmatprep.subr.mxu0 0.0
    %3635 = vmatpush1.msra.mxu0 %v359
    %3636 = vmatprep.subr.mxu0 0.0
    %3637 = vmatpush2.msra.mxu0 0.0
    %3638 = vmatprep.subr.mxu0 0.0
    %3639 = vmatpush2.msra.mxu0 0.0
    %3640 = vmatprep.subr.mxu0 0.0
    %3641 = vmatpush2.msra.mxu0 0.0
    %3642 = vmatprep.subr.mxu0 0.0
    %3643 = vmatpush2.msra.mxu0 0.0
    %3644 = vmatprep.subr.mxu0 0.0
    %3645 = vmatpush2.msra.mxu0 0.0
    %3646 = vmatprep.subr.mxu0 0.0
    %3647 = vmatpush2.msra.mxu0 0.0
    %3648 = vmatprep.subr.mxu0 0.0
    %3649 = vmatpush2.msra.mxu0 0.0
    %3650 = vmatprep.subr.mxu0 0.0
    %3651 = vmatpush2.msra.mxu0 0.0
    %3652 = vmatprep.subr.mxu0 0.0
    %3653 = vmatpush2.msra.mxu0 0.0
    %3654 = vmatprep.subr.mxu0 0.0
    %3655 = vmatpush2.msra.mxu0 0.0
    %3656 = vmatprep.subr.mxu0 0.0
    %3657 = vmatpush2.msra.mxu0 0.0
    %3658 = vmatprep.subr.mxu0 0.0
    %3659 = vmatpush2.msra.mxu0 0.0
    %3660 = vmatprep.subr.mxu0 0.0
    %3661 = vmatpush2.msra.mxu0 0.0
    %3662 = vmatprep.subr.mxu0 0.0
    %3663 = vmatpush2.msra.mxu0 0.0
    %3664 = vmatprep.subr.mxu0 0.0
    %3665 = vmatpush2.msra.mxu0 0.0
    %3666 = vmatprep.subr.mxu0 0.0
    %3667 = vmatpush2.msra.mxu0 0.0
    %3668 = vmatprep.mubr.f32.mxu0 0.0
    %3669 = vmatmul.mubr.f32.gmra.mxu0 %v3602
    %v3670 = vpop.f32.mrf.mxu0
    %v3671 = vadd.f32 0.0, %v3670
    %v3672 = vpop.f32.mrf.mxu0
    %3673 = vmatprep.mubr.f32.mxu0 0.0
    %3674 = vmatmul.mubr.f32.gmra.mxu0 %v3603
    %v3675 = vpop.f32.mrf.mxu0
    %v3676 = vadd.f32 0.0, %v3675
    %v3677 = vpop.f32.mrf.mxu0
    %3678 = vdwg.mxu0
    %v3679 = vsel %vm1460, %v3671, -inf
    %3680 = vmax.xlane.f32.xlu0 %v3679
    %v3681 = vpop.xlane.xlu0 %3680
    %v3682 = vsel %vm1460, %v3676, -inf
    %3683 = vmax.xlane.f32.xlu0 %v3682
    %v3684 = vpop.xlane.xlu0 %3683
    %v3685 = vsub.f32 %v3671, %v3681
    %v3686 = vsub.f32 %v3676, %v3684
    %v3687 = vmul.f32 %v3685, 1.442695
    %v3688 = vpow.pop %v3687
    %v3689 = vmul.f32 %v3686, 1.442695
    %v3690 = vpow.pop %v3689
    %v3691 = vsel %vm1460, %v3688, 0.0
    %3692 = vadd.xlane.f32.xlu0 %v3691
    %v3693 = vpop.xlane.xlu0 %3692
    %v3694 = vsel %vm1460, %v3690, 0.0
    %3695 = vadd.xlane.f32.xlu0 %v3694
    %v3696 = vpop.xlane.xlu0 %3695
    %v3697 = vrcp.pop %v3693
    %v3698 = vmul.f32 %v3688, %v3697
    %v3699 = vrcp.pop %v3696
    %v3700 = vmul.f32 %v3690, %v3699
    %v3701 = vlaneseq
    %v3702 = vshrl.u32 %v3701, 7
    %v3703 = vsub.s32 0, %v3702
    %v3704 = vrot.slane %v3151, %v3703
    %v3705 = vlaneseq
    %v3706 = vshrl.u32 %v3705, 7
    %v3707 = vsub.s32 0, %v3706
    %v3708 = vrot.slane %v3152, %v3707
    %v3710 = vsel %vm1460, %v3698, 0
    %v3713 = vsel %vm1460, %v3700, 0
    %3715 = vmatprep.subr.mxu0 0.0
    %3716 = vmatpush1.msra.mxu0 0.0
    %3717 = vmatprep.subr.mxu0 0.0
    %3718 = vmatpush1.msra.mxu0 0.0
    %3719 = vmatprep.subr.mxu0 0.0
    %3720 = vmatpush1.msra.mxu0 0.0
    %3721 = vmatprep.subr.mxu0 0.0
    %3722 = vmatpush1.msra.mxu0 0.0
    %3723 = vmatprep.subr.mxu0 0.0
    %3724 = vmatpush1.msra.mxu0 0.0
    %3725 = vmatprep.subr.mxu0 0.0
    %3726 = vmatpush1.msra.mxu0 0.0
    %3727 = vmatprep.subr.mxu0 0.0
    %3728 = vmatpush1.msra.mxu0 0.0
    %3729 = vmatprep.subr.mxu0 0.0
    %3730 = vmatpush1.msra.mxu0 0.0
    %3731 = vmatprep.subr.mxu0 0.0
    %3732 = vmatpush1.msra.mxu0 0.0
    %3733 = vmatprep.subr.mxu0 0.0
    %3734 = vmatpush1.msra.mxu0 0.0
    %3735 = vmatprep.subr.mxu0 0.0
    %3736 = vmatpush1.msra.mxu0 0.0
    %3737 = vmatprep.subr.mxu0 0.0
    %3738 = vmatpush1.msra.mxu0 0.0
    %3739 = vmatprep.subr.mxu0 0.0
    %3740 = vmatpush1.msra.mxu0 0.0
    %3741 = vmatprep.subr.mxu0 0.0
    %3742 = vmatpush1.msra.mxu0 0.0
    %3743 = vmatprep.subr.mxu0 0.0
    %3744 = vmatpush1.msra.mxu0 0.0
    %3745 = vmatprep.subr.mxu0 0.0
    %3746 = vmatpush1.msra.mxu0 %v1471
    %3747 = vmatprep.subr.mxu0 0.0
    %3748 = vmatpush2.msra.mxu0 0.0
    %3749 = vmatprep.subr.mxu0 0.0
    %3750 = vmatpush2.msra.mxu0 0.0
    %3751 = vmatprep.subr.mxu0 0.0
    %3752 = vmatpush2.msra.mxu0 0.0
    %3753 = vmatprep.subr.mxu0 0.0
    %3754 = vmatpush2.msra.mxu0 0.0
    %3755 = vmatprep.subr.mxu0 0.0
    %3756 = vmatpush2.msra.mxu0 0.0
    %3757 = vmatprep.subr.mxu0 0.0
    %3758 = vmatpush2.msra.mxu0 0.0
    %3759 = vmatprep.subr.mxu0 0.0
    %3760 = vmatpush2.msra.mxu0 0.0
    %3761 = vmatprep.subr.mxu0 0.0
    %3762 = vmatpush2.msra.mxu0 0.0
    %3763 = vmatprep.subr.mxu0 0.0
    %3764 = vmatpush2.msra.mxu0 0.0
    %3765 = vmatprep.subr.mxu0 0.0
    %3766 = vmatpush2.msra.mxu0 0.0
    %3767 = vmatprep.subr.mxu0 0.0
    %3768 = vmatpush2.msra.mxu0 0.0
    %3769 = vmatprep.subr.mxu0 0.0
    %3770 = vmatpush2.msra.mxu0 0.0
    %3771 = vmatprep.subr.mxu0 0.0
    %3772 = vmatpush2.msra.mxu0 0.0
    %3773 = vmatprep.subr.mxu0 0.0
    %3774 = vmatpush2.msra.mxu0 0.0
    %3775 = vmatprep.subr.mxu0 0.0
    %3776 = vmatpush2.msra.mxu0 0.0
    %3777 = vmatprep.subr.mxu0 0.0
    %3778 = vmatpush2.msra.mxu0 0.0
    %3779 = vmatprep.mubr.f32.mxu0 0.0
    %3780 = vmatmul.mubr.f32.gmra.mxu0 %v3710
    %v3781 = vpop.f32.mrf.mxu0
    %v3782 = vadd.f32 0.0, %v3781
    %v3783 = vpop.f32.mrf.mxu0
    %3784 = vmatprep.mubr.f32.mxu0 0.0
    %3785 = vmatmul.mubr.f32.gmra.mxu0 %v3713
    %v3786 = vpop.f32.mrf.mxu0
    %v3787 = vadd.f32 0.0, %v3786
    %v3788 = vpop.f32.mrf.mxu0
    %3789 = vdwg.mxu0
    %v3790 = vmul.f32 %v3782, %v3704
    %v3791 = vmul.f32 %v3787, %v3708
    %3792 = vmatprep.subr.mxu0 0.0
    %3793 = vmatpush1.msra.mxu0 %v394
    %3794 = vmatprep.subr.mxu0 0.0
    %3795 = vmatpush1.msra.mxu0 %v393
    %3796 = vmatprep.subr.mxu0 0.0
    %3797 = vmatpush1.msra.mxu0 %v392
    %3798 = vmatprep.subr.mxu0 0.0
    %3799 = vmatpush1.msra.mxu0 %v391
    %3800 = vmatprep.subr.mxu0 0.0
    %3801 = vmatpush1.msra.mxu0 %v390
    %3802 = vmatprep.subr.mxu0 0.0
    %3803 = vmatpush1.msra.mxu0 %v389
    %3804 = vmatprep.subr.mxu0 0.0
    %3805 = vmatpush1.msra.mxu0 %v388
    %3806 = vmatprep.subr.mxu0 0.0
    %3807 = vmatpush1.msra.mxu0 %v387
    %3808 = vmatprep.subr.mxu0 0.0
    %3809 = vmatpush1.msra.mxu0 %v386
    %3810 = vmatprep.subr.mxu0 0.0
    %3811 = vmatpush1.msra.mxu0 %v385
    %3812 = vmatprep.subr.mxu0 0.0
    %3813 = vmatpush1.msra.mxu0 %v384
    %3814 = vmatprep.subr.mxu0 0.0
    %3815 = vmatpush1.msra.mxu0 %v383
    %3816 = vmatprep.subr.mxu0 0.0
    %3817 = vmatpush1.msra.mxu0 %v382
    %3818 = vmatprep.subr.mxu0 0.0
    %3819 = vmatpush1.msra.mxu0 %v381
    %3820 = vmatprep.subr.mxu0 0.0
    %3821 = vmatpush1.msra.mxu0 %v380
    %3822 = vmatprep.subr.mxu0 0.0
    %3823 = vmatpush1.msra.mxu0 %v379
    %3824 = vmatprep.subr.mxu0 0.0
    %3825 = vmatpush2.msra.mxu0 0.0
    %3826 = vmatprep.subr.mxu0 0.0
    %3827 = vmatpush2.msra.mxu0 0.0
    %3828 = vmatprep.subr.mxu0 0.0
    %3829 = vmatpush2.msra.mxu0 0.0
    %3830 = vmatprep.subr.mxu0 0.0
    %3831 = vmatpush2.msra.mxu0 0.0
    %3832 = vmatprep.subr.mxu0 0.0
    %3833 = vmatpush2.msra.mxu0 0.0
    %3834 = vmatprep.subr.mxu0 0.0
    %3835 = vmatpush2.msra.mxu0 0.0
    %3836 = vmatprep.subr.mxu0 0.0
    %3837 = vmatpush2.msra.mxu0 0.0
    %3838 = vmatprep.subr.mxu0 0.0
    %3839 = vmatpush2.msra.mxu0 0.0
    %3840 = vmatprep.subr.mxu0 0.0
    %3841 = vmatpush2.msra.mxu0 0.0
    %3842 = vmatprep.subr.mxu0 0.0
    %3843 = vmatpush2.msra.mxu0 0.0
    %3844 = vmatprep.subr.mxu0 0.0
    %3845 = vmatpush2.msra.mxu0 0.0
    %3846 = vmatprep.subr.mxu0 0.0
    %3847 = vmatpush2.msra.mxu0 0.0
    %3848 = vmatprep.subr.mxu0 0.0
    %3849 = vmatpush2.msra.mxu0 0.0
    %3850 = vmatprep.subr.mxu0 0.0
    %3851 = vmatpush2.msra.mxu0 0.0
    %3852 = vmatprep.subr.mxu0 0.0
    %3853 = vmatpush2.msra.mxu0 0.0
    %3854 = vmatprep.subr.mxu0 0.0
    %3855 = vmatpush2.msra.mxu0 0.0
    %3856 = vmatprep.mubr.f32.mxu0 0.0
    %3857 = vmatmul.mubr.f32.gmra.mxu0 %v3790
    %v3858 = vpop.f32.mrf.mxu0
    %v3859 = vadd.f32 0.0, %v3858
    %v3860 = vpop.f32.mrf.mxu0
    %3861 = vmatprep.mubr.f32.mxu0 0.0
    %3862 = vmatmul.mubr.f32.gmra.mxu0 %v3791
    %v3863 = vpop.f32.mrf.mxu0
    %v3864 = vadd.f32 0.0, %v3863
    %v3865 = vpop.f32.mrf.mxu0
    %3866 = vdwg.mxu0
    %v3867 = vmul.f32 %v3859, 0.5
    %v3868 = vmul.f32 %v3864, 0.5
    %v3869 = vmul.f32 %v3859, 0.044715
    %v3870 = vmul.f32 %v3864, 0.044715
    %v3871 = vmul.f32 %v3869, %v3859
    %v3872 = vmul.f32 %v3870, %v3864
    %v3873 = vmul.f32 %v3871, %v3859
    %v3874 = vmul.f32 %v3872, %v3864
    %v3875 = vadd.f32 %v3859, %v3873
    %v3876 = vadd.f32 %v3864, %v3874
    %v3877 = vmul.f32 %v3875, 0.7978846
    %v3878 = vmul.f32 %v3876, 0.7978846
    %v3879 = vtanh.pop %v3877
    %v3880 = vtanh.pop %v3878
    %v3881 = vadd.f32 %v3879, 1.0
    %v3882 = vadd.f32 %v3880, 1.0
    %v3883 = vmul.f32 %v3867, %v3881
    %v3884 = vmul.f32 %v3868, %v3882
    %v3885 = vld [vmem:[#allocation19] sm:$0xff]
    %v3886 = vld [vmem:[#allocation19 + $0x8] sm:$0xff]
    %v3887 = vld [vmem:[#allocation19 + $0x10] sm:$0xff]
    %v3888 = vld [vmem:[#allocation19 + $0x18] sm:$0xff]
    %v3889 = vld [vmem:[#allocation20] sm:$0xff]
    %v3890 = vld [vmem:[#allocation20 + $0x8] sm:$0xff]
    %v3891 = vld [vmem:[#allocation20 + $0x10] sm:$0xff]
    %v3892 = vld [vmem:[#allocation20 + $0x18] sm:$0xff]
    %v3894 = vsel %vm409, %v3883, 0
    %v3897 = vsel %vm409, %v3884, 0
    %3899 = vmatprep.subr.mxu0 0.0
    %3900 = vmatpush1.msra.mxu0 0.0
    %3901 = vmatprep.subr.mxu0 0.0
    %3902 = vmatpush1.msra.mxu0 0.0
    %3903 = vmatprep.subr.mxu0 0.0
    %3904 = vmatpush1.msra.mxu0 0.0
    %3905 = vmatprep.subr.mxu0 0.0
    %3906 = vmatpush1.msra.mxu0 0.0
    %3907 = vmatprep.subr.mxu0 0.0
    %3908 = vmatpush1.msra.mxu0 0.0
    %3909 = vmatprep.subr.mxu0 0.0
    %3910 = vmatpush1.msra.mxu0 0.0
    %3911 = vmatprep.subr.mxu0 0.0
    %3912 = vmatpush1.msra.mxu0 0.0
    %3913 = vmatprep.subr.mxu0 0.0
    %3914 = vmatpush1.msra.mxu0 0.0
    %3915 = vmatprep.subr.mxu0 0.0
    %3916 = vmatpush1.msra.mxu0 0.0
    %3917 = vmatprep.subr.mxu0 0.0
    %3918 = vmatpush1.msra.mxu0 0.0
    %3919 = vmatprep.subr.mxu0 0.0
    %3920 = vmatpush1.msra.mxu0 0.0
    %3921 = vmatprep.subr.mxu0 0.0
    %3922 = vmatpush1.msra.mxu0 0.0
    %3923 = vmatprep.subr.mxu0 0.0
    %3924 = vmatpush1.msra.mxu0 %v3892
    %3925 = vmatprep.subr.mxu0 0.0
    %3926 = vmatpush1.msra.mxu0 %v3891
    %3927 = vmatprep.subr.mxu0 0.0
    %3928 = vmatpush1.msra.mxu0 %v3890
    %3929 = vmatprep.subr.mxu0 0.0
    %3930 = vmatpush1.msra.mxu0 %v3889
    %3931 = vmatprep.subr.mxu0 0.0
    %3932 = vmatpush2.msra.mxu0 0.0
    %3933 = vmatprep.subr.mxu0 0.0
    %3934 = vmatpush2.msra.mxu0 0.0
    %3935 = vmatprep.subr.mxu0 0.0
    %3936 = vmatpush2.msra.mxu0 0.0
    %3937 = vmatprep.subr.mxu0 0.0
    %3938 = vmatpush2.msra.mxu0 0.0
    %3939 = vmatprep.subr.mxu0 0.0
    %3940 = vmatpush2.msra.mxu0 0.0
    %3941 = vmatprep.subr.mxu0 0.0
    %3942 = vmatpush2.msra.mxu0 0.0
    %3943 = vmatprep.subr.mxu0 0.0
    %3944 = vmatpush2.msra.mxu0 0.0
    %3945 = vmatprep.subr.mxu0 0.0
    %3946 = vmatpush2.msra.mxu0 0.0
    %3947 = vmatprep.subr.mxu0 0.0
    %3948 = vmatpush2.msra.mxu0 0.0
    %3949 = vmatprep.subr.mxu0 0.0
    %3950 = vmatpush2.msra.mxu0 0.0
    %3951 = vmatprep.subr.mxu0 0.0
    %3952 = vmatpush2.msra.mxu0 0.0
    %3953 = vmatprep.subr.mxu0 0.0
    %3954 = vmatpush2.msra.mxu0 0.0
    %3955 = vmatprep.subr.mxu0 0.0
    %3956 = vmatpush2.msra.mxu0 0.0
    %3957 = vmatprep.subr.mxu0 0.0
    %3958 = vmatpush2.msra.mxu0 0.0
    %3959 = vmatprep.subr.mxu0 0.0
    %3960 = vmatpush2.msra.mxu0 0.0
    %3961 = vmatprep.subr.mxu0 0.0
    %3962 = vmatpush2.msra.mxu0 0.0
    %3963 = vmatprep.mubr.f32.mxu0 0.0
    %3964 = vmatmul.mubr.f32.gmra.mxu0 %v3894
    %v3965 = vpop.f32.mrf.mxu0
    %v3966 = vadd.f32 0.0, %v3965
    %v3967 = vpop.f32.mrf.mxu0
    %3968 = vmatprep.mubr.f32.mxu0 0.0
    %3969 = vmatmul.mubr.f32.gmra.mxu0 %v3897
    %v3970 = vpop.f32.mrf.mxu0
    %v3971 = vadd.f32 0.0, %v3970
    %v3972 = vpop.f32.mrf.mxu0
    %3973 = vdwg.mxu0
    %v3975 = vsel %vm409, %v3517, 0
    %v3978 = vsel %vm409, %v3518, 0
    %3980 = vmatprep.subr.mxu0 0.0
    %3981 = vmatpush1.msra.mxu0 0.0
    %3982 = vmatprep.subr.mxu0 0.0
    %3983 = vmatpush1.msra.mxu0 0.0
    %3984 = vmatprep.subr.mxu0 0.0
    %3985 = vmatpush1.msra.mxu0 0.0
    %3986 = vmatprep.subr.mxu0 0.0
    %3987 = vmatpush1.msra.mxu0 0.0
    %3988 = vmatprep.subr.mxu0 0.0
    %3989 = vmatpush1.msra.mxu0 0.0
    %3990 = vmatprep.subr.mxu0 0.0
    %3991 = vmatpush1.msra.mxu0 0.0
    %3992 = vmatprep.subr.mxu0 0.0
    %3993 = vmatpush1.msra.mxu0 0.0
    %3994 = vmatprep.subr.mxu0 0.0
    %3995 = vmatpush1.msra.mxu0 0.0
    %3996 = vmatprep.subr.mxu0 0.0
    %3997 = vmatpush1.msra.mxu0 0.0
    %3998 = vmatprep.subr.mxu0 0.0
    %3999 = vmatpush1.msra.mxu0 0.0
    %4000 = vmatprep.subr.mxu0 0.0
    %4001 = vmatpush1.msra.mxu0 0.0
    %4002 = vmatprep.subr.mxu0 0.0
    %4003 = vmatpush1.msra.mxu0 0.0
    %4004 = vmatprep.subr.mxu0 0.0
    %4005 = vmatpush1.msra.mxu0 %v3888
    %4006 = vmatprep.subr.mxu0 0.0
    %4007 = vmatpush1.msra.mxu0 %v3887
    %4008 = vmatprep.subr.mxu0 0.0
    %4009 = vmatpush1.msra.mxu0 %v3886
    %4010 = vmatprep.subr.mxu0 0.0
    %4011 = vmatpush1.msra.mxu0 %v3885
    %4012 = vmatprep.subr.mxu0 0.0
    %4013 = vmatpush2.msra.mxu0 0.0
    %4014 = vmatprep.subr.mxu0 0.0
    %4015 = vmatpush2.msra.mxu0 0.0
    %4016 = vmatprep.subr.mxu0 0.0
    %4017 = vmatpush2.msra.mxu0 0.0
    %4018 = vmatprep.subr.mxu0 0.0
    %4019 = vmatpush2.msra.mxu0 0.0
    %4020 = vmatprep.subr.mxu0 0.0
    %4021 = vmatpush2.msra.mxu0 0.0
    %4022 = vmatprep.subr.mxu0 0.0
    %4023 = vmatpush2.msra.mxu0 0.0
    %4024 = vmatprep.subr.mxu0 0.0
    %4025 = vmatpush2.msra.mxu0 0.0
    %4026 = vmatprep.subr.mxu0 0.0
    %4027 = vmatpush2.msra.mxu0 0.0
    %4028 = vmatprep.subr.mxu0 0.0
    %4029 = vmatpush2.msra.mxu0 0.0
    %4030 = vmatprep.subr.mxu0 0.0
    %4031 = vmatpush2.msra.mxu0 0.0
    %4032 = vmatprep.subr.mxu0 0.0
    %4033 = vmatpush2.msra.mxu0 0.0
    %4034 = vmatprep.subr.mxu0 0.0
    %4035 = vmatpush2.msra.mxu0 0.0
    %4036 = vmatprep.subr.mxu0 0.0
    %4037 = vmatpush2.msra.mxu0 0.0
    %4038 = vmatprep.subr.mxu0 0.0
    %4039 = vmatpush2.msra.mxu0 0.0
    %4040 = vmatprep.subr.mxu0 0.0
    %4041 = vmatpush2.msra.mxu0 0.0
    %4042 = vmatprep.subr.mxu0 0.0
    %4043 = vmatpush2.msra.mxu0 0.0
    %4044 = vmatprep.mubr.f32.mxu0 0.0
    %4045 = vmatmul.mubr.f32.gmra.mxu0 %v3975
    %v4046 = vpop.f32.mrf.mxu0
    %v4047 = vadd.f32 %v3966, %v4046
    %v4048 = vpop.f32.mrf.mxu0
    %4049 = vmatprep.mubr.f32.mxu0 0.0
    %4050 = vmatmul.mubr.f32.gmra.mxu0 %v3978
    %v4051 = vpop.f32.mrf.mxu0
    %v4052 = vadd.f32 %v3971, %v4051
    %v4053 = vpop.f32.mrf.mxu0
    %4054 = vdwg.mxu0
    %v4055 = vld [vmem:[%s51] sm:$0x1]
    %v4057 = vlaneseq
    %v4058 = vshrl.u32 %v4057, 7
    %v4059 = vsub.s32 0, %v4058
    %v4060 = vrot.slane %v4055, %v4059
    %v4062 = vadd.f32 %v4047, %v4060
    %v4063 = vadd.f32 %v4052, %v4060
    %v4064 = vmax.f32 %v4062, 0.0
    %v4065 = vmax.f32 %v4063, 0.0
    %vm4066 = vcmask 523264
    %v4068 = vsel %vm4066, %v4064, 0
    %4070 = vmatprep.subr.mxu0 0.0
    %4071 = vmatpush1.xpose.msra.mxu0 0.0
    %4072 = vmatprep.subr.mxu0 0.0
    %4073 = vmatpush1.xpose.msra.mxu0 0.0
    %4074 = vmatprep.subr.mxu0 0.0
    %4075 = vmatpush1.xpose.msra.mxu0 0.0
    %4076 = vmatprep.subr.mxu0 0.0
    %4077 = vmatpush1.xpose.msra.mxu0 0.0
    %4078 = vmatprep.subr.mxu0 0.0
    %4079 = vmatpush1.xpose.msra.mxu0 0.0
    %4080 = vmatprep.subr.mxu0 0.0
    %4081 = vmatpush1.xpose.msra.mxu0 0.0
    %4082 = vmatprep.subr.mxu0 0.0
    %4083 = vmatpush1.xpose.msra.mxu0 0.0
    %4084 = vmatprep.subr.mxu0 0.0
    %4085 = vmatpush1.xpose.msra.mxu0 0.0
    %4086 = vmatprep.subr.mxu0 0.0
    %4087 = vmatpush1.xpose.msra.mxu0 0.0
    %4088 = vmatprep.subr.mxu0 0.0
    %4089 = vmatpush1.xpose.msra.mxu0 0.0
    %4090 = vmatprep.subr.mxu0 0.0
    %4091 = vmatpush1.xpose.msra.mxu0 0.0
    %4092 = vmatprep.subr.mxu0 0.0
    %4093 = vmatpush1.xpose.msra.mxu0 0.0
    %4094 = vmatprep.subr.mxu0 0.0
    %4095 = vmatpush1.xpose.msra.mxu0 0.0
    %4096 = vmatprep.subr.mxu0 0.0
    %4097 = vmatpush1.xpose.msra.mxu0 0.0
    %4098 = vmatprep.subr.mxu0 0.0
    %4099 = vmatpush1.xpose.msra.mxu0 0.0
    %4100 = vmatprep.subr.mxu0 0.0
    %4101 = vmatpush1.xpose.msra.mxu0 %v4068
    %4102 = vmatprep.subr.mxu0 0.0
    %4103 = vmatpush2.xpose.msra.mxu0 0.0
    %4104 = vmatprep.subr.mxu0 0.0
    %4105 = vmatpush2.xpose.msra.mxu0 0.0
    %4106 = vmatprep.subr.mxu0 0.0
    %4107 = vmatpush2.xpose.msra.mxu0 0.0
    %4108 = vmatprep.subr.mxu0 0.0
    %4109 = vmatpush2.xpose.msra.mxu0 0.0
    %4110 = vmatprep.subr.mxu0 0.0
    %4111 = vmatpush2.xpose.msra.mxu0 0.0
    %4112 = vmatprep.subr.mxu0 0.0
    %4113 = vmatpush2.xpose.msra.mxu0 0.0
    %4114 = vmatprep.subr.mxu0 0.0
    %4115 = vmatpush2.xpose.msra.mxu0 0.0
    %4116 = vmatprep.subr.mxu0 0.0
    %4117 = vmatpush2.xpose.msra.mxu0 0.0
    %4118 = vmatprep.subr.mxu0 0.0
    %4119 = vmatpush2.xpose.msra.mxu0 0.0
    %4120 = vmatprep.subr.mxu0 0.0
    %4121 = vmatpush2.xpose.msra.mxu0 0.0
    %4122 = vmatprep.subr.mxu0 0.0
    %4123 = vmatpush2.xpose.msra.mxu0 0.0
    %4124 = vmatprep.subr.mxu0 0.0
    %4125 = vmatpush2.xpose.msra.mxu0 0.0
    %4126 = vmatprep.subr.mxu0 0.0
    %4127 = vmatpush2.xpose.msra.mxu0 0.0
    %4128 = vmatprep.subr.mxu0 0.0
    %4129 = vmatpush2.xpose.msra.mxu0 0.0
    %4130 = vmatprep.subr.mxu0 0.0
    %4131 = vmatpush2.xpose.msra.mxu0 0.0
    %4132 = vmatprep.subr.mxu0 0.0
    %4133 = vmatpush2.xpose.msra.mxu0 0.0
    %4134 = vmatprep.mubr.f32.mxu0 0.0
    %4135 = vmatmul.mubr.f32.gmra.mxu0 %v4068
    %v4136 = vpop.f32.mrf.mxu0
    %v4137 = vadd.f32 0.0, %v4136
    %v4138 = vpop.f32.mrf.mxu0
    %4139 = vdwg.mxu0
    %v4141 = vsel %vm4066, %v4065, 0
    %4143 = vmatprep.subr.mxu0 0.0
    %4144 = vmatpush1.xpose.msra.mxu0 0.0
    %4145 = vmatprep.subr.mxu0 0.0
    %4146 = vmatpush1.xpose.msra.mxu0 0.0
    %4147 = vmatprep.subr.mxu0 0.0
    %4148 = vmatpush1.xpose.msra.mxu0 0.0
    %4149 = vmatprep.subr.mxu0 0.0
    %4150 = vmatpush1.xpose.msra.mxu0 0.0
    %4151 = vmatprep.subr.mxu0 0.0
    %4152 = vmatpush1.xpose.msra.mxu0 0.0
    %4153 = vmatprep.subr.mxu0 0.0
    %4154 = vmatpush1.xpose.msra.mxu0 0.0
    %4155 = vmatprep.subr.mxu0 0.0
    %4156 = vmatpush1.xpose.msra.mxu0 0.0
    %4157 = vmatprep.subr.mxu0 0.0
    %4158 = vmatpush1.xpose.msra.mxu0 0.0
    %4159 = vmatprep.subr.mxu0 0.0
    %4160 = vmatpush1.xpose.msra.mxu0 0.0
    %4161 = vmatprep.subr.mxu0 0.0
    %4162 = vmatpush1.xpose.msra.mxu0 0.0
    %4163 = vmatprep.subr.mxu0 0.0
    %4164 = vmatpush1.xpose.msra.mxu0 0.0
    %4165 = vmatprep.subr.mxu0 0.0
    %4166 = vmatpush1.xpose.msra.mxu0 0.0
    %4167 = vmatprep.subr.mxu0 0.0
    %4168 = vmatpush1.xpose.msra.mxu0 0.0
    %4169 = vmatprep.subr.mxu0 0.0
    %4170 = vmatpush1.xpose.msra.mxu0 0.0
    %4171 = vmatprep.subr.mxu0 0.0
    %4172 = vmatpush1.xpose.msra.mxu0 0.0
    %4173 = vmatprep.subr.mxu0 0.0
    %4174 = vmatpush1.xpose.msra.mxu0 %v4141
    %4175 = vmatprep.subr.mxu0 0.0
    %4176 = vmatpush2.xpose.msra.mxu0 0.0
    %4177 = vmatprep.subr.mxu0 0.0
    %4178 = vmatpush2.xpose.msra.mxu0 0.0
    %4179 = vmatprep.subr.mxu0 0.0
    %4180 = vmatpush2.xpose.msra.mxu0 0.0
    %4181 = vmatprep.subr.mxu0 0.0
    %4182 = vmatpush2.xpose.msra.mxu0 0.0
    %4183 = vmatprep.subr.mxu0 0.0
    %4184 = vmatpush2.xpose.msra.mxu0 0.0
    %4185 = vmatprep.subr.mxu0 0.0
    %4186 = vmatpush2.xpose.msra.mxu0 0.0
    %4187 = vmatprep.subr.mxu0 0.0
    %4188 = vmatpush2.xpose.msra.mxu0 0.0
    %4189 = vmatprep.subr.mxu0 0.0
    %4190 = vmatpush2.xpose.msra.mxu0 0.0
    %4191 = vmatprep.subr.mxu0 0.0
    %4192 = vmatpush2.xpose.msra.mxu0 0.0
    %4193 = vmatprep.subr.mxu0 0.0
    %4194 = vmatpush2.xpose.msra.mxu0 0.0
    %4195 = vmatprep.subr.mxu0 0.0
    %4196 = vmatpush2.xpose.msra.mxu0 0.0
    %4197 = vmatprep.subr.mxu0 0.0
    %4198 = vmatpush2.xpose.msra.mxu0 0.0
    %4199 = vmatprep.subr.mxu0 0.0
    %4200 = vmatpush2.xpose.msra.mxu0 0.0
    %4201 = vmatprep.subr.mxu0 0.0
    %4202 = vmatpush2.xpose.msra.mxu0 0.0
    %4203 = vmatprep.subr.mxu0 0.0
    %4204 = vmatpush2.xpose.msra.mxu0 0.0
    %4205 = vmatprep.subr.mxu0 0.0
    %4206 = vmatpush2.xpose.msra.mxu0 0.0
    %4207 = vmatprep.mubr.f32.mxu0 0.0
    %4208 = vmatmul.mubr.f32.gmra.mxu0 %v4141
    %v4209 = vpop.f32.mrf.mxu0
    %v4210 = vadd.f32 0.0, %v4209
    %v4211 = vpop.f32.mrf.mxu0
    %4212 = vdwg.mxu0
    %vm4213 = vcmask 64512
    %v4214 = vsel %vm4213, %v4137, -inf
    %4215 = vmax.xlane.f32.xlu0 %v4214
    %v4216 = vpop.xlane.xlu0 %4215
    %v4217 = vsel %vm4213, %v4210, -inf
    %4218 = vmax.xlane.f32.xlu0 %v4217
    %v4219 = vpop.xlane.xlu0 %4218
    %v4220 = vsub.f32 %v4137, %v4216
    %v4221 = vsub.f32 %v4210, %v4219
    %v4222 = vmul.f32 %v4220, 1.442695
    %v4223 = vpow.pop %v4222
    %v4224 = vmul.f32 %v4221, 1.442695
    %v4225 = vpow.pop %v4224
    %v4226 = vsel %vm4213, %v4223, 0.0
    %4227 = vadd.xlane.f32.xlu0 %v4226
    %v4228 = vpop.xlane.xlu0 %4227
    %v4229 = vsel %vm4213, %v4225, 0.0
    %4230 = vadd.xlane.f32.xlu0 %v4229
    %v4231 = vpop.xlane.xlu0 %4230
    %v4232 = vrcp.pop %v4228
    %v4233 = vmul.f32 %v4223, %v4232
    %v4234 = vrcp.pop %v4231
    %v4235 = vmul.f32 %v4225, %v4234
    %v4237 = vsel %vm4213, %v4233, 0
    %4239 = vmatprep.subr.mxu0 0.0
    %4240 = vmatpush1.msra.mxu0 0.0
    %4241 = vmatprep.subr.mxu0 0.0
    %4242 = vmatpush1.msra.mxu0 0.0
    %4243 = vmatprep.subr.mxu0 0.0
    %4244 = vmatpush1.msra.mxu0 0.0
    %4245 = vmatprep.subr.mxu0 0.0
    %4246 = vmatpush1.msra.mxu0 0.0
    %4247 = vmatprep.subr.mxu0 0.0
    %4248 = vmatpush1.msra.mxu0 0.0
    %4249 = vmatprep.subr.mxu0 0.0
    %4250 = vmatpush1.msra.mxu0 0.0
    %4251 = vmatprep.subr.mxu0 0.0
    %4252 = vmatpush1.msra.mxu0 0.0
    %4253 = vmatprep.subr.mxu0 0.0
    %4254 = vmatpush1.msra.mxu0 0.0
    %4255 = vmatprep.subr.mxu0 0.0
    %4256 = vmatpush1.msra.mxu0 0.0
    %4257 = vmatprep.subr.mxu0 0.0
    %4258 = vmatpush1.msra.mxu0 0.0
    %4259 = vmatprep.subr.mxu0 0.0
    %4260 = vmatpush1.msra.mxu0 0.0
    %4261 = vmatprep.subr.mxu0 0.0
    %4262 = vmatpush1.msra.mxu0 0.0
    %4263 = vmatprep.subr.mxu0 0.0
    %4264 = vmatpush1.msra.mxu0 0.0
    %4265 = vmatprep.subr.mxu0 0.0
    %4266 = vmatpush1.msra.mxu0 0.0
    %4267 = vmatprep.subr.mxu0 0.0
    %4268 = vmatpush1.msra.mxu0 0.0
    %4269 = vmatprep.subr.mxu0 0.0
    %4270 = vmatpush1.msra.mxu0 %v3517
    %4271 = vmatprep.subr.mxu0 0.0
    %4272 = vmatpush2.msra.mxu0 0.0
    %4273 = vmatprep.subr.mxu0 0.0
    %4274 = vmatpush2.msra.mxu0 0.0
    %4275 = vmatprep.subr.mxu0 0.0
    %4276 = vmatpush2.msra.mxu0 0.0
    %4277 = vmatprep.subr.mxu0 0.0
    %4278 = vmatpush2.msra.mxu0 0.0
    %4279 = vmatprep.subr.mxu0 0.0
    %4280 = vmatpush2.msra.mxu0 0.0
    %4281 = vmatprep.subr.mxu0 0.0
    %4282 = vmatpush2.msra.mxu0 0.0
    %4283 = vmatprep.subr.mxu0 0.0
    %4284 = vmatpush2.msra.mxu0 0.0
    %4285 = vmatprep.subr.mxu0 0.0
    %4286 = vmatpush2.msra.mxu0 0.0
    %4287 = vmatprep.subr.mxu0 0.0
    %4288 = vmatpush2.msra.mxu0 0.0
    %4289 = vmatprep.subr.mxu0 0.0
    %4290 = vmatpush2.msra.mxu0 0.0
    %4291 = vmatprep.subr.mxu0 0.0
    %4292 = vmatpush2.msra.mxu0 0.0
    %4293 = vmatprep.subr.mxu0 0.0
    %4294 = vmatpush2.msra.mxu0 0.0
    %4295 = vmatprep.subr.mxu0 0.0
    %4296 = vmatpush2.msra.mxu0 0.0
    %4297 = vmatprep.subr.mxu0 0.0
    %4298 = vmatpush2.msra.mxu0 0.0
    %4299 = vmatprep.subr.mxu0 0.0
    %4300 = vmatpush2.msra.mxu0 0.0
    %4301 = vmatprep.subr.mxu0 0.0
    %4302 = vmatpush2.msra.mxu0 0.0
    %4303 = vmatprep.mubr.f32.mxu0 0.0
    %4304 = vmatmul.mubr.f32.gmra.mxu0 %v4237
    %v4305 = vpop.f32.mrf.mxu0
    %v4306 = vadd.f32 0.0, %v4305
    %v4307 = vpop.f32.mrf.mxu0
    %4308 = vdwg.mxu0
    %v4310 = vsel %vm4213, %v4235, 0
    %4312 = vmatprep.subr.mxu0 0.0
    %4313 = vmatpush1.msra.mxu0 0.0
    %4314 = vmatprep.subr.mxu0 0.0
    %4315 = vmatpush1.msra.mxu0 0.0
    %4316 = vmatprep.subr.mxu0 0.0
    %4317 = vmatpush1.msra.mxu0 0.0
    %4318 = vmatprep.subr.mxu0 0.0
    %4319 = vmatpush1.msra.mxu0 0.0
    %4320 = vmatprep.subr.mxu0 0.0
    %4321 = vmatpush1.msra.mxu0 0.0
    %4322 = vmatprep.subr.mxu0 0.0
    %4323 = vmatpush1.msra.mxu0 0.0
    %4324 = vmatprep.subr.mxu0 0.0
    %4325 = vmatpush1.msra.mxu0 0.0
    %4326 = vmatprep.subr.mxu0 0.0
    %4327 = vmatpush1.msra.mxu0 0.0
    %4328 = vmatprep.subr.mxu0 0.0
    %4329 = vmatpush1.msra.mxu0 0.0
    %4330 = vmatprep.subr.mxu0 0.0
    %4331 = vmatpush1.msra.mxu0 0.0
    %4332 = vmatprep.subr.mxu0 0.0
    %4333 = vmatpush1.msra.mxu0 0.0
    %4334 = vmatprep.subr.mxu0 0.0
    %4335 = vmatpush1.msra.mxu0 0.0
    %4336 = vmatprep.subr.mxu0 0.0
    %4337 = vmatpush1.msra.mxu0 0.0
    %4338 = vmatprep.subr.mxu0 0.0
    %4339 = vmatpush1.msra.mxu0 0.0
    %4340 = vmatprep.subr.mxu0 0.0
    %4341 = vmatpush1.msra.mxu0 0.0
    %4342 = vmatprep.subr.mxu0 0.0
    %4343 = vmatpush1.msra.mxu0 %v3518
    %4344 = vmatprep.subr.mxu0 0.0
    %4345 = vmatpush2.msra.mxu0 0.0
    %4346 = vmatprep.subr.mxu0 0.0
    %4347 = vmatpush2.msra.mxu0 0.0
    %4348 = vmatprep.subr.mxu0 0.0
    %4349 = vmatpush2.msra.mxu0 0.0
    %4350 = vmatprep.subr.mxu0 0.0
    %4351 = vmatpush2.msra.mxu0 0.0
    %4352 = vmatprep.subr.mxu0 0.0
    %4353 = vmatpush2.msra.mxu0 0.0
    %4354 = vmatprep.subr.mxu0 0.0
    %4355 = vmatpush2.msra.mxu0 0.0
    %4356 = vmatprep.subr.mxu0 0.0
    %4357 = vmatpush2.msra.mxu0 0.0
    %4358 = vmatprep.subr.mxu0 0.0
    %4359 = vmatpush2.msra.mxu0 0.0
    %4360 = vmatprep.subr.mxu0 0.0
    %4361 = vmatpush2.msra.mxu0 0.0
    %4362 = vmatprep.subr.mxu0 0.0
    %4363 = vmatpush2.msra.mxu0 0.0
    %4364 = vmatprep.subr.mxu0 0.0
    %4365 = vmatpush2.msra.mxu0 0.0
    %4366 = vmatprep.subr.mxu0 0.0
    %4367 = vmatpush2.msra.mxu0 0.0
    %4368 = vmatprep.subr.mxu0 0.0
    %4369 = vmatpush2.msra.mxu0 0.0
    %4370 = vmatprep.subr.mxu0 0.0
    %4371 = vmatpush2.msra.mxu0 0.0
    %4372 = vmatprep.subr.mxu0 0.0
    %4373 = vmatpush2.msra.mxu0 0.0
    %4374 = vmatprep.subr.mxu0 0.0
    %4375 = vmatpush2.msra.mxu0 0.0
    %4376 = vmatprep.mubr.f32.mxu0 0.0
    %4377 = vmatmul.mubr.f32.gmra.mxu0 %v4310
    %v4378 = vpop.f32.mrf.mxu0
    %v4379 = vadd.f32 0.0, %v4378
    %v4380 = vpop.f32.mrf.mxu0
    %4381 = vdwg.mxu0
    %4382 = vmatprep.subr.mxu0 0.0
    %4383 = vmatpush1.msra.mxu0 0.0
    %4384 = vmatprep.subr.mxu0 0.0
    %4385 = vmatpush1.msra.mxu0 0.0
    %4386 = vmatprep.subr.mxu0 0.0
    %4387 = vmatpush1.msra.mxu0 0.0
    %4388 = vmatprep.subr.mxu0 0.0
    %4389 = vmatpush1.msra.mxu0 0.0
    %4390 = vmatprep.subr.mxu0 0.0
    %4391 = vmatpush1.msra.mxu0 0.0
    %4392 = vmatprep.subr.mxu0 0.0
    %4393 = vmatpush1.msra.mxu0 0.0
    %4394 = vmatprep.subr.mxu0 0.0
    %4395 = vmatpush1.msra.mxu0 0.0
    %4396 = vmatprep.subr.mxu0 0.0
    %4397 = vmatpush1.msra.mxu0 0.0
    %4398 = vmatprep.subr.mxu0 0.0
    %4399 = vmatpush1.msra.mxu0 0.0
    %4400 = vmatprep.subr.mxu0 0.0
    %4401 = vmatpush1.msra.mxu0 0.0
    %4402 = vmatprep.subr.mxu0 0.0
    %4403 = vmatpush1.msra.mxu0 0.0
    %4404 = vmatprep.subr.mxu0 0.0
    %4405 = vmatpush1.msra.mxu0 0.0
    %4406 = vmatprep.subr.mxu0 0.0
    %4407 = vmatpush1.msra.mxu0 0.0
    %4408 = vmatprep.subr.mxu0 0.0
    %4409 = vmatpush1.msra.mxu0 0.0
    %4410 = vmatprep.subr.mxu0 0.0
    %4411 = vmatpush1.msra.mxu0 0.0
    %4412 = vmatprep.subr.mxu0 0.0
    %4413 = vmatpush1.msra.mxu0 %v3883
    %4414 = vmatprep.subr.mxu0 0.0
    %4415 = vmatpush2.msra.mxu0 0.0
    %4416 = vmatprep.subr.mxu0 0.0
    %4417 = vmatpush2.msra.mxu0 0.0
    %4418 = vmatprep.subr.mxu0 0.0
    %4419 = vmatpush2.msra.mxu0 0.0
    %4420 = vmatprep.subr.mxu0 0.0
    %4421 = vmatpush2.msra.mxu0 0.0
    %4422 = vmatprep.subr.mxu0 0.0
    %4423 = vmatpush2.msra.mxu0 0.0
    %4424 = vmatprep.subr.mxu0 0.0
    %4425 = vmatpush2.msra.mxu0 0.0
    %4426 = vmatprep.subr.mxu0 0.0
    %4427 = vmatpush2.msra.mxu0 0.0
    %4428 = vmatprep.subr.mxu0 0.0
    %4429 = vmatpush2.msra.mxu0 0.0
    %4430 = vmatprep.subr.mxu0 0.0
    %4431 = vmatpush2.msra.mxu0 0.0
    %4432 = vmatprep.subr.mxu0 0.0
    %4433 = vmatpush2.msra.mxu0 0.0
    %4434 = vmatprep.subr.mxu0 0.0
    %4435 = vmatpush2.msra.mxu0 0.0
    %4436 = vmatprep.subr.mxu0 0.0
    %4437 = vmatpush2.msra.mxu0 0.0
    %4438 = vmatprep.subr.mxu0 0.0
    %4439 = vmatpush2.msra.mxu0 0.0
    %4440 = vmatprep.subr.mxu0 0.0
    %4441 = vmatpush2.msra.mxu0 0.0
    %4442 = vmatprep.subr.mxu0 0.0
    %4443 = vmatpush2.msra.mxu0 0.0
    %4444 = vmatprep.subr.mxu0 0.0
    %4445 = vmatpush2.msra.mxu0 0.0
    %4446 = vmatprep.mubr.f32.mxu0 0.0
    %4447 = vmatmul.mubr.f32.gmra.mxu0 %v4237
    %v4448 = vpop.f32.mrf.mxu0
    %v4449 = vadd.f32 0.0, %v4448
    %v4450 = vpop.f32.mrf.mxu0
    %4451 = vdwg.mxu0
    %4452 = vmatprep.subr.mxu0 0.0
    %4453 = vmatpush1.msra.mxu0 0.0
    %4454 = vmatprep.subr.mxu0 0.0
    %4455 = vmatpush1.msra.mxu0 0.0
    %4456 = vmatprep.subr.mxu0 0.0
    %4457 = vmatpush1.msra.mxu0 0.0
    %4458 = vmatprep.subr.mxu0 0.0
    %4459 = vmatpush1.msra.mxu0 0.0
    %4460 = vmatprep.subr.mxu0 0.0
    %4461 = vmatpush1.msra.mxu0 0.0
    %4462 = vmatprep.subr.mxu0 0.0
    %4463 = vmatpush1.msra.mxu0 0.0
    %4464 = vmatprep.subr.mxu0 0.0
    %4465 = vmatpush1.msra.mxu0 0.0
    %4466 = vmatprep.subr.mxu0 0.0
    %4467 = vmatpush1.msra.mxu0 0.0
    %4468 = vmatprep.subr.mxu0 0.0
    %4469 = vmatpush1.msra.mxu0 0.0
    %4470 = vmatprep.subr.mxu0 0.0
    %4471 = vmatpush1.msra.mxu0 0.0
    %4472 = vmatprep.subr.mxu0 0.0
    %4473 = vmatpush1.msra.mxu0 0.0
    %4474 = vmatprep.subr.mxu0 0.0
    %4475 = vmatpush1.msra.mxu0 0.0
    %4476 = vmatprep.subr.mxu0 0.0
    %4477 = vmatpush1.msra.mxu0 0.0
    %4478 = vmatprep.subr.mxu0 0.0
    %4479 = vmatpush1.msra.mxu0 0.0
    %4480 = vmatprep.subr.mxu0 0.0
    %4481 = vmatpush1.msra.mxu0 0.0
    %4482 = vmatprep.subr.mxu0 0.0
    %4483 = vmatpush1.msra.mxu0 %v3884
    %4484 = vmatprep.subr.mxu0 0.0
    %4485 = vmatpush2.msra.mxu0 0.0
    %4486 = vmatprep.subr.mxu0 0.0
    %4487 = vmatpush2.msra.mxu0 0.0
    %4488 = vmatprep.subr.mxu0 0.0
    %4489 = vmatpush2.msra.mxu0 0.0
    %4490 = vmatprep.subr.mxu0 0.0
    %4491 = vmatpush2.msra.mxu0 0.0
    %4492 = vmatprep.subr.mxu0 0.0
    %4493 = vmatpush2.msra.mxu0 0.0
    %4494 = vmatprep.subr.mxu0 0.0
    %4495 = vmatpush2.msra.mxu0 0.0
    %4496 = vmatprep.subr.mxu0 0.0
    %4497 = vmatpush2.msra.mxu0 0.0
    %4498 = vmatprep.subr.mxu0 0.0
    %4499 = vmatpush2.msra.mxu0 0.0
    %4500 = vmatprep.subr.mxu0 0.0
    %4501 = vmatpush2.msra.mxu0 0.0
    %4502 = vmatprep.subr.mxu0 0.0
    %4503 = vmatpush2.msra.mxu0 0.0
    %4504 = vmatprep.subr.mxu0 0.0
    %4505 = vmatpush2.msra.mxu0 0.0
    %4506 = vmatprep.subr.mxu0 0.0
    %4507 = vmatpush2.msra.mxu0 0.0
    %4508 = vmatprep.subr.mxu0 0.0
    %4509 = vmatpush2.msra.mxu0 0.0
    %4510 = vmatprep.subr.mxu0 0.0
    %4511 = vmatpush2.msra.mxu0 0.0
    %4512 = vmatprep.subr.mxu0 0.0
    %4513 = vmatpush2.msra.mxu0 0.0
    %4514 = vmatprep.subr.mxu0 0.0
    %4515 = vmatpush2.msra.mxu0 0.0
    %4516 = vmatprep.mubr.f32.mxu0 0.0
    %4517 = vmatmul.mubr.f32.gmra.mxu0 %v4310
    %v4518 = vpop.f32.mrf.mxu0
    %v4519 = vadd.f32 0.0, %v4518
    %v4520 = vpop.f32.mrf.mxu0
    %4521 = vdwg.mxu0
    %v4522 = vmul.f32 %v4306, 0.5
    %v4523 = vmul.f32 %v4379, 0.5
    %v4524 = vmul.f32 %v4306, 0.044715
    %v4525 = vmul.f32 %v4379, 0.044715
    %v4526 = vmul.f32 %v4524, %v4306
    %v4527 = vmul.f32 %v4525, %v4379
    %v4528 = vmul.f32 %v4526, %v4306
    %v4529 = vmul.f32 %v4527, %v4379
    %v4530 = vadd.f32 %v4306, %v4528
    %v4531 = vadd.f32 %v4379, %v4529
    %v4532 = vmul.f32 %v4530, 0.7978846
    %v4533 = vmul.f32 %v4531, 0.7978846
    %v4534 = vtanh.pop %v4532
    %v4535 = vtanh.pop %v4533
    %v4536 = vadd.f32 %v4534, 1.0
    %v4537 = vadd.f32 %v4535, 1.0
    %v4538 = vmul.f32 %v4522, %v4536
    %v4539 = vmul.f32 %v4523, %v4537
    %v4540 = vld [vmem:[#allocation22] sm:$0xff]
    %v4541 = vld [vmem:[#allocation22 + $0x8] sm:$0xff]
    %v4542 = vld [vmem:[#allocation22 + $0x10] sm:$0xff]
    %v4543 = vld [vmem:[#allocation22 + $0x18] sm:$0xff]
    %v4544 = vmul.f32 %v4449, 0.5
    %v4545 = vmul.f32 %v4519, 0.5
    %v4546 = vmul.f32 %v4449, 0.044715
    %v4547 = vmul.f32 %v4519, 0.044715
    %v4548 = vmul.f32 %v4546, %v4449
    %v4549 = vmul.f32 %v4547, %v4519
    %v4550 = vmul.f32 %v4548, %v4449
    %v4551 = vmul.f32 %v4549, %v4519
    %v4552 = vadd.f32 %v4449, %v4550
    %v4553 = vadd.f32 %v4519, %v4551
    %v4554 = vmul.f32 %v4552, 0.7978846
    %v4555 = vmul.f32 %v4553, 0.7978846
    %v4556 = vtanh.pop %v4554
    %v4557 = vtanh.pop %v4555
    %v4558 = vadd.f32 %v4556, 1.0
    %v4559 = vadd.f32 %v4557, 1.0
    %v4560 = vmul.f32 %v4544, %v4558
    %v4561 = vmul.f32 %v4545, %v4559
    %v4562 = vld [vmem:[#allocation23] sm:$0xff]
    %v4563 = vld [vmem:[#allocation23 + $0x8] sm:$0xff]
    %v4564 = vld [vmem:[#allocation23 + $0x10] sm:$0xff]
    %v4565 = vld [vmem:[#allocation23 + $0x18] sm:$0xff]
    %v4567 = vsel %vm409, %v4560, 0
    %v4570 = vsel %vm409, %v4561, 0
    %4572 = vmatprep.subr.mxu0 0.0
    %4573 = vmatpush1.msra.mxu0 0.0
    %4574 = vmatprep.subr.mxu0 0.0
    %4575 = vmatpush1.msra.mxu0 0.0
    %4576 = vmatprep.subr.mxu0 0.0
    %4577 = vmatpush1.msra.mxu0 0.0
    %4578 = vmatprep.subr.mxu0 0.0
    %4579 = vmatpush1.msra.mxu0 0.0
    %4580 = vmatprep.subr.mxu0 0.0
    %4581 = vmatpush1.msra.mxu0 0.0
    %4582 = vmatprep.subr.mxu0 0.0
    %4583 = vmatpush1.msra.mxu0 0.0
    %4584 = vmatprep.subr.mxu0 0.0
    %4585 = vmatpush1.msra.mxu0 0.0
    %4586 = vmatprep.subr.mxu0 0.0
    %4587 = vmatpush1.msra.mxu0 0.0
    %4588 = vmatprep.subr.mxu0 0.0
    %4589 = vmatpush1.msra.mxu0 0.0
    %4590 = vmatprep.subr.mxu0 0.0
    %4591 = vmatpush1.msra.mxu0 0.0
    %4592 = vmatprep.subr.mxu0 0.0
    %4593 = vmatpush1.msra.mxu0 0.0
    %4594 = vmatprep.subr.mxu0 0.0
    %4595 = vmatpush1.msra.mxu0 0.0
    %4596 = vmatprep.subr.mxu0 0.0
    %4597 = vmatpush1.msra.mxu0 %v4565
    %4598 = vmatprep.subr.mxu0 0.0
    %4599 = vmatpush1.msra.mxu0 %v4564
    %4600 = vmatprep.subr.mxu0 0.0
    %4601 = vmatpush1.msra.mxu0 %v4563
    %4602 = vmatprep.subr.mxu0 0.0
    %4603 = vmatpush1.msra.mxu0 %v4562
    %4604 = vmatprep.subr.mxu0 0.0
    %4605 = vmatpush2.msra.mxu0 0.0
    %4606 = vmatprep.subr.mxu0 0.0
    %4607 = vmatpush2.msra.mxu0 0.0
    %4608 = vmatprep.subr.mxu0 0.0
    %4609 = vmatpush2.msra.mxu0 0.0
    %4610 = vmatprep.subr.mxu0 0.0
    %4611 = vmatpush2.msra.mxu0 0.0
    %4612 = vmatprep.subr.mxu0 0.0
    %4613 = vmatpush2.msra.mxu0 0.0
    %4614 = vmatprep.subr.mxu0 0.0
    %4615 = vmatpush2.msra.mxu0 0.0
    %4616 = vmatprep.subr.mxu0 0.0
    %4617 = vmatpush2.msra.mxu0 0.0
    %4618 = vmatprep.subr.mxu0 0.0
    %4619 = vmatpush2.msra.mxu0 0.0
    %4620 = vmatprep.subr.mxu0 0.0
    %4621 = vmatpush2.msra.mxu0 0.0
    %4622 = vmatprep.subr.mxu0 0.0
    %4623 = vmatpush2.msra.mxu0 0.0
    %4624 = vmatprep.subr.mxu0 0.0
    %4625 = vmatpush2.msra.mxu0 0.0
    %4626 = vmatprep.subr.mxu0 0.0
    %4627 = vmatpush2.msra.mxu0 0.0
    %4628 = vmatprep.subr.mxu0 0.0
    %4629 = vmatpush2.msra.mxu0 0.0
    %4630 = vmatprep.subr.mxu0 0.0
    %4631 = vmatpush2.msra.mxu0 0.0
    %4632 = vmatprep.subr.mxu0 0.0
    %4633 = vmatpush2.msra.mxu0 0.0
    %4634 = vmatprep.subr.mxu0 0.0
    %4635 = vmatpush2.msra.mxu0 0.0
    %4636 = vmatprep.mubr.f32.mxu0 0.0
    %4637 = vmatmul.mubr.f32.gmra.mxu0 %v4567
    %v4638 = vpop.f32.mrf.mxu0
    %v4639 = vadd.f32 0.0, %v4638
    %v4640 = vpop.f32.mrf.mxu0
    %4641 = vmatprep.mubr.f32.mxu0 0.0
    %4642 = vmatmul.mubr.f32.gmra.mxu0 %v4570
    %v4643 = vpop.f32.mrf.mxu0
    %v4644 = vadd.f32 0.0, %v4643
    %v4645 = vpop.f32.mrf.mxu0
    %4646 = vdwg.mxu0
    %v4648 = vsel %vm409, %v4538, 0
    %v4651 = vsel %vm409, %v4539, 0
    %4653 = vmatprep.subr.mxu0 0.0
    %4654 = vmatpush1.msra.mxu0 0.0
    %4655 = vmatprep.subr.mxu0 0.0
    %4656 = vmatpush1.msra.mxu0 0.0
    %4657 = vmatprep.subr.mxu0 0.0
    %4658 = vmatpush1.msra.mxu0 0.0
    %4659 = vmatprep.subr.mxu0 0.0
    %4660 = vmatpush1.msra.mxu0 0.0
    %4661 = vmatprep.subr.mxu0 0.0
    %4662 = vmatpush1.msra.mxu0 0.0
    %4663 = vmatprep.subr.mxu0 0.0
    %4664 = vmatpush1.msra.mxu0 0.0
    %4665 = vmatprep.subr.mxu0 0.0
    %4666 = vmatpush1.msra.mxu0 0.0
    %4667 = vmatprep.subr.mxu0 0.0
    %4668 = vmatpush1.msra.mxu0 0.0
    %4669 = vmatprep.subr.mxu0 0.0
    %4670 = vmatpush1.msra.mxu0 0.0
    %4671 = vmatprep.subr.mxu0 0.0
    %4672 = vmatpush1.msra.mxu0 0.0
    %4673 = vmatprep.subr.mxu0 0.0
    %4674 = vmatpush1.msra.mxu0 0.0
    %4675 = vmatprep.subr.mxu0 0.0
    %4676 = vmatpush1.msra.mxu0 0.0
    %4677 = vmatprep.subr.mxu0 0.0
    %4678 = vmatpush1.msra.mxu0 %v4543
    %4679 = vmatprep.subr.mxu0 0.0
    %4680 = vmatpush1.msra.mxu0 %v4542
    %4681 = vmatprep.subr.mxu0 0.0
    %4682 = vmatpush1.msra.mxu0 %v4541
    %4683 = vmatprep.subr.mxu0 0.0
    %4684 = vmatpush1.msra.mxu0 %v4540
    %4685 = vmatprep.subr.mxu0 0.0
    %4686 = vmatpush2.msra.mxu0 0.0
    %4687 = vmatprep.subr.mxu0 0.0
    %4688 = vmatpush2.msra.mxu0 0.0
    %4689 = vmatprep.subr.mxu0 0.0
    %4690 = vmatpush2.msra.mxu0 0.0
    %4691 = vmatprep.subr.mxu0 0.0
    %4692 = vmatpush2.msra.mxu0 0.0
    %4693 = vmatprep.subr.mxu0 0.0
    %4694 = vmatpush2.msra.mxu0 0.0
    %4695 = vmatprep.subr.mxu0 0.0
    %4696 = vmatpush2.msra.mxu0 0.0
    %4697 = vmatprep.subr.mxu0 0.0
    %4698 = vmatpush2.msra.mxu0 0.0
    %4699 = vmatprep.subr.mxu0 0.0
    %4700 = vmatpush2.msra.mxu0 0.0
    %4701 = vmatprep.subr.mxu0 0.0
    %4702 = vmatpush2.msra.mxu0 0.0
    %4703 = vmatprep.subr.mxu0 0.0
    %4704 = vmatpush2.msra.mxu0 0.0
    %4705 = vmatprep.subr.mxu0 0.0
    %4706 = vmatpush2.msra.mxu0 0.0
    %4707 = vmatprep.subr.mxu0 0.0
    %4708 = vmatpush2.msra.mxu0 0.0
    %4709 = vmatprep.subr.mxu0 0.0
    %4710 = vmatpush2.msra.mxu0 0.0
    %4711 = vmatprep.subr.mxu0 0.0
    %4712 = vmatpush2.msra.mxu0 0.0
    %4713 = vmatprep.subr.mxu0 0.0
    %4714 = vmatpush2.msra.mxu0 0.0
    %4715 = vmatprep.subr.mxu0 0.0
    %4716 = vmatpush2.msra.mxu0 0.0
    %4717 = vmatprep.mubr.f32.mxu0 0.0
    %4718 = vmatmul.mubr.f32.gmra.mxu0 %v4648
    %v4719 = vpop.f32.mrf.mxu0
    %v4720 = vadd.f32 %v4639, %v4719
    %v4721 = vpop.f32.mrf.mxu0
    %4722 = vmatprep.mubr.f32.mxu0 0.0
    %4723 = vmatmul.mubr.f32.gmra.mxu0 %v4651
    %v4724 = vpop.f32.mrf.mxu0
    %v4725 = vadd.f32 %v4644, %v4724
    %v4726 = vpop.f32.mrf.mxu0
    %4727 = vdwg.mxu0
    %v4728 = vld [vmem:[%s57] sm:$0x1]
    %v4730 = vlaneseq
    %v4731 = vshrl.u32 %v4730, 7
    %v4732 = vsub.s32 0, %v4731
    %v4733 = vrot.slane %v4728, %v4732
    %v4735 = vadd.f32 %v4720, %v4733
    %v4736 = vadd.f32 %v4725, %v4733
    %v4737 = vmul.f32 %v4735, 0.5
    %v4738 = vmul.f32 %v4736, 0.5
    %v4739 = vmul.f32 %v4735, 0.044715
    %v4740 = vmul.f32 %v4736, 0.044715
    %v4741 = vmul.f32 %v4739, %v4735
    %v4742 = vmul.f32 %v4740, %v4736
    %v4743 = vmul.f32 %v4741, %v4735
    %v4744 = vmul.f32 %v4742, %v4736
    %v4745 = vadd.f32 %v4735, %v4743
    %v4746 = vadd.f32 %v4736, %v4744
    %v4747 = vmul.f32 %v4745, 0.7978846
    %v4748 = vmul.f32 %v4746, 0.7978846
    %v4749 = vtanh.pop %v4747
    %v4750 = vtanh.pop %v4748
    %v4751 = vadd.f32 %v4749, 1.0
    %v4752 = vadd.f32 %v4750, 1.0
    %v4753 = vmul.f32 %v4737, %v4751
    %v4754 = vmul.f32 %v4738, %v4752
    %v4755 = vld [vmem:[#allocation25] sm:$0xff]
    %v4756 = vld [vmem:[#allocation25 + $0x8] sm:$0xff]
    %v4757 = vld [vmem:[#allocation25 + $0x10] sm:$0xff]
    %v4758 = vld [vmem:[#allocation25 + $0x18] sm:$0xff]
    %v4759 = vld [vmem:[%s61] sm:$0x1]
    %v4761 = vlaneseq
    %v4762 = vshrl.u32 %v4761, 7
    %v4763 = vsub.s32 0, %v4762
    %v4764 = vrot.slane %v4759, %v4763
    %4766 = vmatprep.subr.mxu0 0.0
    %4767 = vmatpush1.msra.mxu0 0.0
    %4768 = vmatprep.subr.mxu0 0.0
    %4769 = vmatpush1.msra.mxu0 0.0
    %4770 = vmatprep.subr.mxu0 0.0
    %4771 = vmatpush1.msra.mxu0 0.0
    %4772 = vmatprep.subr.mxu0 0.0
    %4773 = vmatpush1.msra.mxu0 0.0
    %4774 = vmatprep.subr.mxu0 0.0
    %4775 = vmatpush1.msra.mxu0 0.0
    %4776 = vmatprep.subr.mxu0 0.0
    %4777 = vmatpush1.msra.mxu0 0.0
    %4778 = vmatprep.subr.mxu0 0.0
    %4779 = vmatpush1.msra.mxu0 0.0
    %4780 = vmatprep.subr.mxu0 0.0
    %4781 = vmatpush1.msra.mxu0 0.0
    %4782 = vmatprep.subr.mxu0 0.0
    %4783 = vmatpush1.msra.mxu0 0.0
    %4784 = vmatprep.subr.mxu0 0.0
    %4785 = vmatpush1.msra.mxu0 0.0
    %4786 = vmatprep.subr.mxu0 0.0
    %4787 = vmatpush1.msra.mxu0 0.0
    %4788 = vmatprep.subr.mxu0 0.0
    %4789 = vmatpush1.msra.mxu0 0.0
    %4790 = vmatprep.subr.mxu0 0.0
    %4791 = vmatpush1.msra.mxu0 %v4758
    %4792 = vmatprep.subr.mxu0 0.0
    %4793 = vmatpush1.msra.mxu0 %v4757
    %4794 = vmatprep.subr.mxu0 0.0
    %4795 = vmatpush1.msra.mxu0 %v4756
    %4796 = vmatprep.subr.mxu0 0.0
    %4797 = vmatpush1.msra.mxu0 %v4755
    %4798 = vmatprep.subr.mxu0 0.0
    %4799 = vmatpush2.msra.mxu0 0.0
    %4800 = vmatprep.subr.mxu0 0.0
    %4801 = vmatpush2.msra.mxu0 0.0
    %4802 = vmatprep.subr.mxu0 0.0
    %4803 = vmatpush2.msra.mxu0 0.0
    %4804 = vmatprep.subr.mxu0 0.0
    %4805 = vmatpush2.msra.mxu0 0.0
    %4806 = vmatprep.subr.mxu0 0.0
    %4807 = vmatpush2.msra.mxu0 0.0
    %4808 = vmatprep.subr.mxu0 0.0
    %4809 = vmatpush2.msra.mxu0 0.0
    %4810 = vmatprep.subr.mxu0 0.0
    %4811 = vmatpush2.msra.mxu0 0.0
    %4812 = vmatprep.subr.mxu0 0.0
    %4813 = vmatpush2.msra.mxu0 0.0
    %4814 = vmatprep.subr.mxu0 0.0
    %4815 = vmatpush2.msra.mxu0 0.0
    %4816 = vmatprep.subr.mxu0 0.0
    %4817 = vmatpush2.msra.mxu0 0.0
    %4818 = vmatprep.subr.mxu0 0.0
    %4819 = vmatpush2.msra.mxu0 0.0
    %4820 = vmatprep.subr.mxu0 0.0
    %4821 = vmatpush2.msra.mxu0 0.0
    %4822 = vmatprep.subr.mxu0 0.0
    %4823 = vmatpush2.msra.mxu0 0.0
    %4824 = vmatprep.subr.mxu0 0.0
    %4825 = vmatpush2.msra.mxu0 0.0
    %4826 = vmatprep.subr.mxu0 0.0
    %4827 = vmatpush2.msra.mxu0 0.0
    %4828 = vmatprep.subr.mxu0 0.0
    %4829 = vmatpush2.msra.mxu0 0.0
    %4830 = vmatprep.mubr.f32.mxu0 0.0
    %4831 = vmatmul.mubr.f32.gmra.mxu0 %v411
    %v4832 = vpop.f32.mrf.mxu0
    %v4833 = vadd.f32 %v4764, %v4832
    %v4834 = vpop.f32.mrf.mxu0
    %4835 = vmatprep.mubr.f32.mxu0 0.0
    %4836 = vmatmul.mubr.f32.gmra.mxu0 %v414
    %v4837 = vpop.f32.mrf.mxu0
    %v4838 = vadd.f32 %v4764, %v4837
    %v4839 = vpop.f32.mrf.mxu0
    %4840 = vdwg.mxu0
    %v4841 = vmax.f32 %v4833, 0.0
    %v4842 = vmax.f32 %v4838, 0.0
    %v4844 = vsel %vm409, %v4841, 0
    %4846 = vmatprep.subr.mxu0 0.0
    %4847 = vmatpush1.xpose.msra.mxu0 0.0
    %4848 = vmatprep.subr.mxu0 0.0
    %4849 = vmatpush1.xpose.msra.mxu0 0.0
    %4850 = vmatprep.subr.mxu0 0.0
    %4851 = vmatpush1.xpose.msra.mxu0 0.0
    %4852 = vmatprep.subr.mxu0 0.0
    %4853 = vmatpush1.xpose.msra.mxu0 0.0
    %4854 = vmatprep.subr.mxu0 0.0
    %4855 = vmatpush1.xpose.msra.mxu0 0.0
    %4856 = vmatprep.subr.mxu0 0.0
    %4857 = vmatpush1.xpose.msra.mxu0 0.0
    %4858 = vmatprep.subr.mxu0 0.0
    %4859 = vmatpush1.xpose.msra.mxu0 0.0
    %4860 = vmatprep.subr.mxu0 0.0
    %4861 = vmatpush1.xpose.msra.mxu0 0.0
    %4862 = vmatprep.subr.mxu0 0.0
    %4863 = vmatpush1.xpose.msra.mxu0 0.0
    %4864 = vmatprep.subr.mxu0 0.0
    %4865 = vmatpush1.xpose.msra.mxu0 0.0
    %4866 = vmatprep.subr.mxu0 0.0
    %4867 = vmatpush1.xpose.msra.mxu0 0.0
    %4868 = vmatprep.subr.mxu0 0.0
    %4869 = vmatpush1.xpose.msra.mxu0 0.0
    %4870 = vmatprep.subr.mxu0 0.0
    %4871 = vmatpush1.xpose.msra.mxu0 0.0
    %4872 = vmatprep.subr.mxu0 0.0
    %4873 = vmatpush1.xpose.msra.mxu0 0.0
    %4874 = vmatprep.subr.mxu0 0.0
    %4875 = vmatpush1.xpose.msra.mxu0 0.0
    %4876 = vmatprep.subr.mxu0 0.0
    %4877 = vmatpush1.xpose.msra.mxu0 %v4844
    %4878 = vmatprep.subr.mxu0 0.0
    %4879 = vmatpush2.xpose.msra.mxu0 0.0
    %4880 = vmatprep.subr.mxu0 0.0
    %4881 = vmatpush2.xpose.msra.mxu0 0.0
    %4882 = vmatprep.subr.mxu0 0.0
    %4883 = vmatpush2.xpose.msra.mxu0 0.0
    %4884 = vmatprep.subr.mxu0 0.0
    %4885 = vmatpush2.xpose.msra.mxu0 0.0
    %4886 = vmatprep.subr.mxu0 0.0
    %4887 = vmatpush2.xpose.msra.mxu0 0.0
    %4888 = vmatprep.subr.mxu0 0.0
    %4889 = vmatpush2.xpose.msra.mxu0 0.0
    %4890 = vmatprep.subr.mxu0 0.0
    %4891 = vmatpush2.xpose.msra.mxu0 0.0
    %4892 = vmatprep.subr.mxu0 0.0
    %4893 = vmatpush2.xpose.msra.mxu0 0.0
    %4894 = vmatprep.subr.mxu0 0.0
    %4895 = vmatpush2.xpose.msra.mxu0 0.0
    %4896 = vmatprep.subr.mxu0 0.0
    %4897 = vmatpush2.xpose.msra.mxu0 0.0
    %4898 = vmatprep.subr.mxu0 0.0
    %4899 = vmatpush2.xpose.msra.mxu0 0.0
    %4900 = vmatprep.subr.mxu0 0.0
    %4901 = vmatpush2.xpose.msra.mxu0 0.0
    %4902 = vmatprep.subr.mxu0 0.0
    %4903 = vmatpush2.xpose.msra.mxu0 0.0
    %4904 = vmatprep.subr.mxu0 0.0
    %4905 = vmatpush2.xpose.msra.mxu0 0.0
    %4906 = vmatprep.subr.mxu0 0.0
    %4907 = vmatpush2.xpose.msra.mxu0 0.0
    %4908 = vmatprep.subr.mxu0 0.0
    %4909 = vmatpush2.xpose.msra.mxu0 0.0
    %4910 = vmatprep.mubr.f32.mxu0 0.0
    %4911 = vmatmul.mubr.f32.gmra.mxu0 %v4844
    %v4912 = vpop.f32.mrf.mxu0
    %v4913 = vadd.f32 0.0, %v4912
    %v4914 = vpop.f32.mrf.mxu0
    %4915 = vdwg.mxu0
    %v4917 = vsel %vm409, %v4842, 0
    %4919 = vmatprep.subr.mxu0 0.0
    %4920 = vmatpush1.xpose.msra.mxu0 0.0
    %4921 = vmatprep.subr.mxu0 0.0
    %4922 = vmatpush1.xpose.msra.mxu0 0.0
    %4923 = vmatprep.subr.mxu0 0.0
    %4924 = vmatpush1.xpose.msra.mxu0 0.0
    %4925 = vmatprep.subr.mxu0 0.0
    %4926 = vmatpush1.xpose.msra.mxu0 0.0
    %4927 = vmatprep.subr.mxu0 0.0
    %4928 = vmatpush1.xpose.msra.mxu0 0.0
    %4929 = vmatprep.subr.mxu0 0.0
    %4930 = vmatpush1.xpose.msra.mxu0 0.0
    %4931 = vmatprep.subr.mxu0 0.0
    %4932 = vmatpush1.xpose.msra.mxu0 0.0
    %4933 = vmatprep.subr.mxu0 0.0
    %4934 = vmatpush1.xpose.msra.mxu0 0.0
    %4935 = vmatprep.subr.mxu0 0.0
    %4936 = vmatpush1.xpose.msra.mxu0 0.0
    %4937 = vmatprep.subr.mxu0 0.0
    %4938 = vmatpush1.xpose.msra.mxu0 0.0
    %4939 = vmatprep.subr.mxu0 0.0
    %4940 = vmatpush1.xpose.msra.mxu0 0.0
    %4941 = vmatprep.subr.mxu0 0.0
    %4942 = vmatpush1.xpose.msra.mxu0 0.0
    %4943 = vmatprep.subr.mxu0 0.0
    %4944 = vmatpush1.xpose.msra.mxu0 0.0
    %4945 = vmatprep.subr.mxu0 0.0
    %4946 = vmatpush1.xpose.msra.mxu0 0.0
    %4947 = vmatprep.subr.mxu0 0.0
    %4948 = vmatpush1.xpose.msra.mxu0 0.0
    %4949 = vmatprep.subr.mxu0 0.0
    %4950 = vmatpush1.xpose.msra.mxu0 %v4917
    %4951 = vmatprep.subr.mxu0 0.0
    %4952 = vmatpush2.xpose.msra.mxu0 0.0
    %4953 = vmatprep.subr.mxu0 0.0
    %4954 = vmatpush2.xpose.msra.mxu0 0.0
    %4955 = vmatprep.subr.mxu0 0.0
    %4956 = vmatpush2.xpose.msra.mxu0 0.0
    %4957 = vmatprep.subr.mxu0 0.0
    %4958 = vmatpush2.xpose.msra.mxu0 0.0
    %4959 = vmatprep.subr.mxu0 0.0
    %4960 = vmatpush2.xpose.msra.mxu0 0.0
    %4961 = vmatprep.subr.mxu0 0.0
    %4962 = vmatpush2.xpose.msra.mxu0 0.0
    %4963 = vmatprep.subr.mxu0 0.0
    %4964 = vmatpush2.xpose.msra.mxu0 0.0
    %4965 = vmatprep.subr.mxu0 0.0
    %4966 = vmatpush2.xpose.msra.mxu0 0.0
    %4967 = vmatprep.subr.mxu0 0.0
    %4968 = vmatpush2.xpose.msra.mxu0 0.0
    %4969 = vmatprep.subr.mxu0 0.0
    %4970 = vmatpush2.xpose.msra.mxu0 0.0
    %4971 = vmatprep.subr.mxu0 0.0
    %4972 = vmatpush2.xpose.msra.mxu0 0.0
    %4973 = vmatprep.subr.mxu0 0.0
    %4974 = vmatpush2.xpose.msra.mxu0 0.0
    %4975 = vmatprep.subr.mxu0 0.0
    %4976 = vmatpush2.xpose.msra.mxu0 0.0
    %4977 = vmatprep.subr.mxu0 0.0
    %4978 = vmatpush2.xpose.msra.mxu0 0.0
    %4979 = vmatprep.subr.mxu0 0.0
    %4980 = vmatpush2.xpose.msra.mxu0 0.0
    %4981 = vmatprep.subr.mxu0 0.0
    %4982 = vmatpush2.xpose.msra.mxu0 0.0
    %4983 = vmatprep.mubr.f32.mxu0 0.0
    %4984 = vmatmul.mubr.f32.gmra.mxu0 %v4917
    %v4985 = vpop.f32.mrf.mxu0
    %v4986 = vadd.f32 0.0, %v4985
    %v4987 = vpop.f32.mrf.mxu0
    %4988 = vdwg.mxu0
    %v4989 = vsel %vm4213, %v4913, -inf
    %4990 = vmax.xlane.f32.xlu0 %v4989
    %v4991 = vpop.xlane.xlu0 %4990
    %v4992 = vsel %vm4213, %v4986, -inf
    %4993 = vmax.xlane.f32.xlu0 %v4992
    %v4994 = vpop.xlane.xlu0 %4993
    %v4995 = vsub.f32 %v4913, %v4991
    %v4996 = vsub.f32 %v4986, %v4994
    %v4997 = vmul.f32 %v4995, 1.442695
    %v4998 = vpow.pop %v4997
    %v4999 = vmul.f32 %v4996, 1.442695
    %v5000 = vpow.pop %v4999
    %v5001 = vsel %vm4213, %v4998, 0.0
    %5002 = vadd.xlane.f32.xlu0 %v5001
    %v5003 = vpop.xlane.xlu0 %5002
    %v5004 = vsel %vm4213, %v5000, 0.0
    %5005 = vadd.xlane.f32.xlu0 %v5004
    %v5006 = vpop.xlane.xlu0 %5005
    %v5007 = vrcp.pop %v5003
    %v5008 = vmul.f32 %v4998, %v5007
    %v5009 = vrcp.pop %v5006
    %v5010 = vmul.f32 %v5000, %v5009
    %v5011 = vld [vmem:[#allocation26] sm:$0xff]
    %v5012 = vld [vmem:[#allocation26 + $0x8] sm:$0xff]
    %v5013 = vld [vmem:[#allocation26 + $0x10] sm:$0xff]
    %v5014 = vld [vmem:[#allocation26 + $0x18] sm:$0xff]
    %v5015 = vld [vmem:[%s65] sm:$0x1]
    %v5017 = vlaneseq
    %v5018 = vshrl.u32 %v5017, 7
    %v5019 = vsub.s32 0, %v5018
    %v5020 = vrot.slane %v5015, %v5019
    %5022 = vmatprep.subr.mxu0 0.0
    %5023 = vmatpush1.msra.mxu0 0.0
    %5024 = vmatprep.subr.mxu0 0.0
    %5025 = vmatpush1.msra.mxu0 0.0
    %5026 = vmatprep.subr.mxu0 0.0
    %5027 = vmatpush1.msra.mxu0 0.0
    %5028 = vmatprep.subr.mxu0 0.0
    %5029 = vmatpush1.msra.mxu0 0.0
    %5030 = vmatprep.subr.mxu0 0.0
    %5031 = vmatpush1.msra.mxu0 0.0
    %5032 = vmatprep.subr.mxu0 0.0
    %5033 = vmatpush1.msra.mxu0 0.0
    %5034 = vmatprep.subr.mxu0 0.0
    %5035 = vmatpush1.msra.mxu0 0.0
    %5036 = vmatprep.subr.mxu0 0.0
    %5037 = vmatpush1.msra.mxu0 0.0
    %5038 = vmatprep.subr.mxu0 0.0
    %5039 = vmatpush1.msra.mxu0 0.0
    %5040 = vmatprep.subr.mxu0 0.0
    %5041 = vmatpush1.msra.mxu0 0.0
    %5042 = vmatprep.subr.mxu0 0.0
    %5043 = vmatpush1.msra.mxu0 0.0
    %5044 = vmatprep.subr.mxu0 0.0
    %5045 = vmatpush1.msra.mxu0 0.0
    %5046 = vmatprep.subr.mxu0 0.0
    %5047 = vmatpush1.msra.mxu0 %v5014
    %5048 = vmatprep.subr.mxu0 0.0
    %5049 = vmatpush1.msra.mxu0 %v5013
    %5050 = vmatprep.subr.mxu0 0.0
    %5051 = vmatpush1.msra.mxu0 %v5012
    %5052 = vmatprep.subr.mxu0 0.0
    %5053 = vmatpush1.msra.mxu0 %v5011
    %5054 = vmatprep.subr.mxu0 0.0
    %5055 = vmatpush2.msra.mxu0 0.0
    %5056 = vmatprep.subr.mxu0 0.0
    %5057 = vmatpush2.msra.mxu0 0.0
    %5058 = vmatprep.subr.mxu0 0.0
    %5059 = vmatpush2.msra.mxu0 0.0
    %5060 = vmatprep.subr.mxu0 0.0
    %5061 = vmatpush2.msra.mxu0 0.0
    %5062 = vmatprep.subr.mxu0 0.0
    %5063 = vmatpush2.msra.mxu0 0.0
    %5064 = vmatprep.subr.mxu0 0.0
    %5065 = vmatpush2.msra.mxu0 0.0
    %5066 = vmatprep.subr.mxu0 0.0
    %5067 = vmatpush2.msra.mxu0 0.0
    %5068 = vmatprep.subr.mxu0 0.0
    %5069 = vmatpush2.msra.mxu0 0.0
    %5070 = vmatprep.subr.mxu0 0.0
    %5071 = vmatpush2.msra.mxu0 0.0
    %5072 = vmatprep.subr.mxu0 0.0
    %5073 = vmatpush2.msra.mxu0 0.0
    %5074 = vmatprep.subr.mxu0 0.0
    %5075 = vmatpush2.msra.mxu0 0.0
    %5076 = vmatprep.subr.mxu0 0.0
    %5077 = vmatpush2.msra.mxu0 0.0
    %5078 = vmatprep.subr.mxu0 0.0
    %5079 = vmatpush2.msra.mxu0 0.0
    %5080 = vmatprep.subr.mxu0 0.0
    %5081 = vmatpush2.msra.mxu0 0.0
    %5082 = vmatprep.subr.mxu0 0.0
    %5083 = vmatpush2.msra.mxu0 0.0
    %5084 = vmatprep.subr.mxu0 0.0
    %5085 = vmatpush2.msra.mxu0 0.0
    %5086 = vmatprep.mubr.f32.mxu0 0.0
    %5087 = vmatmul.mubr.f32.gmra.mxu0 %v779
    %v5088 = vpop.f32.mrf.mxu0
    %v5089 = vadd.f32 %v5020, %v5088
    %v5090 = vpop.f32.mrf.mxu0
    %5091 = vmatprep.mubr.f32.mxu0 0.0
    %5092 = vmatmul.mubr.f32.gmra.mxu0 %v782
    %v5093 = vpop.f32.mrf.mxu0
    %v5094 = vadd.f32 %v5020, %v5093
    %v5095 = vpop.f32.mrf.mxu0
    %5096 = vdwg.mxu0
    %v5097 = vmax.f32 %v5089, 0.0
    %v5098 = vmax.f32 %v5094, 0.0
    %v5100 = vsel %vm409, %v5097, 0
    %5102 = vmatprep.subr.mxu0 0.0
    %5103 = vmatpush1.xpose.msra.mxu0 0.0
    %5104 = vmatprep.subr.mxu0 0.0
    %5105 = vmatpush1.xpose.msra.mxu0 0.0
    %5106 = vmatprep.subr.mxu0 0.0
    %5107 = vmatpush1.xpose.msra.mxu0 0.0
    %5108 = vmatprep.subr.mxu0 0.0
    %5109 = vmatpush1.xpose.msra.mxu0 0.0
    %5110 = vmatprep.subr.mxu0 0.0
    %5111 = vmatpush1.xpose.msra.mxu0 0.0
    %5112 = vmatprep.subr.mxu0 0.0
    %5113 = vmatpush1.xpose.msra.mxu0 0.0
    %5114 = vmatprep.subr.mxu0 0.0
    %5115 = vmatpush1.xpose.msra.mxu0 0.0
    %5116 = vmatprep.subr.mxu0 0.0
    %5117 = vmatpush1.xpose.msra.mxu0 0.0
    %5118 = vmatprep.subr.mxu0 0.0
    %5119 = vmatpush1.xpose.msra.mxu0 0.0
    %5120 = vmatprep.subr.mxu0 0.0
    %5121 = vmatpush1.xpose.msra.mxu0 0.0
    %5122 = vmatprep.subr.mxu0 0.0
    %5123 = vmatpush1.xpose.msra.mxu0 0.0
    %5124 = vmatprep.subr.mxu0 0.0
    %5125 = vmatpush1.xpose.msra.mxu0 0.0
    %5126 = vmatprep.subr.mxu0 0.0
    %5127 = vmatpush1.xpose.msra.mxu0 0.0
    %5128 = vmatprep.subr.mxu0 0.0
    %5129 = vmatpush1.xpose.msra.mxu0 0.0
    %5130 = vmatprep.subr.mxu0 0.0
    %5131 = vmatpush1.xpose.msra.mxu0 0.0
    %5132 = vmatprep.subr.mxu0 0.0
    %5133 = vmatpush1.xpose.msra.mxu0 %v5100
    %5134 = vmatprep.subr.mxu0 0.0
    %5135 = vmatpush2.xpose.msra.mxu0 0.0
    %5136 = vmatprep.subr.mxu0 0.0
    %5137 = vmatpush2.xpose.msra.mxu0 0.0
    %5138 = vmatprep.subr.mxu0 0.0
    %5139 = vmatpush2.xpose.msra.mxu0 0.0
    %5140 = vmatprep.subr.mxu0 0.0
    %5141 = vmatpush2.xpose.msra.mxu0 0.0
    %5142 = vmatprep.subr.mxu0 0.0
    %5143 = vmatpush2.xpose.msra.mxu0 0.0
    %5144 = vmatprep.subr.mxu0 0.0
    %5145 = vmatpush2.xpose.msra.mxu0 0.0
    %5146 = vmatprep.subr.mxu0 0.0
    %5147 = vmatpush2.xpose.msra.mxu0 0.0
    %5148 = vmatprep.subr.mxu0 0.0
    %5149 = vmatpush2.xpose.msra.mxu0 0.0
    %5150 = vmatprep.subr.mxu0 0.0
    %5151 = vmatpush2.xpose.msra.mxu0 0.0
    %5152 = vmatprep.subr.mxu0 0.0
    %5153 = vmatpush2.xpose.msra.mxu0 0.0
    %5154 = vmatprep.subr.mxu0 0.0
    %5155 = vmatpush2.xpose.msra.mxu0 0.0
    %5156 = vmatprep.subr.mxu0 0.0
    %5157 = vmatpush2.xpose.msra.mxu0 0.0
    %5158 = vmatprep.subr.mxu0 0.0
    %5159 = vmatpush2.xpose.msra.mxu0 0.0
    %5160 = vmatprep.subr.mxu0 0.0
    %5161 = vmatpush2.xpose.msra.mxu0 0.0
    %5162 = vmatprep.subr.mxu0 0.0
    %5163 = vmatpush2.xpose.msra.mxu0 0.0
    %5164 = vmatprep.subr.mxu0 0.0
    %5165 = vmatpush2.xpose.msra.mxu0 0.0
    %5166 = vmatprep.mubr.f32.mxu0 0.0
    %5167 = vmatmul.mubr.f32.gmra.mxu0 %v5100
    %v5168 = vpop.f32.mrf.mxu0
    %v5169 = vadd.f32 0.0, %v5168
    %v5170 = vpop.f32.mrf.mxu0
    %5171 = vdwg.mxu0
    %v5173 = vsel %vm409, %v5098, 0
    %5175 = vmatprep.subr.mxu0 0.0
    %5176 = vmatpush1.xpose.msra.mxu0 0.0
    %5177 = vmatprep.subr.mxu0 0.0
    %5178 = vmatpush1.xpose.msra.mxu0 0.0
    %5179 = vmatprep.subr.mxu0 0.0
    %5180 = vmatpush1.xpose.msra.mxu0 0.0
    %5181 = vmatprep.subr.mxu0 0.0
    %5182 = vmatpush1.xpose.msra.mxu0 0.0
    %5183 = vmatprep.subr.mxu0 0.0
    %5184 = vmatpush1.xpose.msra.mxu0 0.0
    %5185 = vmatprep.subr.mxu0 0.0
    %5186 = vmatpush1.xpose.msra.mxu0 0.0
    %5187 = vmatprep.subr.mxu0 0.0
    %5188 = vmatpush1.xpose.msra.mxu0 0.0
    %5189 = vmatprep.subr.mxu0 0.0
    %5190 = vmatpush1.xpose.msra.mxu0 0.0
    %5191 = vmatprep.subr.mxu0 0.0
    %5192 = vmatpush1.xpose.msra.mxu0 0.0
    %5193 = vmatprep.subr.mxu0 0.0
    %5194 = vmatpush1.xpose.msra.mxu0 0.0
    %5195 = vmatprep.subr.mxu0 0.0
    %5196 = vmatpush1.xpose.msra.mxu0 0.0
    %5197 = vmatprep.subr.mxu0 0.0
    %5198 = vmatpush1.xpose.msra.mxu0 0.0
    %5199 = vmatprep.subr.mxu0 0.0
    %5200 = vmatpush1.xpose.msra.mxu0 0.0
    %5201 = vmatprep.subr.mxu0 0.0
    %5202 = vmatpush1.xpose.msra.mxu0 0.0
    %5203 = vmatprep.subr.mxu0 0.0
    %5204 = vmatpush1.xpose.msra.mxu0 0.0
    %5205 = vmatprep.subr.mxu0 0.0
    %5206 = vmatpush1.xpose.msra.mxu0 %v5173
    %5207 = vmatprep.subr.mxu0 0.0
    %5208 = vmatpush2.xpose.msra.mxu0 0.0
    %5209 = vmatprep.subr.mxu0 0.0
    %5210 = vmatpush2.xpose.msra.mxu0 0.0
    %5211 = vmatprep.subr.mxu0 0.0
    %5212 = vmatpush2.xpose.msra.mxu0 0.0
    %5213 = vmatprep.subr.mxu0 0.0
    %5214 = vmatpush2.xpose.msra.mxu0 0.0
    %5215 = vmatprep.subr.mxu0 0.0
    %5216 = vmatpush2.xpose.msra.mxu0 0.0
    %5217 = vmatprep.subr.mxu0 0.0
    %5218 = vmatpush2.xpose.msra.mxu0 0.0
    %5219 = vmatprep.subr.mxu0 0.0
    %5220 = vmatpush2.xpose.msra.mxu0 0.0
    %5221 = vmatprep.subr.mxu0 0.0
    %5222 = vmatpush2.xpose.msra.mxu0 0.0
    %5223 = vmatprep.subr.mxu0 0.0
    %5224 = vmatpush2.xpose.msra.mxu0 0.0
    %5225 = vmatprep.subr.mxu0 0.0
    %5226 = vmatpush2.xpose.msra.mxu0 0.0
    %5227 = vmatprep.subr.mxu0 0.0
    %5228 = vmatpush2.xpose.msra.mxu0 0.0
    %5229 = vmatprep.subr.mxu0 0.0
    %5230 = vmatpush2.xpose.msra.mxu0 0.0
    %5231 = vmatprep.subr.mxu0 0.0
    %5232 = vmatpush2.xpose.msra.mxu0 0.0
    %5233 = vmatprep.subr.mxu0 0.0
    %5234 = vmatpush2.xpose.msra.mxu0 0.0
    %5235 = vmatprep.subr.mxu0 0.0
    %5236 = vmatpush2.xpose.msra.mxu0 0.0
    %5237 = vmatprep.subr.mxu0 0.0
    %5238 = vmatpush2.xpose.msra.mxu0 0.0
    %5239 = vmatprep.mubr.f32.mxu0 0.0
    %5240 = vmatmul.mubr.f32.gmra.mxu0 %v5173
    %v5241 = vpop.f32.mrf.mxu0
    %v5242 = vadd.f32 0.0, %v5241
    %v5243 = vpop.f32.mrf.mxu0
    %5244 = vdwg.mxu0
    %v5245 = vsel %vm4213, %v5169, -inf
    %5246 = vmax.xlane.f32.xlu0 %v5245
    %v5247 = vpop.xlane.xlu0 %5246
    %v5248 = vsel %vm4213, %v5242, -inf
    %5249 = vmax.xlane.f32.xlu0 %v5248
    %v5250 = vpop.xlane.xlu0 %5249
    %v5251 = vsub.f32 %v5169, %v5247
    %v5252 = vsub.f32 %v5242, %v5250
    %v5253 = vmul.f32 %v5251, 1.442695
    %v5254 = vpow.pop %v5253
    %v5255 = vmul.f32 %v5252, 1.442695
    %v5256 = vpow.pop %v5255
    %v5257 = vsel %vm4213, %v5254, 0.0
    %5258 = vadd.xlane.f32.xlu0 %v5257
    %v5259 = vpop.xlane.xlu0 %5258
    %v5260 = vsel %vm4213, %v5256, 0.0
    %5261 = vadd.xlane.f32.xlu0 %v5260
    %v5262 = vpop.xlane.xlu0 %5261
    %v5263 = vrcp.pop %v5259
    %v5264 = vmul.f32 %v5254, %v5263
    %v5265 = vrcp.pop %v5262
    %v5266 = vmul.f32 %v5256, %v5265
    %v5267 = vld [vmem:[%s67] sm:$0x1]
    %v5268 = vld [vmem:[%s69] sm:$0x1]
    %v5269 = vsel %vm409, %v4753, 0.0
    %5270 = vadd.xlane.f32.xlu0 %v5269
    %v5271 = vpop.xlane.xlu0 %5270
    %v5272 = vsel %vm409, %v4754, 0.0
    %5273 = vadd.xlane.f32.xlu0 %v5272
    %v5274 = vpop.xlane.xlu0 %5273
    %v5275 = vrcp.pop 32.0
    %v5276 = vmul.f32 %v5271, %v5275
    %v5277 = vmul.f32 %v5274, %v5275
    %v5278 = vsub.f32 %v4753, %v5276
    %v5279 = vsub.f32 %v4754, %v5277
    %v5280 = vmul.f32 %v5278, %v5278
    %v5281 = vmul.f32 %v5279, %v5279
    %v5282 = vsel %vm409, %v5280, 0.0
    %5283 = vadd.xlane.f32.xlu0 %v5282
    %v5284 = vpop.xlane.xlu0 %5283
    %v5285 = vsel %vm409, %v5281, 0.0
    %5286 = vadd.xlane.f32.xlu0 %v5285
    %v5287 = vpop.xlane.xlu0 %5286
    %v5288 = vmul.f32 %v5284, %v5275
    %v5289 = vmul.f32 %v5287, %v5275
    %v5290 = vadd.f32 %v5288, 1e-05
    %v5291 = vadd.f32 %v5289, 1e-05
    %v5292 = vrsqrt.pop %v5290
    %v5293 = vmul.f32 %v5290, %v5292
    %vm5294 = vcmp.eq.f32.partialorder %v5290, inf
    %v5295 = vsel %vm5294, %v5290, %v5293
    %vm5296 = vcmp.eq.f32.partialorder %v5290, 0.0
    %v5297 = vand.u32 %v5290, 2147483648
    %v5298 = vsel %vm5296, %v5297, %v5295
    %v5299 = vrsqrt.pop %v5291
    %v5300 = vmul.f32 %v5291, %v5299
    %vm5301 = vcmp.eq.f32.partialorder %v5291, inf
    %v5302 = vsel %vm5301, %v5291, %v5300
    %vm5303 = vcmp.eq.f32.partialorder %v5291, 0.0
    %v5304 = vand.u32 %v5291, 2147483648
    %v5305 = vsel %vm5303, %v5304, %v5302
    %v5306 = vrcp.pop %v5298
    %v5307 = vmul.f32 %v5278, %v5306
    %v5308 = vrcp.pop %v5305
    %v5309 = vmul.f32 %v5279, %v5308
    %v5311 = vlaneseq
    %v5312 = vshrl.u32 %v5311, 7
    %v5313 = vsub.s32 0, %v5312
    %v5314 = vrot.slane %v5267, %v5313
    %v5316 = vmul.f32 %v5307, %v5314
    %v5317 = vmul.f32 %v5309, %v5314
    %v5319 = vlaneseq
    %v5320 = vshrl.u32 %v5319, 7
    %v5321 = vsub.s32 0, %v5320
    %v5322 = vrot.slane %v5268, %v5321
    %v5324 = vadd.f32 %v5316, %v5322
    %v5325 = vadd.f32 %v5317, %v5322
    %v5326 = vadd.f32 %v395, %v5324
    %v5327 = vadd.f32 %v396, %v5325
    %5330 = vrot.lane.b32.xlu0 %v5008, 32
    %v5331 = vpop.permute.xlu0 %5330
    %5332 = vrot.lane.b32.xlu0 %v5010, 32
    %v5333 = vpop.permute.xlu0 %5332
    %5338 = vrot.lane.b32.xlu0 %v5264, 40
    %v5339 = vpop.permute.xlu0 %5338
    %5340 = vrot.lane.b32.xlu0 %v5266, 40
    %v5341 = vpop.permute.xlu0 %5340
    %v5344 = vsel %vm409, %v5326, %v5331
    %v5345 = vsel %vm409, %v5327, %v5333
    %vm5346 = vcmask 326656
    %v5347 = vsel %vm5346, %v5344, %v5339
    %v5348 = vsel %vm5346, %v5345, %v5341
    %vm5349 = vcmask 392192
    %v5350 = vsel %vm5349, %v5347, 0.0
    %v5351 = vsel %vm5349, %v5348, 0.0
    %5352 = vst [vmem:[#allocation28] sm:$0xff] %v5350
    %5353 = vst [vmem:[#allocation28 + $0x8] sm:$0xff] %v5351
    // Predicated region
    $region206: #{tpu_custom_call.1} parent=1 // pred_check
      _
    $region207: #{tpu_custom_call.1} parent=1 // pred_check_branch
      %5355 = sbr.rel (0) target = $region209
    $region208: #{tpu_custom_call.1} parent=1 // pred_region
      %s5357 = ssub.s32 256, 256
      %5358 = vsyncadd [#allocation4], %s5357
      %s5359 = sshll.u32 [#allocation28], 4
      %s5360 = int_to_ptr.vmem [resolvable:$true] %s5359
      %5365 = dma.vmem_to_hbm [thread:$0]  %s5360, 256, %s71, [#allocation4], 128, 128, 8
    $region209: #{tpu_custom_call.1} parent=1 // pred_fallthru
      _
    // Predicated region
    $region210: #{tpu_custom_call.1} parent=1 // pred_check
      _
    $region211: #{tpu_custom_call.1} parent=1 // pred_check_branch
      %5367 = sbr.rel (0) target = $region213
    $region212: #{tpu_custom_call.1} parent=1 // pred_region
      %5368 = dma.done [#allocation4], 256
    $region213: #{tpu_custom_call.1} parent=1 // pred_fallthru
      _
    %5369 = vsyncpa [#allocation3], 1
    %5370 = vsyncpa [#allocation6], 1
    %5371 = vsyncpa [#allocation9], 1
    %5372 = vsyncpa [#allocation12], 1
    %5373 = vsyncpa [#allocation15], 1
    %5374 = vsyncpa [#allocation18], 1
    %5375 = vsyncpa [#allocation21], 1
    %5376 = vsyncpa [#allocation24], 1
    %5377 = vsyncpa [#allocation27], 1
    %5378 = vsyncpa [#allocation4], 1

</llo_original>
